<compile_context>
chip_gen: v6e
topology: v6e:2x2x1
jax: 0.10.0
libtpu: 0.0.40
codegen_flags: <defaults>
</compile_context>

<pallas_src>
import functools
import math

import jax
import jax.numpy as jnp
from jax.experimental import pallas as pl
from jax.experimental.pallas import tpu as pltpu

MASK_BIAS = -1e9            # additive bias for masked key positions
LOGITS_PAD = 128            # classifier padded to a lane-dense 128-column slab
# TODO(synk): tune per generation (<= ~56-60 MiB on v7x, ~100-110 MiB on v5e/v6e).
VMEM_LIMIT_BYTES = 48 * 1024 * 1024


# ------------------------------ in-kernel math ------------------------------

def _layer_norm(x, g, b, eps):
    mean = jnp.mean(x, axis=-1, keepdims=True)
    var = jnp.mean(jnp.square(x - mean), axis=-1, keepdims=True)
    return (x - mean) * jax.lax.rsqrt(var + eps) * g + b


def _gelu_erf(x):  # exact (erf) GELU, matching BERT
    return 0.5 * x * (1.0 + jax.lax.erf(x * (1.0 / math.sqrt(2.0))))


# ----------------- capability probe: single-buffered BlockSpecs -------------

_BUFFERED_OK = None


def _probe_copy_kernel(x_ref, o_ref):
    o_ref[...] = x_ref[...]


def _buffered_single_ok():
    """True iff pl.BlockSpec(pipeline_mode=pl.Buffered(1)) lowers on this install.

    Must be called OUTSIDE jit once (pack_params_for_tpu does this eagerly)."""
    global _BUFFERED_OK
    if _BUFFERED_OK is None:
        _BUFFERED_OK = False
        if hasattr(pl, "Buffered"):
            try:
                fn = pl.pallas_call(
                    _probe_copy_kernel,
                    out_shape=jax.ShapeDtypeStruct((8, 128), jnp.float32),
                    grid=(2,),
                    in_specs=[pl.BlockSpec((8, 128), lambda i: (0, 0),
                                           pipeline_mode=pl.Buffered(1))],
                    out_specs=pl.BlockSpec((8, 128), lambda i: (0, 0)),
                )
                jax.block_until_ready(fn(jnp.zeros((8, 128), jnp.float32)))
                _BUFFERED_OK = True
            except Exception:
                _BUFFERED_OK = False
    return _BUFFERED_OK


def _rep_spec(shape):
    """Grid-invariant (weight) operand: same block for every grid step."""
    nd = len(shape)
    index_map = lambda b, _n=nd: (0,) * _n
    if _buffered_single_ok():
        # Single-buffer: the block never changes, double-buffering is VMEM waste.
        return pl.BlockSpec(shape, index_map, pipeline_mode=pl.Buffered(1))
    return pl.BlockSpec(shape, index_map)


# ---------------------------- fused encoder layer ---------------------------

def _encoder_layer_kernel(*refs, num_heads, scale, eps, with_emb_ln, with_head):
    it = iter(refs)
    x_ref = next(it)                               # [S, H] f32 hidden states
    mask_ref = next(it)                            # [1, S] f32 {0,1} key mask
    if with_emb_ln:
        eg_ref = next(it); eb_ref = next(it)       # [1, H] embedding LayerNorm
    qkv_w_ref = next(it); qkv_b_ref = next(it)     # [H, 3H] bf16 / [1, 3H] f32
    ow_ref = next(it); ob_ref = next(it)           # [nH, dH, H] bf16 / [1, H] f32
    ln1_g_ref = next(it); ln1_b_ref = next(it)     # [1, H] f32
    iw_ref = next(it); ib_ref = next(it)           # [H, I] bf16 / [1, I] f32
    o2w_ref = next(it); o2b_ref = next(it)         # [I, H] bf16 / [1, H] f32
    ln2_g_ref = next(it); ln2_b_ref = next(it)     # [1, H] f32
    if with_head:
        pw_ref = next(it); pb_ref = next(it)       # [H, H] bf16 / [1, H] f32
        cw_ref = next(it); cb_ref = next(it)       # [H, 128] bf16 / [1, 128] f32
    if with_emb_ln:
        emb_out_ref = next(it)                     # [S, H]
    y_ref = next(it)                               # [S, H]
    if with_head:
        pooled_ref = next(it)                      # [1, H]
        logits_ref = next(it)                      # [1, 128]

    def mm(a, w):                                  # bf16 MXU matmul, f32 accumulate
        return jnp.dot(a.astype(jnp.bfloat16), w, preferred_element_type=jnp.float32)

    x = x_ref[...]
    if with_emb_ln:
        # embedding LayerNorm fused into the first layer; dropout = identity.
        x = _layer_norm(x, eg_ref[...], eb_ref[...], eps)
        emb_out_ref[...] = x                       # hidden_states[0]
    S, H = x.shape
    dH = H // num_heads

    # --- fused QKV projection: one MXU matmul, N = 3H (lane-dense slab) ---
    qkv = mm(x, qkv_w_ref[...]) + qkv_b_ref[...]   # [S, 3H] f32
    bias = (1.0 - mask_ref[...]) * MASK_BIAS       # [1, S], broadcast over queries

    # --- per-head attention; output projection accumulated per head (no concat) ---
    attn = jnp.zeros((S, H), jnp.float32)
    for h in range(num_heads):
        q_h = qkv[:, h * dH:(h + 1) * dH].astype(jnp.bfloat16)             # [S, dH]
        k_h = qkv[:, H + h * dH:H + (h + 1) * dH].astype(jnp.bfloat16)
        v_h = qkv[:, 2 * H + h * dH:2 * H + (h + 1) * dH].astype(jnp.bfloat16)
        s = jax.lax.dot_general(q_h, k_h, (((1,), (1,)), ((), ())),
                                preferred_element_type=jnp.float32)         # [S, S]
        s = s * scale + bias
        s_max = jnp.max(s, axis=-1, keepdims=True)
        p = jnp.exp(s - s_max)
        denom = jnp.sum(p, axis=-1, keepdims=True)
        # EUP reciprocal (free slot); swap to an exact divide if bit-parity with
        # the PyTorch reference is required.
        p = (p * pl.reciprocal(denom, approx=True)).astype(jnp.bfloat16)
        ctx_h = jnp.dot(p, v_h, preferred_element_type=jnp.float32)         # [S, dH]
        attn = attn + jnp.dot(ctx_h.astype(jnp.bfloat16), ow_ref[h],
                              preferred_element_type=jnp.float32)           # accumulate o-proj
    attn = attn + ob_ref[...]
    # attention-output dropout: identity (inference)
    x1 = _layer_norm(attn + x, ln1_g_ref[...], ln1_b_ref[...], eps)

    # --- FFN (erf-GELU) + residual + LayerNorm ---
    inter = _gelu_erf(mm(x1, iw_ref[...]) + ib_ref[...])                    # [S, I]
    ffn = mm(inter, o2w_ref[...]) + o2b_ref[...]
    # FFN-output dropout: identity (inference)
    y = _layer_norm(ffn + x1, ln2_g_ref[...], ln2_b_ref[...], eps)
    y_ref[...] = y

    if with_head:
        # pooler (Linear + tanh on [CLS]) + dropout(identity) + classifier
        cls = y[:1, :]                                                      # [1, H]
        pooled = jnp.tanh(mm(cls, pw_ref[...]) + pb_ref[...])
        pooled_ref[...] = pooled
        logits_ref[...] = mm(pooled, cw_ref[...]) + cb_ref[...]             # [1, 128] lane-dense


def pallas_encoder_layer(x, mask, lp, cfg, *, emb_ln=None, head=None):
    """One fused BERT encoder layer; optionally fuses the embedding LayerNorm
    (first layer) and the pooler + classifier head (last layer)."""
    B, S, H = x.shape
    I = cfg.intermediate_size
    nH = cfg.num_attention_heads
    dH = H // nH
    with_emb_ln = emb_ln is not None
    with_head = head is not None

    in_specs = [
        pl.BlockSpec((None, S, H), lambda b: (b, 0, 0)),   # hidden states (per batch row)
        pl.BlockSpec((None, 1, S), lambda b: (b, 0, 0)),   # attention-mask row
    ]
    operands = [x, mask]
    if with_emb_ln:
        in_specs += [_rep_spec((1, H)), _rep_spec((1, H))]
        operands += list(emb_ln)
    in_specs += [
        _rep_spec((H, 3 * H)), _rep_spec((1, 3 * H)),      # fused QKV
        _rep_spec((nH, dH, H)), _rep_spec((1, H)),         # attn output proj (per-head rows)
        _rep_spec((1, H)), _rep_spec((1, H)),              # LN1
        _rep_spec((H, I)), _rep_spec((1, I)),              # FFN in
        _rep_spec((I, H)), _rep_spec((1, H)),              # FFN out
        _rep_spec((1, H)), _rep_spec((1, H)),              # LN2
    ]
    operands += [lp["qkv_w"], lp["qkv_b"], lp["o_w"], lp["o_b"],
                 lp["ln1_g"], lp["ln1_b"], lp["i_w"], lp["i_b"],
                 lp["o2_w"], lp["o2_b"], lp["ln2_g"], lp["ln2_b"]]
    if with_head:
        in_specs += [_rep_spec((H, H)), _rep_spec((1, H)),
                     _rep_spec((H, LOGITS_PAD)), _rep_spec((1, LOGITS_PAD))]
        operands += list(head)

    out_shape, out_specs = [], []
    if with_emb_ln:
        out_shape.append(jax.ShapeDtypeStruct((B, S, H), jnp.float32))
        out_specs.append(pl.BlockSpec((None, S, H), lambda b: (b, 0, 0)))
    out_shape.append(jax.ShapeDtypeStruct((B, S, H), jnp.float32))
    out_specs.append(pl.BlockSpec((None, S, H), lambda b: (b, 0, 0)))
    if with_head:
        out_shape.append(jax.ShapeDtypeStruct((B, 1, H), jnp.float32))
        out_specs.append(pl.BlockSpec((None, 1, H), lambda b: (b, 0, 0)))
        out_shape.append(jax.ShapeDtypeStruct((B, 1, LOGITS_PAD), jnp.float32))
        out_specs.append(pl.BlockSpec((None, 1, LOGITS_PAD), lambda b: (b, 0, 0)))

    kernel = functools.partial(
        _encoder_layer_kernel,
        num_heads=nH, scale=1.0 / math.sqrt(dH), eps=cfg.layer_norm_eps,
        with_emb_ln=with_emb_ln, with_head=with_head)

    outs = pl.pallas_call(
        kernel,
        out_shape=tuple(out_shape),
        grid=(B,),
        in_specs=in_specs,
        out_specs=tuple(out_specs),
        compiler_params=pltpu.CompilerParams(
            dimension_semantics=("parallel",),
            vmem_limit_bytes=VMEM_LIMIT_BYTES),
    )(*operands)
    return outs if isinstance(outs, (tuple, list)) else (outs,)


# ---------------------------- config & parameters ---------------------------

class Config:
    vocab_size = 100
    hidden_size = 32
    num_hidden_layers = 2
    num_attention_heads = 4
    intermediate_size = 64
    max_position_embeddings = 64
    type_vocab_size = 2
    layer_norm_eps = 1e-12
    hidden_dropout_prob = 0.1  # identity at inference


def _normal(key, shape, std=0.02):
    return (std * jax.random.normal(key, shape)).astype(jnp.float32)


def init_params(key, cfg):
    H, I = cfg.hidden_size, cfg.intermediate_size
    keys = iter(jax.random.split(key, 64))
    p = {
        "word_emb": _normal(next(keys), (cfg.vocab_size, H)),
        "pos_emb": _normal(next(keys), (cfg.max_position_embeddings, H)),
        "type_emb": _normal(next(keys), (cfg.type_vocab_size, H)),
        "emb_ln_g": jnp.ones((H,), jnp.float32),
        "emb_ln_b": jnp.zeros((H,), jnp.float32),
        "pool_w": _normal(next(keys), (H, H)),
        "pool_b": jnp.zeros((H,), jnp.float32),
        "cls_w": _normal(next(keys), (H, 2)),
        "cls_b": jnp.zeros((2,), jnp.float32),
        "layers": [],
    }
    for _ in range(cfg.num_hidden_layers):
        p["layers"].append({
            # fused QKV weight/bias: [Wq | Wk | Wv] column-concat, (in, out) layout
            "qkv_w": _normal(next(keys), (H, 3 * H)),
            "qkv_b": jnp.zeros((3 * H,), jnp.float32),
            "o_w": _normal(next(keys), (H, H)), "o_b": jnp.zeros((H,), jnp.float32),
            "ln1_g": jnp.ones((H,), jnp.float32), "ln1_b": jnp.zeros((H,), jnp.float32),
            "i_w": _normal(next(keys), (H, I)), "i_b": jnp.zeros((I,), jnp.float32),
            "o2_w": _normal(next(keys), (I, H)), "o2_b": jnp.zeros((H,), jnp.float32),
            "ln2_g": jnp.ones((H,), jnp.float32), "ln2_b": jnp.zeros((H,), jnp.float32),
        })
    return p


def pack_params_for_tpu(params, cfg):
    """Re-layout reference f32 parameters for the fused kernels (call OUTSIDE jit):
       * matmul weights cast to bf16 (half DMA/VMEM, native-bf16 MXU),
       * biases / LN params stay f32, reshaped to [1, N] rows,
       * attn output projection reshaped to [nH, dH, H] (per-head leading dim),
       * 2-way classifier padded to 128 output lanes (lane-dense store).
    NOTE: qkv_w must be [Wq | Wk | Wv] column-concatenated in (in, out) layout;
    when importing a HuggingFace checkpoint (Linear stores [out, in]) transpose
    each projection before concatenating or attention is silently wrong."""
    H, I = cfg.hidden_size, cfg.intermediate_size
    nH = cfg.num_attention_heads
    dH = H // nH
    _buffered_single_ok()   # run the pipeline_mode capability probe eagerly (outside jit)
    bf16 = lambda w: w.astype(jnp.bfloat16)

    cls_w = jnp.zeros((H, LOGITS_PAD), jnp.float32).at[:, :2].set(params["cls_w"])
    cls_b = jnp.zeros((1, LOGITS_PAD), jnp.float32).at[0, :2].set(params["cls_b"])
    packed = {
        "word_emb": params["word_emb"],
        "pos_emb": params["pos_emb"],
        "type_emb": params["type_emb"],
        "emb_ln_g": params["emb_ln_g"].reshape(1, H),
        "emb_ln_b": params["emb_ln_b"].reshape(1, H),
        "pool_w": bf16(params["pool_w"]),
        "pool_b": params["pool_b"].reshape(1, H),
        "cls_w": bf16(cls_w),
        "cls_b": cls_b,
        "layers": [],
    }
    for lp in params["layers"]:
        assert lp["qkv_w"].shape == (H, 3 * H)
        packed["layers"].append({
            "qkv_w": bf16(lp["qkv_w"]),
            "qkv_b": lp["qkv_b"].reshape(1, 3 * H),
            "o_w": bf16(lp["o_w"].reshape(nH, dH, H)),
            "o_b": lp["o_b"].reshape(1, H),
            "ln1_g": lp["ln1_g"].reshape(1, H), "ln1_b": lp["ln1_b"].reshape(1, H),
            "i_w": bf16(lp["i_w"]), "i_b": lp["i_b"].reshape(1, I),
            "o2_w": bf16(lp["o2_w"]), "o2_b": lp["o2_b"].reshape(1, H),
            "ln2_g": lp["ln2_g"].reshape(1, H), "ln2_b": lp["ln2_b"].reshape(1, H),
        })
    return packed


# ------------------------------ model forward -------------------------------

def nsmc_forward(packed, cfg, input_ids, token_type_ids, attention_mask,
                 output_hidden_states=True):
    B, S = input_ids.shape
    H = cfg.hidden_size

    # embedding-table gathers are XLA glue (no clean Pallas equivalent);
    # the embedding LayerNorm (+ identity dropout) is fused into layer 0.
    word = packed["word_emb"][input_ids]
    pos = packed["pos_emb"][:S][None, :, :]
    typ = packed["type_emb"][token_type_ids]
    x = (word + pos + typ).astype(jnp.float32)                 # pre-LN embeddings [B, S, H]
    mask = attention_mask.astype(jnp.float32).reshape(B, 1, S)

    n_layers = len(packed["layers"])
    hidden_states = []
    pooled = logits = None
    for li, lp in enumerate(packed["layers"]):
        emb_ln = (packed["emb_ln_g"], packed["emb_ln_b"]) if li == 0 else None
        head = ((packed["pool_w"], packed["pool_b"], packed["cls_w"], packed["cls_b"])
                if li == n_layers - 1 else None)
        outs = pallas_encoder_layer(x, mask, lp, cfg, emb_ln=emb_ln, head=head)
        idx = 0
        if emb_ln is not None:
            if output_hidden_states:
                hidden_states.append(outs[idx])                 # embedding output (post-LN)
            idx += 1
        x = outs[idx]; idx += 1
        if output_hidden_states:
            hidden_states.append(x)
        if head is not None:
            pooled = outs[idx].reshape(B, H); idx += 1
            logits = outs[idx][:, 0, :2]                        # drop 128-lane padding

    outputs = {"last_hidden_state": x, "pooler_output": pooled}
    if output_hidden_states:
        outputs["hidden_states"] = tuple(hidden_states)
    return outputs, logits


# ---------------------------------- main ------------------------------------

if __name__ == "__main__":
    cfg = Config()
    key = jax.random.PRNGKey(0)
    k_params, k_ids, k_type = jax.random.split(key, 3)

    params = init_params(k_params, cfg)
    packed = pack_params_for_tpu(params, cfg)   # bf16 weights; runs the Buffered(1) probe eagerly

    B, S = 2, 8
    input_ids = jax.random.randint(k_ids, (B, S), 0, cfg.vocab_size, dtype=jnp.int32)
    token_type_ids = jax.random.randint(k_type, (B, S), 0, cfg.type_vocab_size,
                                        dtype=jnp.int32)
    attention_mask = jnp.ones((B, S), jnp.int32).at[1, S - 2:].set(0)

    fwd = jax.jit(lambda p, ids, tt, am: nsmc_forward(p, cfg, ids, tt, am))
    outputs, logits = fwd(packed, input_ids, token_type_ids, attention_mask)
    jax.block_until_ready(logits)
    jax.block_until_ready(outputs["pooler_output"])

    assert logits.shape == (B, 2)
    assert outputs["last_hidden_state"].shape == (B, S, cfg.hidden_size)
    assert outputs["pooler_output"].shape == (B, cfg.hidden_size)
    assert len(outputs["hidden_states"]) == cfg.num_hidden_layers + 1
    assert bool(jnp.all(jnp.isfinite(logits)))
    print("KERNEL_OK")
</pallas_src>

<mosaic_0001>
module attributes {stable_mosaic.version = 11 : i64} {
  func.func @_probe_copy_kernel(%arg0: i32, %arg1: memref<8x128xf32, #tpu.memory_space<vmem>>, %arg2: memref<8x128xf32, #tpu.memory_space<vmem>>) attributes {dimension_semantics = [#tpu.dimension_semantics<arbitrary>], iteration_bounds = array<i64: 2>, scalar_prefetch = 0 : i64, scratch_operands = 0 : i64, tpu.core_type = #tpu.core_type<tc>, window_params = [{pipeline_mode = #tpu.pipeline_mode<synchronous>, transform_indices = @transform_0, window_bounds = array<i64: 8, 128>}, {pipeline_mode = #tpu.pipeline_mode<synchronous>, transform_indices = @transform_1, window_bounds = array<i64: 8, 128>}]} {
    %c0 = arith.constant 0 : index
    %c0_0 = arith.constant 0 : index
    %0 = vector.load %arg1[%c0, %c0_0] : memref<8x128xf32, #tpu.memory_space<vmem>>, vector<8x128xf32>
    %c0_1 = arith.constant 0 : index
    %c0_2 = arith.constant 0 : index
    %1 = vector.load %arg2[%c0_1, %c0_2] : memref<8x128xf32, #tpu.memory_space<vmem>>, vector<8x128xf32>
    tpu.vector_store %arg2[%c0_1, %c0_2], %0 {strides = array<i32>} : memref<8x128xf32, #tpu.memory_space<vmem>>, vector<8x128xf32>,
    return
  }
  func.func @transform_0(%arg0: i32) -> (i32, i32) {
    %c0_i32 = arith.constant 0 : i32
    %c0_i32_0 = arith.constant 0 : i32
    %c0_i32_1 = arith.constant 0 : i32
    return %c0_i32, %c0_i32_0 : i32, i32
  }
  func.func @transform_1(%arg0: i32) -> (i32, i32) {
    %c0_i32 = arith.constant 0 : i32
    %c0_i32_0 = arith.constant 0 : i32
    %c0_i32_1 = arith.constant 0 : i32
    return %c0_i32, %c0_i32_0 : i32, i32
  }
}

module attributes {stable_mosaic.version = 11 : i64} {
  func.func @_encoder_layer_kernel(%arg0: i32, %arg1: memref<1x8x32xf32, #tpu.memory_space<vmem>>, %arg2: memref<1x1x8xf32, #tpu.memory_space<vmem>>, %arg3: memref<1x32xf32, #tpu.memory_space<vmem>>, %arg4: memref<1x32xf32, #tpu.memory_space<vmem>>, %arg5: memref<32x96xbf16, #tpu.memory_space<vmem>>, %arg6: memref<1x96xf32, #tpu.memory_space<vmem>>, %arg7: memref<4x8x32xbf16, #tpu.memory_space<vmem>>, %arg8: memref<1x32xf32, #tpu.memory_space<vmem>>, %arg9: memref<1x32xf32, #tpu.memory_space<vmem>>, %arg10: memref<1x32xf32, #tpu.memory_space<vmem>>, %arg11: memref<32x64xbf16, #tpu.memory_space<vmem>>, %arg12: memref<1x64xf32, #tpu.memory_space<vmem>>, %arg13: memref<64x32xbf16, #tpu.memory_space<vmem>>, %arg14: memref<1x32xf32, #tpu.memory_space<vmem>>, %arg15: memref<1x32xf32, #tpu.memory_space<vmem>>, %arg16: memref<1x32xf32, #tpu.memory_space<vmem>>, %arg17: memref<1x8x32xf32, #tpu.memory_space<vmem>>, %arg18: memref<1x8x32xf32, #tpu.memory_space<vmem>>) attributes {dimension_semantics = [#tpu.dimension_semantics<parallel>], iteration_bounds = array<i64: 2>, scalar_prefetch = 0 : i64, scratch_operands = 0 : i64, tpu.core_type = #tpu.core_type<tc>, window_params = [{transform_indices = @transform_0, window_bounds = array<i64: 1, 8, 32>}, {transform_indices = @transform_1, window_bounds = array<i64: 1, 1, 8>}, {pipeline_mode = #tpu.pipeline_mode<synchronous>, transform_indices = @transform_2, window_bounds = array<i64: 1, 32>}, {pipeline_mode = #tpu.pipeline_mode<synchronous>, transform_indices = @transform_3, window_bounds = array<i64: 1, 32>}, {pipeline_mode = #tpu.pipeline_mode<synchronous>, transform_indices = @transform_4, window_bounds = array<i64: 32, 96>}, {pipeline_mode = #tpu.pipeline_mode<synchronous>, transform_indices = @transform_5, window_bounds = array<i64: 1, 96>}, {pipeline_mode = #tpu.pipeline_mode<synchronous>, transform_indices = @transform_6, window_bounds = array<i64: 4, 8, 32>}, {pipeline_mode = #tpu.pipeline_mode<synchronous>, transform_indices = @transform_7, window_bounds = array<i64: 1, 32>}, {pipeline_mode = #tpu.pipeline_mode<synchronous>, transform_indices = @transform_8, window_bounds = array<i64: 1, 32>}, {pipeline_mode = #tpu.pipeline_mode<synchronous>, transform_indices = @transform_9, window_bounds = array<i64: 1, 32>}, {pipeline_mode = #tpu.pipeline_mode<synchronous>, transform_indices = @transform_10, window_bounds = array<i64: 32, 64>}, {pipeline_mode = #tpu.pipeline_mode<synchronous>, transform_indices = @transform_11, window_bounds = array<i64: 1, 64>}, {pipeline_mode = #tpu.pipeline_mode<synchronous>, transform_indices = @transform_12, window_bounds = array<i64: 64, 32>}, {pipeline_mode = #tpu.pipeline_mode<synchronous>, transform_indices = @transform_13, window_bounds = array<i64: 1, 32>}, {pipeline_mode = #tpu.pipeline_mode<synchronous>, transform_indices = @transform_14, window_bounds = array<i64: 1, 32>}, {pipeline_mode = #tpu.pipeline_mode<synchronous>, transform_indices = @transform_15, window_bounds = array<i64: 1, 32>}, {transform_indices = @transform_16, window_bounds = array<i64: 1, 8, 32>}, {transform_indices = @transform_17, window_bounds = array<i64: 1, 8, 32>}]} {
    %c0 = arith.constant 0 : index
    %c0_0 = arith.constant 0 : index
    %c0_1 = arith.constant 0 : index
    %0 = vector.load %arg1[%c0, %c0_0, %c0_1] : memref<1x8x32xf32, #tpu.memory_space<vmem>>, vector<1x8x32xf32>
    %1 = vector.shape_cast %0 : vector<1x8x32xf32> to vector<8x32xf32>
    %c0_2 = arith.constant 0 : index
    %c0_3 = arith.constant 0 : index
    %2 = vector.load %arg3[%c0_2, %c0_3] : memref<1x32xf32, #tpu.memory_space<vmem>>, vector<1x32xf32>
    %c0_4 = arith.constant 0 : index
    %c0_5 = arith.constant 0 : index
    %3 = vector.load %arg4[%c0_4, %c0_5] : memref<1x32xf32, #tpu.memory_space<vmem>>, vector<1x32xf32>
    %cst = arith.constant dense<0.000000e+00> : vector<8xf32>
    %4 = vector.multi_reduction <add>, %1, %cst [1] : vector<8x32xf32> to vector<8xf32>
    %5 = vector.shape_cast %4 : vector<8xf32> to vector<8x1xf32>
    %cst_6 = arith.constant 3.200000e+01 : f32
    %6 = vector.broadcast %cst_6 : f32 to vector<8x1xf32>
    %7 = arith.divf %5, %6 : vector<8x1xf32>
    %8 = vector.broadcast %7 : vector<8x1xf32> to vector<8x32xf32>
    %9 = arith.subf %1, %8 : vector<8x32xf32>
    %10 = arith.mulf %9, %9 : vector<8x32xf32>
    %cst_7 = arith.constant dense<0.000000e+00> : vector<8xf32>
    %11 = vector.multi_reduction <add>, %10, %cst_7 [1] : vector<8x32xf32> to vector<8xf32>
    %12 = vector.shape_cast %11 : vector<8xf32> to vector<8x1xf32>
    %cst_8 = arith.constant 3.200000e+01 : f32
    %13 = vector.broadcast %cst_8 : f32 to vector<8x1xf32>
    %14 = arith.divf %12, %13 : vector<8x1xf32>
    %15 = vector.broadcast %7 : vector<8x1xf32> to vector<8x32xf32>
    %16 = arith.subf %1, %15 : vector<8x32xf32>
    %cst_9 = arith.constant 9.99999996E-13 : f32
    %17 = vector.broadcast %cst_9 : f32 to vector<8x1xf32>
    %18 = arith.addf %14, %17 : vector<8x1xf32>
    %19 = math.rsqrt %18 : vector<8x1xf32>
    %20 = vector.broadcast %19 : vector<8x1xf32> to vector<8x32xf32>
    %21 = arith.mulf %16, %20 : vector<8x32xf32>
    %22 = vector.broadcast %2 : vector<1x32xf32> to vector<8x32xf32>
    %23 = arith.mulf %21, %22 : vector<8x32xf32>
    %24 = vector.broadcast %3 : vector<1x32xf32> to vector<8x32xf32>
    %25 = arith.addf %23, %24 : vector<8x32xf32>
    %c0_10 = arith.constant 0 : index
    %c0_11 = arith.constant 0 : index
    %c0_12 = arith.constant 0 : index
    %26 = vector.load %arg17[%c0_10, %c0_11, %c0_12] : memref<1x8x32xf32, #tpu.memory_space<vmem>>, vector<1x8x32xf32>
    %27 = vector.shape_cast %26 : vector<1x8x32xf32> to vector<8x32xf32>
    %28 = vector.shape_cast %25 : vector<8x32xf32> to vector<1x8x32xf32>
    tpu.vector_store %arg17[%c0_10, %c0_11, %c0_12], %28 {strides = array<i32>} : memref<1x8x32xf32, #tpu.memory_space<vmem>>, vector<1x8x32xf32>,
    %c0_13 = arith.constant 0 : index
    %c0_14 = arith.constant 0 : index
    %29 = vector.load %arg5[%c0_13, %c0_14] : memref<32x96xbf16, #tpu.memory_space<vmem>>, vector<32x96xbf16>
    %30 = arith.truncf %25 : vector<8x32xf32> to vector<8x32xbf16>
    %cst_15 = arith.constant dense<0.000000e+00> : vector<8x96xf32>
    %31 = tpu.matmul %30, %29, %cst_15 {dimension_numbers = #tpu.dot_dimension_numbers<[1], [0], [0], [1], [0, 0, 1, 1], [], []>} : vector<8x32xbf16>, vector<32x96xbf16>, vector<8x96xf32> -> vector<8x96xf32>
    %c0_16 = arith.constant 0 : index
    %c0_17 = arith.constant 0 : index
    %32 = vector.load %arg6[%c0_16, %c0_17] : memref<1x96xf32, #tpu.memory_space<vmem>>, vector<1x96xf32>
    %33 = vector.broadcast %32 : vector<1x96xf32> to vector<8x96xf32>
    %34 = arith.addf %31, %33 : vector<8x96xf32>
    %c0_18 = arith.constant 0 : index
    %c0_19 = arith.constant 0 : index
    %c0_20 = arith.constant 0 : index
    %35 = vector.load %arg2[%c0_18, %c0_19, %c0_20] : memref<1x1x8xf32, #tpu.memory_space<vmem>>, vector<1x1x8xf32>
    %36 = vector.shape_cast %35 : vector<1x1x8xf32> to vector<1x8xf32>
    %cst_21 = arith.constant 1.000000e+00 : f32
    %37 = vector.broadcast %cst_21 : f32 to vector<1x8xf32>
    %38 = arith.subf %37, %36 : vector<1x8xf32>
    %cst_22 = arith.constant -1.000000e+09 : f32
    %39 = vector.broadcast %cst_22 : f32 to vector<1x8xf32>
    %40 = arith.mulf %38, %39 : vector<1x8xf32>
    %cst_23 = arith.constant 0.000000e+00 : f32
    %41 = vector.broadcast %cst_23 : f32 to vector<8x32xf32>
    %42 = vector.extract_strided_slice %34 {offsets = [0, 0], sizes = [8, 8], strides = [1, 1]} : vector<8x96xf32> to vector<8x8xf32>
    %43 = arith.truncf %42 : vector<8x8xf32> to vector<8x8xbf16>
    %44 = vector.extract_strided_slice %34 {offsets = [0, 32], sizes = [8, 8], strides = [1, 1]} : vector<8x96xf32> to vector<8x8xf32>
    %45 = arith.truncf %44 : vector<8x8xf32> to vector<8x8xbf16>
    %46 = vector.extract_strided_slice %34 {offsets = [0, 64], sizes = [8, 8], strides = [1, 1]} : vector<8x96xf32> to vector<8x8xf32>
    %47 = arith.truncf %46 : vector<8x8xf32> to vector<8x8xbf16>
    %cst_24 = arith.constant dense<0.000000e+00> : vector<8x8xf32>
    %48 = tpu.matmul %43, %45, %cst_24 {dimension_numbers = #tpu.dot_dimension_numbers<[1], [1], [0], [0], [0, 0, 1, 0], [], []>} : vector<8x8xbf16>, vector<8x8xbf16>, vector<8x8xf32> -> vector<8x8xf32>
    %cst_25 = arith.constant 0.353553385 : f32
    %49 = vector.broadcast %cst_25 : f32 to vector<8x8xf32>
    %50 = arith.mulf %48, %49 : vector<8x8xf32>
    %51 = vector.broadcast %40 : vector<1x8xf32> to vector<8x8xf32>
    %52 = arith.addf %50, %51 : vector<8x8xf32>
    %cst_26 = arith.constant dense<0xFF800000> : vector<8xf32>
    %53 = vector.multi_reduction <maximumf>, %52, %cst_26 [1] : vector<8x8xf32> to vector<8xf32>
    %54 = vector.shape_cast %53 : vector<8xf32> to vector<8x1xf32>
    %55 = vector.broadcast %54 : vector<8x1xf32> to vector<8x8xf32>
    %56 = arith.subf %52, %55 : vector<8x8xf32>
    %57 = math.exp %56 : vector<8x8xf32>
    %cst_27 = arith.constant dense<0.000000e+00> : vector<8xf32>
    %58 = vector.multi_reduction <add>, %57, %cst_27 [1] : vector<8x8xf32> to vector<8xf32>
    %59 = vector.shape_cast %58 : vector<8xf32> to vector<8x1xf32>
    %60 = tpu.reciprocal %59 {approx = true} : vector<8x1xf32> -> vector<8x1xf32>
    %61 = vector.broadcast %60 : vector<8x1xf32> to vector<8x8xf32>
    %62 = arith.mulf %57, %61 : vector<8x8xf32>
    %63 = arith.truncf %62 : vector<8x8xf32> to vector<8x8xbf16>
    %cst_28 = arith.constant dense<0.000000e+00> : vector<8x8xf32>
    %64 = tpu.matmul %63, %47, %cst_28 {dimension_numbers = #tpu.dot_dimension_numbers<[1], [0], [0], [1], [0, 0, 1, 1], [], []>} : vector<8x8xbf16>, vector<8x8xbf16>, vector<8x8xf32> -> vector<8x8xf32>
    %65 = arith.truncf %64 : vector<8x8xf32> to vector<8x8xbf16>
    %c0_29 = arith.constant 0 : index
    %c0_30 = arith.constant 0 : index
    %c0_31 = arith.constant 0 : index
    %66 = vector.load %arg7[%c0_29, %c0_30, %c0_31] : memref<4x8x32xbf16, #tpu.memory_space<vmem>>, vector<1x8x32xbf16>
    %67 = vector.shape_cast %66 : vector<1x8x32xbf16> to vector<8x32xbf16>
    %cst_32 = arith.constant dense<0.000000e+00> : vector<8x32xf32>
    %68 = tpu.matmul %65, %67, %cst_32 {dimension_numbers = #tpu.dot_dimension_numbers<[1], [0], [0], [1], [0, 0, 1, 1], [], []>} : vector<8x8xbf16>, vector<8x32xbf16>, vector<8x32xf32> -> vector<8x32xf32>
    %69 = arith.addf %41, %68 : vector<8x32xf32>
    %70 = vector.extract_strided_slice %34 {offsets = [0, 8], sizes = [8, 8], strides = [1, 1]} : vector<8x96xf32> to vector<8x8xf32>
    %71 = arith.truncf %70 : vector<8x8xf32> to vector<8x8xbf16>
    %72 = vector.extract_strided_slice %34 {offsets = [0, 40], sizes = [8, 8], strides = [1, 1]} : vector<8x96xf32> to vector<8x8xf32>
    %73 = arith.truncf %72 : vector<8x8xf32> to vector<8x8xbf16>
    %74 = vector.extract_strided_slice %34 {offsets = [0, 72], sizes = [8, 8], strides = [1, 1]} : vector<8x96xf32> to vector<8x8xf32>
    %75 = arith.truncf %74 : vector<8x8xf32> to vector<8x8xbf16>
    %cst_33 = arith.constant dense<0.000000e+00> : vector<8x8xf32>
    %76 = tpu.matmul %71, %73, %cst_33 {dimension_numbers = #tpu.dot_dimension_numbers<[1], [1], [0], [0], [0, 0, 1, 0], [], []>} : vector<8x8xbf16>, vector<8x8xbf16>, vector<8x8xf32> -> vector<8x8xf32>
    %cst_34 = arith.constant 0.353553385 : f32
    %77 = vector.broadcast %cst_34 : f32 to vector<8x8xf32>
    %78 = arith.mulf %76, %77 : vector<8x8xf32>
    %79 = vector.broadcast %40 : vector<1x8xf32> to vector<8x8xf32>
    %80 = arith.addf %78, %79 : vector<8x8xf32>
    %cst_35 = arith.constant dense<0xFF800000> : vector<8xf32>
    %81 = vector.multi_reduction <maximumf>, %80, %cst_35 [1] : vector<8x8xf32> to vector<8xf32>
    %82 = vector.shape_cast %81 : vector<8xf32> to vector<8x1xf32>
    %83 = vector.broadcast %82 : vector<8x1xf32> to vector<8x8xf32>
    %84 = arith.subf %80, %83 : vector<8x8xf32>
    %85 = math.exp %84 : vector<8x8xf32>
    %cst_36 = arith.constant dense<0.000000e+00> : vector<8xf32>
    %86 = vector.multi_reduction <add>, %85, %cst_36 [1] : vector<8x8xf32> to vector<8xf32>
    %87 = vector.shape_cast %86 : vector<8xf32> to vector<8x1xf32>
    %88 = tpu.reciprocal %87 {approx = true} : vector<8x1xf32> -> vector<8x1xf32>
    %89 = vector.broadcast %88 : vector<8x1xf32> to vector<8x8xf32>
    %90 = arith.mulf %85, %89 : vector<8x8xf32>
    %91 = arith.truncf %90 : vector<8x8xf32> to vector<8x8xbf16>
    %cst_37 = arith.constant dense<0.000000e+00> : vector<8x8xf32>
    %92 = tpu.matmul %91, %75, %cst_37 {dimension_numbers = #tpu.dot_dimension_numbers<[1], [0], [0], [1], [0, 0, 1, 1], [], []>} : vector<8x8xbf16>, vector<8x8xbf16>, vector<8x8xf32> -> vector<8x8xf32>
    %93 = arith.truncf %92 : vector<8x8xf32> to vector<8x8xbf16>
    %c1 = arith.constant 1 : index
    %c0_38 = arith.constant 0 : index
    %c0_39 = arith.constant 0 : index
    %94 = vector.load %arg7[%c1, %c0_38, %c0_39] : memref<4x8x32xbf16, #tpu.memory_space<vmem>>, vector<1x8x32xbf16>
    %95 = vector.shape_cast %94 : vector<1x8x32xbf16> to vector<8x32xbf16>
    %cst_40 = arith.constant dense<0.000000e+00> : vector<8x32xf32>
    %96 = tpu.matmul %93, %95, %cst_40 {dimension_numbers = #tpu.dot_dimension_numbers<[1], [0], [0], [1], [0, 0, 1, 1], [], []>} : vector<8x8xbf16>, vector<8x32xbf16>, vector<8x32xf32> -> vector<8x32xf32>
    %97 = arith.addf %69, %96 : vector<8x32xf32>
    %98 = vector.extract_strided_slice %34 {offsets = [0, 16], sizes = [8, 8], strides = [1, 1]} : vector<8x96xf32> to vector<8x8xf32>
    %99 = arith.truncf %98 : vector<8x8xf32> to vector<8x8xbf16>
    %100 = vector.extract_strided_slice %34 {offsets = [0, 48], sizes = [8, 8], strides = [1, 1]} : vector<8x96xf32> to vector<8x8xf32>
    %101 = arith.truncf %100 : vector<8x8xf32> to vector<8x8xbf16>
    %102 = vector.extract_strided_slice %34 {offsets = [0, 80], sizes = [8, 8], strides = [1, 1]} : vector<8x96xf32> to vector<8x8xf32>
    %103 = arith.truncf %102 : vector<8x8xf32> to vector<8x8xbf16>
    %cst_41 = arith.constant dense<0.000000e+00> : vector<8x8xf32>
    %104 = tpu.matmul %99, %101, %cst_41 {dimension_numbers = #tpu.dot_dimension_numbers<[1], [1], [0], [0], [0, 0, 1, 0], [], []>} : vector<8x8xbf16>, vector<8x8xbf16>, vector<8x8xf32> -> vector<8x8xf32>
    %cst_42 = arith.constant 0.353553385 : f32
    %105 = vector.broadcast %cst_42 : f32 to vector<8x8xf32>
    %106 = arith.mulf %104, %105 : vector<8x8xf32>
    %107 = vector.broadcast %40 : vector<1x8xf32> to vector<8x8xf32>
    %108 = arith.addf %106, %107 : vector<8x8xf32>
    %cst_43 = arith.constant dense<0xFF800000> : vector<8xf32>
    %109 = vector.multi_reduction <maximumf>, %108, %cst_43 [1] : vector<8x8xf32> to vector<8xf32>
    %110 = vector.shape_cast %109 : vector<8xf32> to vector<8x1xf32>
    %111 = vector.broadcast %110 : vector<8x1xf32> to vector<8x8xf32>
    %112 = arith.subf %108, %111 : vector<8x8xf32>
    %113 = math.exp %112 : vector<8x8xf32>
    %cst_44 = arith.constant dense<0.000000e+00> : vector<8xf32>
    %114 = vector.multi_reduction <add>, %113, %cst_44 [1] : vector<8x8xf32> to vector<8xf32>
    %115 = vector.shape_cast %114 : vector<8xf32> to vector<8x1xf32>
    %116 = tpu.reciprocal %115 {approx = true} : vector<8x1xf32> -> vector<8x1xf32>
    %117 = vector.broadcast %116 : vector<8x1xf32> to vector<8x8xf32>
    %118 = arith.mulf %113, %117 : vector<8x8xf32>
    %119 = arith.truncf %118 : vector<8x8xf32> to vector<8x8xbf16>
    %cst_45 = arith.constant dense<0.000000e+00> : vector<8x8xf32>
    %120 = tpu.matmul %119, %103, %cst_45 {dimension_numbers = #tpu.dot_dimension_numbers<[1], [0], [0], [1], [0, 0, 1, 1], [], []>} : vector<8x8xbf16>, vector<8x8xbf16>, vector<8x8xf32> -> vector<8x8xf32>
    %121 = arith.truncf %120 : vector<8x8xf32> to vector<8x8xbf16>
    %c2 = arith.constant 2 : index
    %c0_46 = arith.constant 0 : index
    %c0_47 = arith.constant 0 : index
    %122 = vector.load %arg7[%c2, %c0_46, %c0_47] : memref<4x8x32xbf16, #tpu.memory_space<vmem>>, vector<1x8x32xbf16>
    %123 = vector.shape_cast %122 : vector<1x8x32xbf16> to vector<8x32xbf16>
    %cst_48 = arith.constant dense<0.000000e+00> : vector<8x32xf32>
    %124 = tpu.matmul %121, %123, %cst_48 {dimension_numbers = #tpu.dot_dimension_numbers<[1], [0], [0], [1], [0, 0, 1, 1], [], []>} : vector<8x8xbf16>, vector<8x32xbf16>, vector<8x32xf32> -> vector<8x32xf32>
    %125 = arith.addf %97, %124 : vector<8x32xf32>
    %126 = vector.extract_strided_slice %34 {offsets = [0, 24], sizes = [8, 8], strides = [1, 1]} : vector<8x96xf32> to vector<8x8xf32>
    %127 = arith.truncf %126 : vector<8x8xf32> to vector<8x8xbf16>
    %128 = vector.extract_strided_slice %34 {offsets = [0, 56], sizes = [8, 8], strides = [1, 1]} : vector<8x96xf32> to vector<8x8xf32>
    %129 = arith.truncf %128 : vector<8x8xf32> to vector<8x8xbf16>
    %130 = vector.extract_strided_slice %34 {offsets = [0, 88], sizes = [8, 8], strides = [1, 1]} : vector<8x96xf32> to vector<8x8xf32>
    %131 = arith.truncf %130 : vector<8x8xf32> to vector<8x8xbf16>
    %cst_49 = arith.constant dense<0.000000e+00> : vector<8x8xf32>
    %132 = tpu.matmul %127, %129, %cst_49 {dimension_numbers = #tpu.dot_dimension_numbers<[1], [1], [0], [0], [0, 0, 1, 0], [], []>} : vector<8x8xbf16>, vector<8x8xbf16>, vector<8x8xf32> -> vector<8x8xf32>
    %cst_50 = arith.constant 0.353553385 : f32
    %133 = vector.broadcast %cst_50 : f32 to vector<8x8xf32>
    %134 = arith.mulf %132, %133 : vector<8x8xf32>
    %135 = vector.broadcast %40 : vector<1x8xf32> to vector<8x8xf32>
    %136 = arith.addf %134, %135 : vector<8x8xf32>
    %cst_51 = arith.constant dense<0xFF800000> : vector<8xf32>
    %137 = vector.multi_reduction <maximumf>, %136, %cst_51 [1] : vector<8x8xf32> to vector<8xf32>
    %138 = vector.shape_cast %137 : vector<8xf32> to vector<8x1xf32>
    %139 = vector.broadcast %138 : vector<8x1xf32> to vector<8x8xf32>
    %140 = arith.subf %136, %139 : vector<8x8xf32>
    %141 = math.exp %140 : vector<8x8xf32>
    %cst_52 = arith.constant dense<0.000000e+00> : vector<8xf32>
    %142 = vector.multi_reduction <add>, %141, %cst_52 [1] : vector<8x8xf32> to vector<8xf32>
    %143 = vector.shape_cast %142 : vector<8xf32> to vector<8x1xf32>
    %144 = tpu.reciprocal %143 {approx = true} : vector<8x1xf32> -> vector<8x1xf32>
    %145 = vector.broadcast %144 : vector<8x1xf32> to vector<8x8xf32>
    %146 = arith.mulf %141, %145 : vector<8x8xf32>
    %147 = arith.truncf %146 : vector<8x8xf32> to vector<8x8xbf16>
    %cst_53 = arith.constant dense<0.000000e+00> : vector<8x8xf32>
    %148 = tpu.matmul %147, %131, %cst_53 {dimension_numbers = #tpu.dot_dimension_numbers<[1], [0], [0], [1], [0, 0, 1, 1], [], []>} : vector<8x8xbf16>, vector<8x8xbf16>, vector<8x8xf32> -> vector<8x8xf32>
    %149 = arith.truncf %148 : vector<8x8xf32> to vector<8x8xbf16>
    %c3 = arith.constant 3 : index
    %c0_54 = arith.constant 0 : index
    %c0_55 = arith.constant 0 : index
    %150 = vector.load %arg7[%c3, %c0_54, %c0_55] : memref<4x8x32xbf16, #tpu.memory_space<vmem>>, vector<1x8x32xbf16>
    %151 = vector.shape_cast %150 : vector<1x8x32xbf16> to vector<8x32xbf16>
    %cst_56 = arith.constant dense<0.000000e+00> : vector<8x32xf32>
    %152 = tpu.matmul %149, %151, %cst_56 {dimension_numbers = #tpu.dot_dimension_numbers<[1], [0], [0], [1], [0, 0, 1, 1], [], []>} : vector<8x8xbf16>, vector<8x32xbf16>, vector<8x32xf32> -> vector<8x32xf32>
    %153 = arith.addf %125, %152 : vector<8x32xf32>
    %c0_57 = arith.constant 0 : index
    %c0_58 = arith.constant 0 : index
    %154 = vector.load %arg8[%c0_57, %c0_58] : memref<1x32xf32, #tpu.memory_space<vmem>>, vector<1x32xf32>
    %155 = vector.broadcast %154 : vector<1x32xf32> to vector<8x32xf32>
    %156 = arith.addf %153, %155 : vector<8x32xf32>
    %157 = arith.addf %156, %25 : vector<8x32xf32>
    %c0_59 = arith.constant 0 : index
    %c0_60 = arith.constant 0 : index
    %158 = vector.load %arg9[%c0_59, %c0_60] : memref<1x32xf32, #tpu.memory_space<vmem>>, vector<1x32xf32>
    %c0_61 = arith.constant 0 : index
    %c0_62 = arith.constant 0 : index
    %159 = vector.load %arg10[%c0_61, %c0_62] : memref<1x32xf32, #tpu.memory_space<vmem>>, vector<1x32xf32>
    %cst_63 = arith.constant dense<0.000000e+00> : vector<8xf32>
    %160 = vector.multi_reduction <add>, %157, %cst_63 [1] : vector<8x32xf32> to vector<8xf32>
    %161 = vector.shape_cast %160 : vector<8xf32> to vector<8x1xf32>
    %cst_64 = arith.constant 3.200000e+01 : f32
    %162 = vector.broadcast %cst_64 : f32 to vector<8x1xf32>
    %163 = arith.divf %161, %162 : vector<8x1xf32>
    %164 = vector.broadcast %163 : vector<8x1xf32> to vector<8x32xf32>
    %165 = arith.subf %157, %164 : vector<8x32xf32>
    %166 = arith.mulf %165, %165 : vector<8x32xf32>
    %cst_65 = arith.constant dense<0.000000e+00> : vector<8xf32>
    %167 = vector.multi_reduction <add>, %166, %cst_65 [1] : vector<8x32xf32> to vector<8xf32>
    %168 = vector.shape_cast %167 : vector<8xf32> to vector<8x1xf32>
    %cst_66 = arith.constant 3.200000e+01 : f32
    %169 = vector.broadcast %cst_66 : f32 to vector<8x1xf32>
    %170 = arith.divf %168, %169 : vector<8x1xf32>
    %171 = vector.broadcast %163 : vector<8x1xf32> to vector<8x32xf32>
    %172 = arith.subf %157, %171 : vector<8x32xf32>
    %cst_67 = arith.constant 9.99999996E-13 : f32
    %173 = vector.broadcast %cst_67 : f32 to vector<8x1xf32>
    %174 = arith.addf %170, %173 : vector<8x1xf32>
    %175 = math.rsqrt %174 : vector<8x1xf32>
    %176 = vector.broadcast %175 : vector<8x1xf32> to vector<8x32xf32>
    %177 = arith.mulf %172, %176 : vector<8x32xf32>
    %178 = vector.broadcast %158 : vector<1x32xf32> to vector<8x32xf32>
    %179 = arith.mulf %177, %178 : vector<8x32xf32>
    %180 = vector.broadcast %159 : vector<1x32xf32> to vector<8x32xf32>
    %181 = arith.addf %179, %180 : vector<8x32xf32>
    %c0_68 = arith.constant 0 : index
    %c0_69 = arith.constant 0 : index
    %182 = vector.load %arg11[%c0_68, %c0_69] : memref<32x64xbf16, #tpu.memory_space<vmem>>, vector<32x64xbf16>
    %183 = arith.truncf %181 : vector<8x32xf32> to vector<8x32xbf16>
    %cst_70 = arith.constant dense<0.000000e+00> : vector<8x64xf32>
    %184 = tpu.matmul %183, %182, %cst_70 {dimension_numbers = #tpu.dot_dimension_numbers<[1], [0], [0], [1], [0, 0, 1, 1], [], []>} : vector<8x32xbf16>, vector<32x64xbf16>, vector<8x64xf32> -> vector<8x64xf32>
    %c0_71 = arith.constant 0 : index
    %c0_72 = arith.constant 0 : index
    %185 = vector.load %arg12[%c0_71, %c0_72] : memref<1x64xf32, #tpu.memory_space<vmem>>, vector<1x64xf32>
    %186 = vector.broadcast %185 : vector<1x64xf32> to vector<8x64xf32>
    %187 = arith.addf %184, %186 : vector<8x64xf32>
    %cst_73 = arith.constant 5.000000e-01 : f32
    %188 = vector.broadcast %cst_73 : f32 to vector<8x64xf32>
    %189 = arith.mulf %188, %187 : vector<8x64xf32>
    %cst_74 = arith.constant 0.707106769 : f32
    %190 = vector.broadcast %cst_74 : f32 to vector<8x64xf32>
    %191 = arith.mulf %187, %190 : vector<8x64xf32>
    %192 = math.erf %191 : vector<8x64xf32>
    %cst_75 = arith.constant 1.000000e+00 : f32
    %193 = vector.broadcast %cst_75 : f32 to vector<8x64xf32>
    %194 = arith.addf %193, %192 : vector<8x64xf32>
    %195 = arith.mulf %189, %194 : vector<8x64xf32>
    %c0_76 = arith.constant 0 : index
    %c0_77 = arith.constant 0 : index
    %196 = vector.load %arg13[%c0_76, %c0_77] : memref<64x32xbf16, #tpu.memory_space<vmem>>, vector<64x32xbf16>
    %197 = arith.truncf %195 : vector<8x64xf32> to vector<8x64xbf16>
    %cst_78 = arith.constant dense<0.000000e+00> : vector<8x32xf32>
    %198 = tpu.matmul %197, %196, %cst_78 {dimension_numbers = #tpu.dot_dimension_numbers<[1], [0], [0], [1], [0, 0, 1, 1], [], []>} : vector<8x64xbf16>, vector<64x32xbf16>, vector<8x32xf32> -> vector<8x32xf32>
    %c0_79 = arith.constant 0 : index
    %c0_80 = arith.constant 0 : index
    %199 = vector.load %arg14[%c0_79, %c0_80] : memref<1x32xf32, #tpu.memory_space<vmem>>, vector<1x32xf32>
    %200 = vector.broadcast %199 : vector<1x32xf32> to vector<8x32xf32>
    %201 = arith.addf %198, %200 : vector<8x32xf32>
    %202 = arith.addf %201, %181 : vector<8x32xf32>
    %c0_81 = arith.constant 0 : index
    %c0_82 = arith.constant 0 : index
    %203 = vector.load %arg15[%c0_81, %c0_82] : memref<1x32xf32, #tpu.memory_space<vmem>>, vector<1x32xf32>
    %c0_83 = arith.constant 0 : index
    %c0_84 = arith.constant 0 : index
    %204 = vector.load %arg16[%c0_83, %c0_84] : memref<1x32xf32, #tpu.memory_space<vmem>>, vector<1x32xf32>
    %cst_85 = arith.constant dense<0.000000e+00> : vector<8xf32>
    %205 = vector.multi_reduction <add>, %202, %cst_85 [1] : vector<8x32xf32> to vector<8xf32>
    %206 = vector.shape_cast %205 : vector<8xf32> to vector<8x1xf32>
    %cst_86 = arith.constant 3.200000e+01 : f32
    %207 = vector.broadcast %cst_86 : f32 to vector<8x1xf32>
    %208 = arith.divf %206, %207 : vector<8x1xf32>
    %209 = vector.broadcast %208 : vector<8x1xf32> to vector<8x32xf32>
    %210 = arith.subf %202, %209 : vector<8x32xf32>
    %211 = arith.mulf %210, %210 : vector<8x32xf32>
    %cst_87 = arith.constant dense<0.000000e+00> : vector<8xf32>
    %212 = vector.multi_reduction <add>, %211, %cst_87 [1] : vector<8x32xf32> to vector<8xf32>
    %213 = vector.shape_cast %212 : vector<8xf32> to vector<8x1xf32>
    %cst_88 = arith.constant 3.200000e+01 : f32
    %214 = vector.broadcast %cst_88 : f32 to vector<8x1xf32>
    %215 = arith.divf %213, %214 : vector<8x1xf32>
    %216 = vector.broadcast %208 : vector<8x1xf32> to vector<8x32xf32>
    %217 = arith.subf %202, %216 : vector<8x32xf32>
    %cst_89 = arith.constant 9.99999996E-13 : f32
    %218 = vector.broadcast %cst_89 : f32 to vector<8x1xf32>
    %219 = arith.addf %215, %218 : vector<8x1xf32>
    %220 = math.rsqrt %219 : vector<8x1xf32>
    %221 = vector.broadcast %220 : vector<8x1xf32> to vector<8x32xf32>
    %222 = arith.mulf %217, %221 : vector<8x32xf32>
    %223 = vector.broadcast %203 : vector<1x32xf32> to vector<8x32xf32>
    %224 = arith.mulf %222, %223 : vector<8x32xf32>
    %225 = vector.broadcast %204 : vector<1x32xf32> to vector<8x32xf32>
    %226 = arith.addf %224, %225 : vector<8x32xf32>
    %c0_90 = arith.constant 0 : index
    %c0_91 = arith.constant 0 : index
    %c0_92 = arith.constant 0 : index
    %227 = vector.load %arg18[%c0_90, %c0_91, %c0_92] : memref<1x8x32xf32, #tpu.memory_space<vmem>>, vector<1x8x32xf32>
    %228 = vector.shape_cast %227 : vector<1x8x32xf32> to vector<8x32xf32>
    %229 = vector.shape_cast %226 : vector<8x32xf32> to vector<1x8x32xf32>
    tpu.vector_store %arg18[%c0_90, %c0_91, %c0_92], %229 {strides = array<i32>} : memref<1x8x32xf32, #tpu.memory_space<vmem>>, vector<1x8x32xf32>,
    return
  }
  func.func @transform_0(%arg0: i32) -> (i32, i32, i32) {
    %c0_i32 = arith.constant 0 : i32
    %c0_i32_0 = arith.constant 0 : i32
    %c0_i32_1 = arith.constant 0 : i32
    return %arg0, %c0_i32, %c0_i32_0 : i32, i32, i32
  }
  func.func @transform_1(%arg0: i32) -> (i32, i32, i32) {
    %c0_i32 = arith.constant 0 : i32
    %c0_i32_0 = arith.constant 0 : i32
    %c0_i32_1 = arith.constant 0 : i32
    return %arg0, %c0_i32, %c0_i32_0 : i32, i32, i32
  }
  func.func @transform_2(%arg0: i32) -> (i32, i32) {
    %c0_i32 = arith.constant 0 : i32
    %c0_i32_0 = arith.constant 0 : i32
    %c0_i32_1 = arith.constant 0 : i32
    return %c0_i32, %c0_i32_0 : i32, i32
  }
  func.func @transform_3(%arg0: i32) -> (i32, i32) {
    %c0_i32 = arith.constant 0 : i32
    %c0_i32_0 = arith.constant 0 : i32
    %c0_i32_1 = arith.constant 0 : i32
    return %c0_i32, %c0_i32_0 : i32, i32
  }
  func.func @transform_4(%arg0: i32) -> (i32, i32) {
    %c0_i32 = arith.constant 0 : i32
    %c0_i32_0 = arith.constant 0 : i32
    %c0_i32_1 = arith.constant 0 : i32
    return %c0_i32, %c0_i32_0 : i32, i32
  }
  func.func @transform_5(%arg0: i32) -> (i32, i32) {
    %c0_i32 = arith.constant 0 : i32
    %c0_i32_0 = arith.constant 0 : i32
    %c0_i32_1 = arith.constant 0 : i32
    return %c0_i32, %c0_i32_0 : i32, i32
  }
  func.func @transform_6(%arg0: i32) -> (i32, i32, i32) {
    %c0_i32 = arith.constant 0 : i32
    %c0_i32_0 = arith.constant 0 : i32
    %c0_i32_1 = arith.constant 0 : i32
    %c0_i32_2 = arith.constant 0 : i32
    return %c0_i32, %c0_i32_0, %c0_i32_1 : i32, i32, i32
  }
  func.func @transform_7(%arg0: i32) -> (i32, i32) {
    %c0_i32 = arith.constant 0 : i32
    %c0_i32_0 = arith.constant 0 : i32
    %c0_i32_1 = arith.constant 0 : i32
    return %c0_i32, %c0_i32_0 : i32, i32
  }
  func.func @transform_8(%arg0: i32) -> (i32, i32) {
    %c0_i32 = arith.constant 0 : i32
    %c0_i32_0 = arith.constant 0 : i32
    %c0_i32_1 = arith.constant 0 : i32
    return %c0_i32, %c0_i32_0 : i32, i32
  }
  func.func @transform_9(%arg0: i32) -> (i32, i32) {
    %c0_i32 = arith.constant 0 : i32
    %c0_i32_0 = arith.constant 0 : i32
    %c0_i32_1 = arith.constant 0 : i32
    return %c0_i32, %c0_i32_0 : i32, i32
  }
  func.func @transform_10(%arg0: i32) -> (i32, i32) {
    %c0_i32 = arith.constant 0 : i32
    %c0_i32_0 = arith.constant 0 : i32
    %c0_i32_1 = arith.constant 0 : i32
    return %c0_i32, %c0_i32_0 : i32, i32
  }
  func.func @transform_11(%arg0: i32) -> (i32, i32) {
    %c0_i32 = arith.constant 0 : i32
    %c0_i32_0 = arith.constant 0 : i32
    %c0_i32_1 = arith.constant 0 : i32
    return %c0_i32, %c0_i32_0 : i32, i32
  }
  func.func @transform_12(%arg0: i32) -> (i32, i32) {
    %c0_i32 = arith.constant 0 : i32
    %c0_i32_0 = arith.constant 0 : i32
    %c0_i32_1 = arith.constant 0 : i32
    return %c0_i32, %c0_i32_0 : i32, i32
  }
  func.func @transform_13(%arg0: i32) -> (i32, i32) {
    %c0_i32 = arith.constant 0 : i32
    %c0_i32_0 = arith.constant 0 : i32
    %c0_i32_1 = arith.constant 0 : i32
    return %c0_i32, %c0_i32_0 : i32, i32
  }
  func.func @transform_14(%arg0: i32) -> (i32, i32) {
    %c0_i32 = arith.constant 0 : i32
    %c0_i32_0 = arith.constant 0 : i32
    %c0_i32_1 = arith.constant 0 : i32
    return %c0_i32, %c0_i32_0 : i32, i32
  }
  func.func @transform_15(%arg0: i32) -> (i32, i32) {
    %c0_i32 = arith.constant 0 : i32
    %c0_i32_0 = arith.constant 0 : i32
    %c0_i32_1 = arith.constant 0 : i32
    return %c0_i32, %c0_i32_0 : i32, i32
  }
  func.func @transform_16(%arg0: i32) -> (i32, i32, i32) {
    %c0_i32 = arith.constant 0 : i32
    %c0_i32_0 = arith.constant 0 : i32
    %c0_i32_1 = arith.constant 0 : i32
    return %arg0, %c0_i32, %c0_i32_0 : i32, i32, i32
  }
  func.func @transform_17(%arg0: i32) -> (i32, i32, i32) {
    %c0_i32 = arith.constant 0 : i32
    %c0_i32_0 = arith.constant 0 : i32
    %c0_i32_1 = arith.constant 0 : i32
    return %arg0, %c0_i32, %c0_i32_0 : i32, i32, i32
  }
}

module attributes {stable_mosaic.version = 11 : i64} {
  func.func @_encoder_layer_kernel(%arg0: i32, %arg1: memref<1x8x32xf32, #tpu.memory_space<vmem>>, %arg2: memref<1x1x8xf32, #tpu.memory_space<vmem>>, %arg3: memref<32x96xbf16, #tpu.memory_space<vmem>>, %arg4: memref<1x96xf32, #tpu.memory_space<vmem>>, %arg5: memref<4x8x32xbf16, #tpu.memory_space<vmem>>, %arg6: memref<1x32xf32, #tpu.memory_space<vmem>>, %arg7: memref<1x32xf32, #tpu.memory_space<vmem>>, %arg8: memref<1x32xf32, #tpu.memory_space<vmem>>, %arg9: memref<32x64xbf16, #tpu.memory_space<vmem>>, %arg10: memref<1x64xf32, #tpu.memory_space<vmem>>, %arg11: memref<64x32xbf16, #tpu.memory_space<vmem>>, %arg12: memref<1x32xf32, #tpu.memory_space<vmem>>, %arg13: memref<1x32xf32, #tpu.memory_space<vmem>>, %arg14: memref<1x32xf32, #tpu.memory_space<vmem>>, %arg15: memref<32x32xbf16, #tpu.memory_space<vmem>>, %arg16: memref<1x32xf32, #tpu.memory_space<vmem>>, %arg17: memref<32x128xbf16, #tpu.memory_space<vmem>>, %arg18: memref<1x128xf32, #tpu.memory_space<vmem>>, %arg19: memref<1x8x32xf32, #tpu.memory_space<vmem>>, %arg20: memref<1x1x32xf32, #tpu.memory_space<vmem>>, %arg21: memref<1x1x128xf32, #tpu.memory_space<vmem>>) attributes {dimension_semantics = [#tpu.dimension_semantics<parallel>], iteration_bounds = array<i64: 2>, scalar_prefetch = 0 : i64, scratch_operands = 0 : i64, tpu.core_type = #tpu.core_type<tc>, window_params = [{transform_indices = @transform_0, window_bounds = array<i64: 1, 8, 32>}, {transform_indices = @transform_1, window_bounds = array<i64: 1, 1, 8>}, {pipeline_mode = #tpu.pipeline_mode<synchronous>, transform_indices = @transform_2, window_bounds = array<i64: 32, 96>}, {pipeline_mode = #tpu.pipeline_mode<synchronous>, transform_indices = @transform_3, window_bounds = array<i64: 1, 96>}, {pipeline_mode = #tpu.pipeline_mode<synchronous>, transform_indices = @transform_4, window_bounds = array<i64: 4, 8, 32>}, {pipeline_mode = #tpu.pipeline_mode<synchronous>, transform_indices = @transform_5, window_bounds = array<i64: 1, 32>}, {pipeline_mode = #tpu.pipeline_mode<synchronous>, transform_indices = @transform_6, window_bounds = array<i64: 1, 32>}, {pipeline_mode = #tpu.pipeline_mode<synchronous>, transform_indices = @transform_7, window_bounds = array<i64: 1, 32>}, {pipeline_mode = #tpu.pipeline_mode<synchronous>, transform_indices = @transform_8, window_bounds = array<i64: 32, 64>}, {pipeline_mode = #tpu.pipeline_mode<synchronous>, transform_indices = @transform_9, window_bounds = array<i64: 1, 64>}, {pipeline_mode = #tpu.pipeline_mode<synchronous>, transform_indices = @transform_10, window_bounds = array<i64: 64, 32>}, {pipeline_mode = #tpu.pipeline_mode<synchronous>, transform_indices = @transform_11, window_bounds = array<i64: 1, 32>}, {pipeline_mode = #tpu.pipeline_mode<synchronous>, transform_indices = @transform_12, window_bounds = array<i64: 1, 32>}, {pipeline_mode = #tpu.pipeline_mode<synchronous>, transform_indices = @transform_13, window_bounds = array<i64: 1, 32>}, {pipeline_mode = #tpu.pipeline_mode<synchronous>, transform_indices = @transform_14, window_bounds = array<i64: 32, 32>}, {pipeline_mode = #tpu.pipeline_mode<synchronous>, transform_indices = @transform_15, window_bounds = array<i64: 1, 32>}, {pipeline_mode = #tpu.pipeline_mode<synchronous>, transform_indices = @transform_16, window_bounds = array<i64: 32, 128>}, {pipeline_mode = #tpu.pipeline_mode<synchronous>, transform_indices = @transform_17, window_bounds = array<i64: 1, 128>}, {transform_indices = @transform_18, window_bounds = array<i64: 1, 8, 32>}, {transform_indices = @transform_19, window_bounds = array<i64: 1, 1, 32>}, {transform_indices = @transform_20, window_bounds = array<i64: 1, 1, 128>}]} {
    %c0 = arith.constant 0 : index
    %c0_0 = arith.constant 0 : index
    %c0_1 = arith.constant 0 : index
    %0 = vector.load %arg1[%c0, %c0_0, %c0_1] : memref<1x8x32xf32, #tpu.memory_space<vmem>>, vector<1x8x32xf32>
    %1 = vector.shape_cast %0 : vector<1x8x32xf32> to vector<8x32xf32>
    %c0_2 = arith.constant 0 : index
    %c0_3 = arith.constant 0 : index
    %2 = vector.load %arg3[%c0_2, %c0_3] : memref<32x96xbf16, #tpu.memory_space<vmem>>, vector<32x96xbf16>
    %3 = arith.truncf %1 : vector<8x32xf32> to vector<8x32xbf16>
    %cst = arith.constant dense<0.000000e+00> : vector<8x96xf32>
    %4 = tpu.matmul %3, %2, %cst {dimension_numbers = #tpu.dot_dimension_numbers<[1], [0], [0], [1], [0, 0, 1, 1], [], []>} : vector<8x32xbf16>, vector<32x96xbf16>, vector<8x96xf32> -> vector<8x96xf32>
    %c0_4 = arith.constant 0 : index
    %c0_5 = arith.constant 0 : index
    %5 = vector.load %arg4[%c0_4, %c0_5] : memref<1x96xf32, #tpu.memory_space<vmem>>, vector<1x96xf32>
    %6 = vector.broadcast %5 : vector<1x96xf32> to vector<8x96xf32>
    %7 = arith.addf %4, %6 : vector<8x96xf32>
    %c0_6 = arith.constant 0 : index
    %c0_7 = arith.constant 0 : index
    %c0_8 = arith.constant 0 : index
    %8 = vector.load %arg2[%c0_6, %c0_7, %c0_8] : memref<1x1x8xf32, #tpu.memory_space<vmem>>, vector<1x1x8xf32>
    %9 = vector.shape_cast %8 : vector<1x1x8xf32> to vector<1x8xf32>
    %cst_9 = arith.constant 1.000000e+00 : f32
    %10 = vector.broadcast %cst_9 : f32 to vector<1x8xf32>
    %11 = arith.subf %10, %9 : vector<1x8xf32>
    %cst_10 = arith.constant -1.000000e+09 : f32
    %12 = vector.broadcast %cst_10 : f32 to vector<1x8xf32>
    %13 = arith.mulf %11, %12 : vector<1x8xf32>
    %cst_11 = arith.constant 0.000000e+00 : f32
    %14 = vector.broadcast %cst_11 : f32 to vector<8x32xf32>
    %15 = vector.extract_strided_slice %7 {offsets = [0, 0], sizes = [8, 8], strides = [1, 1]} : vector<8x96xf32> to vector<8x8xf32>
    %16 = arith.truncf %15 : vector<8x8xf32> to vector<8x8xbf16>
    %17 = vector.extract_strided_slice %7 {offsets = [0, 32], sizes = [8, 8], strides = [1, 1]} : vector<8x96xf32> to vector<8x8xf32>
    %18 = arith.truncf %17 : vector<8x8xf32> to vector<8x8xbf16>
    %19 = vector.extract_strided_slice %7 {offsets = [0, 64], sizes = [8, 8], strides = [1, 1]} : vector<8x96xf32> to vector<8x8xf32>
    %20 = arith.truncf %19 : vector<8x8xf32> to vector<8x8xbf16>
    %cst_12 = arith.constant dense<0.000000e+00> : vector<8x8xf32>
    %21 = tpu.matmul %16, %18, %cst_12 {dimension_numbers = #tpu.dot_dimension_numbers<[1], [1], [0], [0], [0, 0, 1, 0], [], []>} : vector<8x8xbf16>, vector<8x8xbf16>, vector<8x8xf32> -> vector<8x8xf32>
    %cst_13 = arith.constant 0.353553385 : f32
    %22 = vector.broadcast %cst_13 : f32 to vector<8x8xf32>
    %23 = arith.mulf %21, %22 : vector<8x8xf32>
    %24 = vector.broadcast %13 : vector<1x8xf32> to vector<8x8xf32>
    %25 = arith.addf %23, %24 : vector<8x8xf32>
    %cst_14 = arith.constant dense<0xFF800000> : vector<8xf32>
    %26 = vector.multi_reduction <maximumf>, %25, %cst_14 [1] : vector<8x8xf32> to vector<8xf32>
    %27 = vector.shape_cast %26 : vector<8xf32> to vector<8x1xf32>
    %28 = vector.broadcast %27 : vector<8x1xf32> to vector<8x8xf32>
    %29 = arith.subf %25, %28 : vector<8x8xf32>
    %30 = math.exp %29 : vector<8x8xf32>
    %cst_15 = arith.constant dense<0.000000e+00> : vector<8xf32>
    %31 = vector.multi_reduction <add>, %30, %cst_15 [1] : vector<8x8xf32> to vector<8xf32>
    %32 = vector.shape_cast %31 : vector<8xf32> to vector<8x1xf32>
    %33 = tpu.reciprocal %32 {approx = true} : vector<8x1xf32> -> vector<8x1xf32>
    %34 = vector.broadcast %33 : vector<8x1xf32> to vector<8x8xf32>
    %35 = arith.mulf %30, %34 : vector<8x8xf32>
    %36 = arith.truncf %35 : vector<8x8xf32> to vector<8x8xbf16>
    %cst_16 = arith.constant dense<0.000000e+00> : vector<8x8xf32>
    %37 = tpu.matmul %36, %20, %cst_16 {dimension_numbers = #tpu.dot_dimension_numbers<[1], [0], [0], [1], [0, 0, 1, 1], [], []>} : vector<8x8xbf16>, vector<8x8xbf16>, vector<8x8xf32> -> vector<8x8xf32>
    %38 = arith.truncf %37 : vector<8x8xf32> to vector<8x8xbf16>
    %c0_17 = arith.constant 0 : index
    %c0_18 = arith.constant 0 : index
    %c0_19 = arith.constant 0 : index
    %39 = vector.load %arg5[%c0_17, %c0_18, %c0_19] : memref<4x8x32xbf16, #tpu.memory_space<vmem>>, vector<1x8x32xbf16>
    %40 = vector.shape_cast %39 : vector<1x8x32xbf16> to vector<8x32xbf16>
    %cst_20 = arith.constant dense<0.000000e+00> : vector<8x32xf32>
    %41 = tpu.matmul %38, %40, %cst_20 {dimension_numbers = #tpu.dot_dimension_numbers<[1], [0], [0], [1], [0, 0, 1, 1], [], []>} : vector<8x8xbf16>, vector<8x32xbf16>, vector<8x32xf32> -> vector<8x32xf32>
    %42 = arith.addf %14, %41 : vector<8x32xf32>
    %43 = vector.extract_strided_slice %7 {offsets = [0, 8], sizes = [8, 8], strides = [1, 1]} : vector<8x96xf32> to vector<8x8xf32>
    %44 = arith.truncf %43 : vector<8x8xf32> to vector<8x8xbf16>
    %45 = vector.extract_strided_slice %7 {offsets = [0, 40], sizes = [8, 8], strides = [1, 1]} : vector<8x96xf32> to vector<8x8xf32>
    %46 = arith.truncf %45 : vector<8x8xf32> to vector<8x8xbf16>
    %47 = vector.extract_strided_slice %7 {offsets = [0, 72], sizes = [8, 8], strides = [1, 1]} : vector<8x96xf32> to vector<8x8xf32>
    %48 = arith.truncf %47 : vector<8x8xf32> to vector<8x8xbf16>
    %cst_21 = arith.constant dense<0.000000e+00> : vector<8x8xf32>
    %49 = tpu.matmul %44, %46, %cst_21 {dimension_numbers = #tpu.dot_dimension_numbers<[1], [1], [0], [0], [0, 0, 1, 0], [], []>} : vector<8x8xbf16>, vector<8x8xbf16>, vector<8x8xf32> -> vector<8x8xf32>
    %cst_22 = arith.constant 0.353553385 : f32
    %50 = vector.broadcast %cst_22 : f32 to vector<8x8xf32>
    %51 = arith.mulf %49, %50 : vector<8x8xf32>
    %52 = vector.broadcast %13 : vector<1x8xf32> to vector<8x8xf32>
    %53 = arith.addf %51, %52 : vector<8x8xf32>
    %cst_23 = arith.constant dense<0xFF800000> : vector<8xf32>
    %54 = vector.multi_reduction <maximumf>, %53, %cst_23 [1] : vector<8x8xf32> to vector<8xf32>
    %55 = vector.shape_cast %54 : vector<8xf32> to vector<8x1xf32>
    %56 = vector.broadcast %55 : vector<8x1xf32> to vector<8x8xf32>
    %57 = arith.subf %53, %56 : vector<8x8xf32>
    %58 = math.exp %57 : vector<8x8xf32>
    %cst_24 = arith.constant dense<0.000000e+00> : vector<8xf32>
    %59 = vector.multi_reduction <add>, %58, %cst_24 [1] : vector<8x8xf32> to vector<8xf32>
    %60 = vector.shape_cast %59 : vector<8xf32> to vector<8x1xf32>
    %61 = tpu.reciprocal %60 {approx = true} : vector<8x1xf32> -> vector<8x1xf32>
    %62 = vector.broadcast %61 : vector<8x1xf32> to vector<8x8xf32>
    %63 = arith.mulf %58, %62 : vector<8x8xf32>
    %64 = arith.truncf %63 : vector<8x8xf32> to vector<8x8xbf16>
    %cst_25 = arith.constant dense<0.000000e+00> : vector<8x8xf32>
    %65 = tpu.matmul %64, %48, %cst_25 {dimension_numbers = #tpu.dot_dimension_numbers<[1], [0], [0], [1], [0, 0, 1, 1], [], []>} : vector<8x8xbf16>, vector<8x8xbf16>, vector<8x8xf32> -> vector<8x8xf32>
    %66 = arith.truncf %65 : vector<8x8xf32> to vector<8x8xbf16>
    %c1 = arith.constant 1 : index
    %c0_26 = arith.constant 0 : index
    %c0_27 = arith.constant 0 : index
    %67 = vector.load %arg5[%c1, %c0_26, %c0_27] : memref<4x8x32xbf16, #tpu.memory_space<vmem>>, vector<1x8x32xbf16>
    %68 = vector.shape_cast %67 : vector<1x8x32xbf16> to vector<8x32xbf16>
    %cst_28 = arith.constant dense<0.000000e+00> : vector<8x32xf32>
    %69 = tpu.matmul %66, %68, %cst_28 {dimension_numbers = #tpu.dot_dimension_numbers<[1], [0], [0], [1], [0, 0, 1, 1], [], []>} : vector<8x8xbf16>, vector<8x32xbf16>, vector<8x32xf32> -> vector<8x32xf32>
    %70 = arith.addf %42, %69 : vector<8x32xf32>
    %71 = vector.extract_strided_slice %7 {offsets = [0, 16], sizes = [8, 8], strides = [1, 1]} : vector<8x96xf32> to vector<8x8xf32>
    %72 = arith.truncf %71 : vector<8x8xf32> to vector<8x8xbf16>
    %73 = vector.extract_strided_slice %7 {offsets = [0, 48], sizes = [8, 8], strides = [1, 1]} : vector<8x96xf32> to vector<8x8xf32>
    %74 = arith.truncf %73 : vector<8x8xf32> to vector<8x8xbf16>
    %75 = vector.extract_strided_slice %7 {offsets = [0, 80], sizes = [8, 8], strides = [1, 1]} : vector<8x96xf32> to vector<8x8xf32>
    %76 = arith.truncf %75 : vector<8x8xf32> to vector<8x8xbf16>
    %cst_29 = arith.constant dense<0.000000e+00> : vector<8x8xf32>
    %77 = tpu.matmul %72, %74, %cst_29 {dimension_numbers = #tpu.dot_dimension_numbers<[1], [1], [0], [0], [0, 0, 1, 0], [], []>} : vector<8x8xbf16>, vector<8x8xbf16>, vector<8x8xf32> -> vector<8x8xf32>
    %cst_30 = arith.constant 0.353553385 : f32
    %78 = vector.broadcast %cst_30 : f32 to vector<8x8xf32>
    %79 = arith.mulf %77, %78 : vector<8x8xf32>
    %80 = vector.broadcast %13 : vector<1x8xf32> to vector<8x8xf32>
    %81 = arith.addf %79, %80 : vector<8x8xf32>
    %cst_31 = arith.constant dense<0xFF800000> : vector<8xf32>
    %82 = vector.multi_reduction <maximumf>, %81, %cst_31 [1] : vector<8x8xf32> to vector<8xf32>
    %83 = vector.shape_cast %82 : vector<8xf32> to vector<8x1xf32>
    %84 = vector.broadcast %83 : vector<8x1xf32> to vector<8x8xf32>
    %85 = arith.subf %81, %84 : vector<8x8xf32>
    %86 = math.exp %85 : vector<8x8xf32>
    %cst_32 = arith.constant dense<0.000000e+00> : vector<8xf32>
    %87 = vector.multi_reduction <add>, %86, %cst_32 [1] : vector<8x8xf32> to vector<8xf32>
    %88 = vector.shape_cast %87 : vector<8xf32> to vector<8x1xf32>
    %89 = tpu.reciprocal %88 {approx = true} : vector<8x1xf32> -> vector<8x1xf32>
    %90 = vector.broadcast %89 : vector<8x1xf32> to vector<8x8xf32>
    %91 = arith.mulf %86, %90 : vector<8x8xf32>
    %92 = arith.truncf %91 : vector<8x8xf32> to vector<8x8xbf16>
    %cst_33 = arith.constant dense<0.000000e+00> : vector<8x8xf32>
    %93 = tpu.matmul %92, %76, %cst_33 {dimension_numbers = #tpu.dot_dimension_numbers<[1], [0], [0], [1], [0, 0, 1, 1], [], []>} : vector<8x8xbf16>, vector<8x8xbf16>, vector<8x8xf32> -> vector<8x8xf32>
    %94 = arith.truncf %93 : vector<8x8xf32> to vector<8x8xbf16>
    %c2 = arith.constant 2 : index
    %c0_34 = arith.constant 0 : index
    %c0_35 = arith.constant 0 : index
    %95 = vector.load %arg5[%c2, %c0_34, %c0_35] : memref<4x8x32xbf16, #tpu.memory_space<vmem>>, vector<1x8x32xbf16>
    %96 = vector.shape_cast %95 : vector<1x8x32xbf16> to vector<8x32xbf16>
    %cst_36 = arith.constant dense<0.000000e+00> : vector<8x32xf32>
    %97 = tpu.matmul %94, %96, %cst_36 {dimension_numbers = #tpu.dot_dimension_numbers<[1], [0], [0], [1], [0, 0, 1, 1], [], []>} : vector<8x8xbf16>, vector<8x32xbf16>, vector<8x32xf32> -> vector<8x32xf32>
    %98 = arith.addf %70, %97 : vector<8x32xf32>
    %99 = vector.extract_strided_slice %7 {offsets = [0, 24], sizes = [8, 8], strides = [1, 1]} : vector<8x96xf32> to vector<8x8xf32>
    %100 = arith.truncf %99 : vector<8x8xf32> to vector<8x8xbf16>
    %101 = vector.extract_strided_slice %7 {offsets = [0, 56], sizes = [8, 8], strides = [1, 1]} : vector<8x96xf32> to vector<8x8xf32>
    %102 = arith.truncf %101 : vector<8x8xf32> to vector<8x8xbf16>
    %103 = vector.extract_strided_slice %7 {offsets = [0, 88], sizes = [8, 8], strides = [1, 1]} : vector<8x96xf32> to vector<8x8xf32>
    %104 = arith.truncf %103 : vector<8x8xf32> to vector<8x8xbf16>
    %cst_37 = arith.constant dense<0.000000e+00> : vector<8x8xf32>
    %105 = tpu.matmul %100, %102, %cst_37 {dimension_numbers = #tpu.dot_dimension_numbers<[1], [1], [0], [0], [0, 0, 1, 0], [], []>} : vector<8x8xbf16>, vector<8x8xbf16>, vector<8x8xf32> -> vector<8x8xf32>
    %cst_38 = arith.constant 0.353553385 : f32
    %106 = vector.broadcast %cst_38 : f32 to vector<8x8xf32>
    %107 = arith.mulf %105, %106 : vector<8x8xf32>
    %108 = vector.broadcast %13 : vector<1x8xf32> to vector<8x8xf32>
    %109 = arith.addf %107, %108 : vector<8x8xf32>
    %cst_39 = arith.constant dense<0xFF800000> : vector<8xf32>
    %110 = vector.multi_reduction <maximumf>, %109, %cst_39 [1] : vector<8x8xf32> to vector<8xf32>
    %111 = vector.shape_cast %110 : vector<8xf32> to vector<8x1xf32>
    %112 = vector.broadcast %111 : vector<8x1xf32> to vector<8x8xf32>
    %113 = arith.subf %109, %112 : vector<8x8xf32>
    %114 = math.exp %113 : vector<8x8xf32>
    %cst_40 = arith.constant dense<0.000000e+00> : vector<8xf32>
    %115 = vector.multi_reduction <add>, %114, %cst_40 [1] : vector<8x8xf32> to vector<8xf32>
    %116 = vector.shape_cast %115 : vector<8xf32> to vector<8x1xf32>
    %117 = tpu.reciprocal %116 {approx = true} : vector<8x1xf32> -> vector<8x1xf32>
    %118 = vector.broadcast %117 : vector<8x1xf32> to vector<8x8xf32>
    %119 = arith.mulf %114, %118 : vector<8x8xf32>
    %120 = arith.truncf %119 : vector<8x8xf32> to vector<8x8xbf16>
    %cst_41 = arith.constant dense<0.000000e+00> : vector<8x8xf32>
    %121 = tpu.matmul %120, %104, %cst_41 {dimension_numbers = #tpu.dot_dimension_numbers<[1], [0], [0], [1], [0, 0, 1, 1], [], []>} : vector<8x8xbf16>, vector<8x8xbf16>, vector<8x8xf32> -> vector<8x8xf32>
    %122 = arith.truncf %121 : vector<8x8xf32> to vector<8x8xbf16>
    %c3 = arith.constant 3 : index
    %c0_42 = arith.constant 0 : index
    %c0_43 = arith.constant 0 : index
    %123 = vector.load %arg5[%c3, %c0_42, %c0_43] : memref<4x8x32xbf16, #tpu.memory_space<vmem>>, vector<1x8x32xbf16>
    %124 = vector.shape_cast %123 : vector<1x8x32xbf16> to vector<8x32xbf16>
    %cst_44 = arith.constant dense<0.000000e+00> : vector<8x32xf32>
    %125 = tpu.matmul %122, %124, %cst_44 {dimension_numbers = #tpu.dot_dimension_numbers<[1], [0], [0], [1], [0, 0, 1, 1], [], []>} : vector<8x8xbf16>, vector<8x32xbf16>, vector<8x32xf32> -> vector<8x32xf32>
    %126 = arith.addf %98, %125 : vector<8x32xf32>
    %c0_45 = arith.constant 0 : index
    %c0_46 = arith.constant 0 : index
    %127 = vector.load %arg6[%c0_45, %c0_46] : memref<1x32xf32, #tpu.memory_space<vmem>>, vector<1x32xf32>
    %128 = vector.broadcast %127 : vector<1x32xf32> to vector<8x32xf32>
    %129 = arith.addf %126, %128 : vector<8x32xf32>
    %130 = arith.addf %129, %1 : vector<8x32xf32>
    %c0_47 = arith.constant 0 : index
    %c0_48 = arith.constant 0 : index
    %131 = vector.load %arg7[%c0_47, %c0_48] : memref<1x32xf32, #tpu.memory_space<vmem>>, vector<1x32xf32>
    %c0_49 = arith.constant 0 : index
    %c0_50 = arith.constant 0 : index
    %132 = vector.load %arg8[%c0_49, %c0_50] : memref<1x32xf32, #tpu.memory_space<vmem>>, vector<1x32xf32>
    %cst_51 = arith.constant dense<0.000000e+00> : vector<8xf32>
    %133 = vector.multi_reduction <add>, %130, %cst_51 [1] : vector<8x32xf32> to vector<8xf32>
    %134 = vector.shape_cast %133 : vector<8xf32> to vector<8x1xf32>
    %cst_52 = arith.constant 3.200000e+01 : f32
    %135 = vector.broadcast %cst_52 : f32 to vector<8x1xf32>
    %136 = arith.divf %134, %135 : vector<8x1xf32>
    %137 = vector.broadcast %136 : vector<8x1xf32> to vector<8x32xf32>
    %138 = arith.subf %130, %137 : vector<8x32xf32>
    %139 = arith.mulf %138, %138 : vector<8x32xf32>
    %cst_53 = arith.constant dense<0.000000e+00> : vector<8xf32>
    %140 = vector.multi_reduction <add>, %139, %cst_53 [1] : vector<8x32xf32> to vector<8xf32>
    %141 = vector.shape_cast %140 : vector<8xf32> to vector<8x1xf32>
    %cst_54 = arith.constant 3.200000e+01 : f32
    %142 = vector.broadcast %cst_54 : f32 to vector<8x1xf32>
    %143 = arith.divf %141, %142 : vector<8x1xf32>
    %144 = vector.broadcast %136 : vector<8x1xf32> to vector<8x32xf32>
    %145 = arith.subf %130, %144 : vector<8x32xf32>
    %cst_55 = arith.constant 9.99999996E-13 : f32
    %146 = vector.broadcast %cst_55 : f32 to vector<8x1xf32>
    %147 = arith.addf %143, %146 : vector<8x1xf32>
    %148 = math.rsqrt %147 : vector<8x1xf32>
    %149 = vector.broadcast %148 : vector<8x1xf32> to vector<8x32xf32>
    %150 = arith.mulf %145, %149 : vector<8x32xf32>
    %151 = vector.broadcast %131 : vector<1x32xf32> to vector<8x32xf32>
    %152 = arith.mulf %150, %151 : vector<8x32xf32>
    %153 = vector.broadcast %132 : vector<1x32xf32> to vector<8x32xf32>
    %154 = arith.addf %152, %153 : vector<8x32xf32>
    %c0_56 = arith.constant 0 : index
    %c0_57 = arith.constant 0 : index
    %155 = vector.load %arg9[%c0_56, %c0_57] : memref<32x64xbf16, #tpu.memory_space<vmem>>, vector<32x64xbf16>
    %156 = arith.truncf %154 : vector<8x32xf32> to vector<8x32xbf16>
    %cst_58 = arith.constant dense<0.000000e+00> : vector<8x64xf32>
    %157 = tpu.matmul %156, %155, %cst_58 {dimension_numbers = #tpu.dot_dimension_numbers<[1], [0], [0], [1], [0, 0, 1, 1], [], []>} : vector<8x32xbf16>, vector<32x64xbf16>, vector<8x64xf32> -> vector<8x64xf32>
    %c0_59 = arith.constant 0 : index
    %c0_60 = arith.constant 0 : index
    %158 = vector.load %arg10[%c0_59, %c0_60] : memref<1x64xf32, #tpu.memory_space<vmem>>, vector<1x64xf32>
    %159 = vector.broadcast %158 : vector<1x64xf32> to vector<8x64xf32>
    %160 = arith.addf %157, %159 : vector<8x64xf32>
    %cst_61 = arith.constant 5.000000e-01 : f32
    %161 = vector.broadcast %cst_61 : f32 to vector<8x64xf32>
    %162 = arith.mulf %161, %160 : vector<8x64xf32>
    %cst_62 = arith.constant 0.707106769 : f32
    %163 = vector.broadcast %cst_62 : f32 to vector<8x64xf32>
    %164 = arith.mulf %160, %163 : vector<8x64xf32>
    %165 = math.erf %164 : vector<8x64xf32>
    %cst_63 = arith.constant 1.000000e+00 : f32
    %166 = vector.broadcast %cst_63 : f32 to vector<8x64xf32>
    %167 = arith.addf %166, %165 : vector<8x64xf32>
    %168 = arith.mulf %162, %167 : vector<8x64xf32>
    %c0_64 = arith.constant 0 : index
    %c0_65 = arith.constant 0 : index
    %169 = vector.load %arg11[%c0_64, %c0_65] : memref<64x32xbf16, #tpu.memory_space<vmem>>, vector<64x32xbf16>
    %170 = arith.truncf %168 : vector<8x64xf32> to vector<8x64xbf16>
    %cst_66 = arith.constant dense<0.000000e+00> : vector<8x32xf32>
    %171 = tpu.matmul %170, %169, %cst_66 {dimension_numbers = #tpu.dot_dimension_numbers<[1], [0], [0], [1], [0, 0, 1, 1], [], []>} : vector<8x64xbf16>, vector<64x32xbf16>, vector<8x32xf32> -> vector<8x32xf32>
    %c0_67 = arith.constant 0 : index
    %c0_68 = arith.constant 0 : index
    %172 = vector.load %arg12[%c0_67, %c0_68] : memref<1x32xf32, #tpu.memory_space<vmem>>, vector<1x32xf32>
    %173 = vector.broadcast %172 : vector<1x32xf32> to vector<8x32xf32>
    %174 = arith.addf %171, %173 : vector<8x32xf32>
    %175 = arith.addf %174, %154 : vector<8x32xf32>
    %c0_69 = arith.constant 0 : index
    %c0_70 = arith.constant 0 : index
    %176 = vector.load %arg13[%c0_69, %c0_70] : memref<1x32xf32, #tpu.memory_space<vmem>>, vector<1x32xf32>
    %c0_71 = arith.constant 0 : index
    %c0_72 = arith.constant 0 : index
    %177 = vector.load %arg14[%c0_71, %c0_72] : memref<1x32xf32, #tpu.memory_space<vmem>>, vector<1x32xf32>
    %cst_73 = arith.constant dense<0.000000e+00> : vector<8xf32>
    %178 = vector.multi_reduction <add>, %175, %cst_73 [1] : vector<8x32xf32> to vector<8xf32>
    %179 = vector.shape_cast %178 : vector<8xf32> to vector<8x1xf32>
    %cst_74 = arith.constant 3.200000e+01 : f32
    %180 = vector.broadcast %cst_74 : f32 to vector<8x1xf32>
    %181 = arith.divf %179, %180 : vector<8x1xf32>
    %182 = vector.broadcast %181 : vector<8x1xf32> to vector<8x32xf32>
    %183 = arith.subf %175, %182 : vector<8x32xf32>
    %184 = arith.mulf %183, %183 : vector<8x32xf32>
    %cst_75 = arith.constant dense<0.000000e+00> : vector<8xf32>
    %185 = vector.multi_reduction <add>, %184, %cst_75 [1] : vector<8x32xf32> to vector<8xf32>
    %186 = vector.shape_cast %185 : vector<8xf32> to vector<8x1xf32>
    %cst_76 = arith.constant 3.200000e+01 : f32
    %187 = vector.broadcast %cst_76 : f32 to vector<8x1xf32>
    %188 = arith.divf %186, %187 : vector<8x1xf32>
    %189 = vector.broadcast %181 : vector<8x1xf32> to vector<8x32xf32>
    %190 = arith.subf %175, %189 : vector<8x32xf32>
    %cst_77 = arith.constant 9.99999996E-13 : f32
    %191 = vector.broadcast %cst_77 : f32 to vector<8x1xf32>
    %192 = arith.addf %188, %191 : vector<8x1xf32>
    %193 = math.rsqrt %192 : vector<8x1xf32>
    %194 = vector.broadcast %193 : vector<8x1xf32> to vector<8x32xf32>
    %195 = arith.mulf %190, %194 : vector<8x32xf32>
    %196 = vector.broadcast %176 : vector<1x32xf32> to vector<8x32xf32>
    %197 = arith.mulf %195, %196 : vector<8x32xf32>
    %198 = vector.broadcast %177 : vector<1x32xf32> to vector<8x32xf32>
    %199 = arith.addf %197, %198 : vector<8x32xf32>
    %c0_78 = arith.constant 0 : index
    %c0_79 = arith.constant 0 : index
    %c0_80 = arith.constant 0 : index
    %200 = vector.load %arg19[%c0_78, %c0_79, %c0_80] : memref<1x8x32xf32, #tpu.memory_space<vmem>>, vector<1x8x32xf32>
    %201 = vector.shape_cast %200 : vector<1x8x32xf32> to vector<8x32xf32>
    %202 = vector.shape_cast %199 : vector<8x32xf32> to vector<1x8x32xf32>
    tpu.vector_store %arg19[%c0_78, %c0_79, %c0_80], %202 {strides = array<i32>} : memref<1x8x32xf32, #tpu.memory_space<vmem>>, vector<1x8x32xf32>,
    %203 = vector.extract_strided_slice %199 {offsets = [0, 0], sizes = [1, 32], strides = [1, 1]} : vector<8x32xf32> to vector<1x32xf32>
    %c0_81 = arith.constant 0 : index
    %c0_82 = arith.constant 0 : index
    %204 = vector.load %arg15[%c0_81, %c0_82] : memref<32x32xbf16, #tpu.memory_space<vmem>>, vector<32x32xbf16>
    %205 = arith.truncf %203 : vector<1x32xf32> to vector<1x32xbf16>
    %cst_83 = arith.constant dense<0.000000e+00> : vector<1x32xf32>
    %206 = tpu.matmul %205, %204, %cst_83 {dimension_numbers = #tpu.dot_dimension_numbers<[1], [0], [0], [1], [0, 0, 1, 1], [], []>} : vector<1x32xbf16>, vector<32x32xbf16>, vector<1x32xf32> -> vector<1x32xf32>
    %c0_84 = arith.constant 0 : index
    %c0_85 = arith.constant 0 : index
    %207 = vector.load %arg16[%c0_84, %c0_85] : memref<1x32xf32, #tpu.memory_space<vmem>>, vector<1x32xf32>
    %208 = arith.addf %206, %207 : vector<1x32xf32>
    %209 = math.tanh %208 : vector<1x32xf32>
    %c0_86 = arith.constant 0 : index
    %c0_87 = arith.constant 0 : index
    %c0_88 = arith.constant 0 : index
    %210 = vector.load %arg20[%c0_86, %c0_87, %c0_88] : memref<1x1x32xf32, #tpu.memory_space<vmem>>, vector<1x1x32xf32>
    %211 = vector.shape_cast %210 : vector<1x1x32xf32> to vector<1x32xf32>
    %212 = vector.shape_cast %209 : vector<1x32xf32> to vector<1x1x32xf32>
    tpu.vector_store %arg20[%c0_86, %c0_87, %c0_88], %212 {strides = array<i32>} : memref<1x1x32xf32, #tpu.memory_space<vmem>>, vector<1x1x32xf32>,
    %c0_89 = arith.constant 0 : index
    %c0_90 = arith.constant 0 : index
    %213 = vector.load %arg17[%c0_89, %c0_90] : memref<32x128xbf16, #tpu.memory_space<vmem>>, vector<32x128xbf16>
    %214 = arith.truncf %209 : vector<1x32xf32> to vector<1x32xbf16>
    %cst_91 = arith.constant dense<0.000000e+00> : vector<1x128xf32>
    %215 = tpu.matmul %214, %213, %cst_91 {dimension_numbers = #tpu.dot_dimension_numbers<[1], [0], [0], [1], [0, 0, 1, 1], [], []>} : vector<1x32xbf16>, vector<32x128xbf16>, vector<1x128xf32> -> vector<1x128xf32>
    %c0_92 = arith.constant 0 : index
    %c0_93 = arith.constant 0 : index
    %216 = vector.load %arg18[%c0_92, %c0_93] : memref<1x128xf32, #tpu.memory_space<vmem>>, vector<1x128xf32>
    %217 = arith.addf %215, %216 : vector<1x128xf32>
    %c0_94 = arith.constant 0 : index
    %c0_95 = arith.constant 0 : index
    %c0_96 = arith.constant 0 : index
    %218 = vector.load %arg21[%c0_94, %c0_95, %c0_96] : memref<1x1x128xf32, #tpu.memory_space<vmem>>, vector<1x1x128xf32>
    %219 = vector.shape_cast %218 : vector<1x1x128xf32> to vector<1x128xf32>
    %220 = vector.shape_cast %217 : vector<1x128xf32> to vector<1x1x128xf32>
    tpu.vector_store %arg21[%c0_94, %c0_95, %c0_96], %220 {strides = array<i32>} : memref<1x1x128xf32, #tpu.memory_space<vmem>>, vector<1x1x128xf32>,
    return
  }
  func.func @transform_0(%arg0: i32) -> (i32, i32, i32) {
    %c0_i32 = arith.constant 0 : i32
    %c0_i32_0 = arith.constant 0 : i32
    %c0_i32_1 = arith.constant 0 : i32
    return %arg0, %c0_i32, %c0_i32_0 : i32, i32, i32
  }
  func.func @transform_1(%arg0: i32) -> (i32, i32, i32) {
    %c0_i32 = arith.constant 0 : i32
    %c0_i32_0 = arith.constant 0 : i32
    %c0_i32_1 = arith.constant 0 : i32
    return %arg0, %c0_i32, %c0_i32_0 : i32, i32, i32
  }
  func.func @transform_2(%arg0: i32) -> (i32, i32) {
    %c0_i32 = arith.constant 0 : i32
    %c0_i32_0 = arith.constant 0 : i32
    %c0_i32_1 = arith.constant 0 : i32
    return %c0_i32, %c0_i32_0 : i32, i32
  }
  func.func @transform_3(%arg0: i32) -> (i32, i32) {
    %c0_i32 = arith.constant 0 : i32
    %c0_i32_0 = arith.constant 0 : i32
    %c0_i32_1 = arith.constant 0 : i32
    return %c0_i32, %c0_i32_0 : i32, i32
  }
  func.func @transform_4(%arg0: i32) -> (i32, i32, i32) {
    %c0_i32 = arith.constant 0 : i32
    %c0_i32_0 = arith.constant 0 : i32
    %c0_i32_1 = arith.constant 0 : i32
    %c0_i32_2 = arith.constant 0 : i32
    return %c0_i32, %c0_i32_0, %c0_i32_1 : i32, i32, i32
  }
  func.func @transform_5(%arg0: i32) -> (i32, i32) {
    %c0_i32 = arith.constant 0 : i32
    %c0_i32_0 = arith.constant 0 : i32
    %c0_i32_1 = arith.constant 0 : i32
    return %c0_i32, %c0_i32_0 : i32, i32
  }
  func.func @transform_6(%arg0: i32) -> (i32, i32) {
    %c0_i32 = arith.constant 0 : i32
    %c0_i32_0 = arith.constant 0 : i32
    %c0_i32_1 = arith.constant 0 : i32
    return %c0_i32, %c0_i32_0 : i32, i32
  }
  func.func @transform_7(%arg0: i32) -> (i32, i32) {
    %c0_i32 = arith.constant 0 : i32
    %c0_i32_0 = arith.constant 0 : i32
    %c0_i32_1 = arith.constant 0 : i32
    return %c0_i32, %c0_i32_0 : i32, i32
  }
  func.func @transform_8(%arg0: i32) -> (i32, i32) {
    %c0_i32 = arith.constant 0 : i32
    %c0_i32_0 = arith.constant 0 : i32
    %c0_i32_1 = arith.constant 0 : i32
    return %c0_i32, %c0_i32_0 : i32, i32
  }
  func.func @transform_9(%arg0: i32) -> (i32, i32) {
    %c0_i32 = arith.constant 0 : i32
    %c0_i32_0 = arith.constant 0 : i32
    %c0_i32_1 = arith.constant 0 : i32
    return %c0_i32, %c0_i32_0 : i32, i32
  }
  func.func @transform_10(%arg0: i32) -> (i32, i32) {
    %c0_i32 = arith.constant 0 : i32
    %c0_i32_0 = arith.constant 0 : i32
    %c0_i32_1 = arith.constant 0 : i32
    return %c0_i32, %c0_i32_0 : i32, i32
  }
  func.func @transform_11(%arg0: i32) -> (i32, i32) {
    %c0_i32 = arith.constant 0 : i32
    %c0_i32_0 = arith.constant 0 : i32
    %c0_i32_1 = arith.constant 0 : i32
    return %c0_i32, %c0_i32_0 : i32, i32
  }
  func.func @transform_12(%arg0: i32) -> (i32, i32) {
    %c0_i32 = arith.constant 0 : i32
    %c0_i32_0 = arith.constant 0 : i32
    %c0_i32_1 = arith.constant 0 : i32
    return %c0_i32, %c0_i32_0 : i32, i32
  }
  func.func @transform_13(%arg0: i32) -> (i32, i32) {
    %c0_i32 = arith.constant 0 : i32
    %c0_i32_0 = arith.constant 0 : i32
    %c0_i32_1 = arith.constant 0 : i32
    return %c0_i32, %c0_i32_0 : i32, i32
  }
  func.func @transform_14(%arg0: i32) -> (i32, i32) {
    %c0_i32 = arith.constant 0 : i32
    %c0_i32_0 = arith.constant 0 : i32
    %c0_i32_1 = arith.constant 0 : i32
    return %c0_i32, %c0_i32_0 : i32, i32
  }
  func.func @transform_15(%arg0: i32) -> (i32, i32) {
    %c0_i32 = arith.constant 0 : i32
    %c0_i32_0 = arith.constant 0 : i32
    %c0_i32_1 = arith.constant 0 : i32
    return %c0_i32, %c0_i32_0 : i32, i32
  }
  func.func @transform_16(%arg0: i32) -> (i32, i32) {
    %c0_i32 = arith.constant 0 : i32
    %c0_i32_0 = arith.constant 0 : i32
    %c0_i32_1 = arith.constant 0 : i32
    return %c0_i32, %c0_i32_0 : i32, i32
  }
  func.func @transform_17(%arg0: i32) -> (i32, i32) {
    %c0_i32 = arith.constant 0 : i32
    %c0_i32_0 = arith.constant 0 : i32
    %c0_i32_1 = arith.constant 0 : i32
    return %c0_i32, %c0_i32_0 : i32, i32
  }
  func.func @transform_18(%arg0: i32) -> (i32, i32, i32) {
    %c0_i32 = arith.constant 0 : i32
    %c0_i32_0 = arith.constant 0 : i32
    %c0_i32_1 = arith.constant 0 : i32
    return %arg0, %c0_i32, %c0_i32_0 : i32, i32, i32
  }
  func.func @transform_19(%arg0: i32) -> (i32, i32, i32) {
    %c0_i32 = arith.constant 0 : i32
    %c0_i32_0 = arith.constant 0 : i32
    %c0_i32_1 = arith.constant 0 : i32
    return %arg0, %c0_i32, %c0_i32_0 : i32, i32, i32
  }
  func.func @transform_20(%arg0: i32) -> (i32, i32, i32) {
    %c0_i32 = arith.constant 0 : i32
    %c0_i32_0 = arith.constant 0 : i32
    %c0_i32_1 = arith.constant 0 : i32
    return %arg0, %c0_i32, %c0_i32_0 : i32, i32, i32
  }
}

</mosaic_0001>

<llo_original>
// kernel: tpu_custom_call.1
$region0: #{tpu_custom_call.1}
  #allocation0 [shape = 'u32[]', space=smem, size = 0x4, offset = 0x4, fixed_abs, tag = 'smem constant byte address 0x4 - core index']
  #allocation1 [shape = 'u32[144,128]{1,0:T(1,128)}', space=vmem, size = 0x12000, scoped, tag = 'internal scratch']
  %s0 = inlined_call_operand.hbm [shape: f32[8,128], index: 0, kind: input, shape index: {}]
  %s1 = inlined_call_operand.hbm [shape: f32[8,128], index: 1, kind: output, shape index: {}]
  %s2 = sld [smem:[#allocation0]]
  $region41: #{tpu_custom_call.1} parent=0
    _
  %s4 = ssub.s32 1, %s2
  %s5 = scalar_select 0, %s4, %s2
  $region1: #{tpu_custom_call.1} parent=0
    #allocation2 [shape = 'u8[4096]{0}', space=vmem, size = 0x1000, scoped, tag = 'input window, operand 0, single buffered']
    #allocation3 [shape = 's32[2]{0}', space=sflag, size = 0x8, scoped, tag = 'scoped memory for tpu_custom_call.1']
    #allocation4 [shape = 's32[2]{0}', space=sflag, size = 0x8, scoped, tag = 'scoped memory for tpu_custom_call.1']
    #allocation5 [shape = 'u8[4096]{0}', space=vmem, size = 0x1000, scoped, tag = 'output window, operand 0, single buffered']
    %6 = vsyncpa [#allocation3], 0
    %7 = vsyncpa [#allocation4], 0
    loop: start=0, step=1, limit=4
    $region2: #{tpu_custom_call.1} parent=1 // loop_pre_header
      _
    $region3: #{tpu_custom_call.1} parent=1 // loop_header
      %s9 = sphi 0, %s13
      %p10 = scmp.ge.s32.totalorder %s9, 4
      %s17 = sphi 0, %s17
      %s19 = sphi 0, %s17
      %s20 = sphi 0, %s19
      %s34 = sphi 0, %s20
      %s38 = sphi 0, %s38
      %s40 = sphi 0, %s38
      %s41 = sphi 0, %s40
      %s55 = sphi 0, %s41
    $region4: #{tpu_custom_call.1} parent=1 // loop_header_branch
      %12 = sbr.rel (%p10) target = $region8
    $region5: #{tpu_custom_call.1} parent=1 // loop_body
      %s14 = ssub.s32 %s9, 1
      %s15 = ssub.s32 %s9, 2
      %s16 = sadd.s32 %s9, 1
      %s18 = sadd.s32 %s17, 1
      %p21 = scmp.eq.s32.totalorder %s9, 1
      %p22 = scmp.ne.s32.totalorder %s17, %s19
      %p23 = scmp.eq.s32.totalorder %s9, 0
      %p24 = por %p22, %p23
      %p25 = scmp.ne.s32.totalorder %s17, %s19
      %p26 = scmp.eq.s32.totalorder %s14, 1
      %p27 = por %p25, %p26
      %p28 = scmp.ne.s32.totalorder %s19, %s20
      %p29 = scmp.eq.s32.totalorder %s14, 0
      %p30 = por %p28, %p29
      %p31 = scmp.ne.s32.totalorder %s19, %s20
      %p32 = scmp.eq.s32.totalorder %s15, 1
      %p33 = por %p31, %p32
      %p35 = scmp.ne.s32.totalorder %s20, %s34
      %p36 = scmp.eq.s32.totalorder %s15, 0
      %p37 = por %p35, %p36
      %s39 = sadd.s32 %s38, 1
      %p42 = scmp.eq.s32.totalorder %s9, 1
      %p43 = scmp.ne.s32.totalorder %s38, %s40
      %p44 = scmp.eq.s32.totalorder %s9, 0
      %p45 = por %p43, %p44
      %p46 = scmp.ne.s32.totalorder %s38, %s40
      %p47 = scmp.eq.s32.totalorder %s14, 1
      %p48 = por %p46, %p47
      %p49 = scmp.ne.s32.totalorder %s40, %s41
      %p50 = scmp.eq.s32.totalorder %s14, 0
      %p51 = por %p49, %p50
      %p52 = scmp.ne.s32.totalorder %s40, %s41
      %p53 = scmp.eq.s32.totalorder %s15, 1
      %p54 = por %p52, %p53
      %p56 = scmp.ne.s32.totalorder %s41, %s55
      %p57 = scmp.eq.s32.totalorder %s15, 0
      %p58 = por %p56, %p57
      %p59 = scmp.le.s32.totalorder 1, %s9
      %p60 = scmp.lt.s32.totalorder %s9, 3
      %p61 = pnand %p59, %p60
      %p62 = pneg %p61
      // Predicated region
      $region9: #{tpu_custom_call.1} parent=5 // pred_check
        _
      $region10: #{tpu_custom_call.1} parent=5 // pred_check_branch
        %64 = sbr.rel (%p61) target = $region12
      $region11: #{tpu_custom_call.1} parent=5 // pred_region
        %s65 = ssub.s32 %s9, 1
        // Predicated region
        $region13: #{tpu_custom_call.1} parent=11 // pred_check
          %p66 = pneg %p30
        $region14: #{tpu_custom_call.1} parent=11 // pred_check_branch
          %68 = sbr.rel (%p66) target = $region16
        $region15: #{tpu_custom_call.1} parent=11 // pred_region
          %s70 = ssub.s32 128, 128
          %71 = vsyncadd [#allocation3], %s70
          %s73 = sshll.u32 [#allocation2], 4
          %s74 = int_to_ptr.vmem [resolvable:$true] %s73
          %76 = dma.hbm_to_vmem [thread:$0]  %s0, 128, %s74, [#allocation3]
        $region16: #{tpu_custom_call.1} parent=11 // pred_fallthru
          _
      $region12: #{tpu_custom_call.1} parent=5 // pred_fallthru
        _
      %p77 = scmp.lt.s32.totalorder %s9, 2
      // Predicated region
      $region17: #{tpu_custom_call.1} parent=5 // pred_check
        %p78 = pneg %p77
      $region18: #{tpu_custom_call.1} parent=5 // pred_check_branch
        %80 = sbr.rel (%p78) target = $region20
      $region19: #{tpu_custom_call.1} parent=5 // pred_region
        _
      $region20: #{tpu_custom_call.1} parent=5 // pred_fallthru
        _
      %p81 = scmp.le.s32.totalorder 1, %s9
      %p82 = scmp.lt.s32.totalorder %s9, 3
      %p83 = pnand %p81, %p82
      %p84 = pneg %p83
      // Predicated region
      $region21: #{tpu_custom_call.1} parent=5 // pred_check
        _
      $region22: #{tpu_custom_call.1} parent=5 // pred_check_branch
        %86 = sbr.rel (%p83) target = $region24
      $region23: #{tpu_custom_call.1} parent=5 // pred_region
        %s87 = ssub.s32 %s9, 1
        // Predicated region
        $region25: #{tpu_custom_call.1} parent=23 // pred_check
          %p88 = pneg %p30
        $region26: #{tpu_custom_call.1} parent=23 // pred_check_branch
          %90 = sbr.rel (%p88) target = $region28
        $region27: #{tpu_custom_call.1} parent=23 // pred_region
          %91 = dma.done [#allocation3], 128
        $region28: #{tpu_custom_call.1} parent=23 // pred_fallthru
          _
        %p92 = pneg %p30
        %p93 = pneg %p27
        %p94 = pneg %p51
        %p95 = pneg %p48
        %v96 = vld [vmem:[#allocation2] sm:$0xff]
        %97 = vst [vmem:[#allocation5] sm:$0xff] %v96
        // Predicated region
        $region29: #{tpu_custom_call.1} parent=23 // pred_check
          %p98 = pneg %p48
        $region30: #{tpu_custom_call.1} parent=23 // pred_check_branch
          %100 = sbr.rel (%p98) target = $region32
        $region31: #{tpu_custom_call.1} parent=23 // pred_region
          %s102 = ssub.s32 128, 128
          %103 = vsyncadd [#allocation4], %s102
          %s105 = sshll.u32 [#allocation5], 4
          %s106 = int_to_ptr.vmem [resolvable:$true] %s105
          %108 = dma.vmem_to_hbm [thread:$0]  %s106, 128, %s1, [#allocation4]
        $region32: #{tpu_custom_call.1} parent=23 // pred_fallthru
          _
        // Predicated region
        $region33: #{tpu_custom_call.1} parent=23 // pred_check
          %p109 = pneg %p48
        $region34: #{tpu_custom_call.1} parent=23 // pred_check_branch
          %111 = sbr.rel (%p109) target = $region36
        $region35: #{tpu_custom_call.1} parent=23 // pred_region
          %112 = dma.done [#allocation4], 128
        $region36: #{tpu_custom_call.1} parent=23 // pred_fallthru
          _
      $region24: #{tpu_custom_call.1} parent=5 // pred_fallthru
        _
      %p113 = scmp.le.s32.totalorder 2, %s9
      // Predicated region
      $region37: #{tpu_custom_call.1} parent=5 // pred_check
        %p114 = pneg %p113
      $region38: #{tpu_custom_call.1} parent=5 // pred_check_branch
        %116 = sbr.rel (%p114) target = $region40
      $region39: #{tpu_custom_call.1} parent=5 // pred_region
        %s117 = ssub.s32 %s9, 2
      $region40: #{tpu_custom_call.1} parent=5 // pred_fallthru
        _
    $region6: #{tpu_custom_call.1} parent=1 // loop_footer
      %s13 = sadd.s32 1, %s9
    $region7: #{tpu_custom_call.1} parent=1 // loop_footer_branch
      %8 = sbr.rel target = $region3
    $region8: #{tpu_custom_call.1} parent=1 // loop_exit
      _
    %118 = vsyncpa [#allocation3], 1
    %s119 = scalar_lea.sflag [#allocation3], 1
    %120 = vsyncpa %s119, 1
    %121 = vsyncpa [#allocation4], 1
    %s122 = scalar_lea.sflag [#allocation4], 1
    %123 = vsyncpa %s122, 1

// kernel: _lambda_.2
$region0: #{_lambda_.2}
  #allocation0 [shape = 'u32[]', space=smem, size = 0x4, offset = 0x4, fixed_abs, tag = 'smem constant byte address 0x4 - core index']
  #allocation1 [shape = 'u32[144,128]{1,0:T(1,128)}', space=vmem, size = 0x12000, scoped, tag = 'internal scratch']
  %s0 = inlined_call_operand.vmem [shape: f32[2,8,32], index: 0, kind: input, shape index: {}]
  %s1 = inlined_call_operand.vmem [shape: f32[2,1,8], index: 1, kind: input, shape index: {}]
  %s2 = inlined_call_operand.vmem [shape: f32[1,32], index: 2, kind: input, shape index: {}]
  %s3 = inlined_call_operand.vmem [shape: f32[1,32], index: 3, kind: input, shape index: {}]
  %s4 = inlined_call_operand.vmem [shape: bf16[32,96], index: 4, kind: input, shape index: {}]
  %s5 = inlined_call_operand.vmem [shape: f32[1,96], index: 5, kind: input, shape index: {}]
  %s6 = inlined_call_operand.vmem [shape: bf16[4,8,32], index: 6, kind: input, shape index: {}]
  %s7 = inlined_call_operand.vmem [shape: f32[1,32], index: 7, kind: input, shape index: {}]
  %s8 = inlined_call_operand.vmem [shape: f32[1,32], index: 8, kind: input, shape index: {}]
  %s9 = inlined_call_operand.vmem [shape: f32[1,32], index: 9, kind: input, shape index: {}]
  %s10 = inlined_call_operand.vmem [shape: bf16[32,64], index: 10, kind: input, shape index: {}]
  %s11 = inlined_call_operand.vmem [shape: f32[1,64], index: 11, kind: input, shape index: {}]
  %s12 = inlined_call_operand.vmem [shape: bf16[64,32], index: 12, kind: input, shape index: {}]
  %s13 = inlined_call_operand.vmem [shape: f32[1,32], index: 13, kind: input, shape index: {}]
  %s14 = inlined_call_operand.vmem [shape: f32[1,32], index: 14, kind: input, shape index: {}]
  %s15 = inlined_call_operand.vmem [shape: f32[1,32], index: 15, kind: input, shape index: {}]
  %s16 = inlined_call_operand.hbm [shape: f32[2,8,32], index: 16, kind: output, shape index: {0}]
  %s17 = inlined_call_operand.vmem [shape: f32[2,8,32], index: 17, kind: output, shape index: {1}]
  %18 = xla_tuple %s16, %s17
  %s19 = sld [smem:[#allocation0]]
  $region105: #{_lambda_.2} parent=0
    _
  %s21 = ssub.s32 1, %s19
  %s22 = scalar_select 0, %s21, %s19
  $region1: #{_lambda_.2} parent=0
    #allocation2 [shape = 'u8[8192]{0}', space=vmem, size = 0x2000, scoped, tag = 'output window, operand 0']
    #allocation3 [shape = 's32[2]{0}', space=sflag, size = 0x8, scoped, tag = 'scoped memory for _lambda_.2']
    %23 = vsyncpa [#allocation3], 0
    %s24 = scalar_lea.sflag [#allocation3], 1
    %25 = vsyncpa %s24, 0
    loop: start=0, step=1, limit=4
    $region2: #{_lambda_.2} parent=1 // loop_pre_header
      _
    $region3: #{_lambda_.2} parent=1 // loop_header
      %s27 = sphi 0, %s31
      %p28 = scmp.ge.s32.totalorder %s27, 4
      %s37 = sphi 0, %s39
      %s40 = sphi 0, %s37
      %s41 = sphi 0, %s40
      %s57 = sphi 0, %s41
      %s63 = sphi 0, %s65
      %s66 = sphi 0, %s63
      %s67 = sphi 0, %s66
      %s83 = sphi 0, %s67
      %s87 = sphi 0, %s87
      %s89 = sphi 0, %s87
      %s90 = sphi 0, %s89
      %s104 = sphi 0, %s90
      %s108 = sphi 0, %s108
      %s110 = sphi 0, %s108
      %s111 = sphi 0, %s110
      %s125 = sphi 0, %s111
      %s129 = sphi 0, %s129
      %s131 = sphi 0, %s129
      %s132 = sphi 0, %s131
      %s146 = sphi 0, %s132
      %s150 = sphi 0, %s150
      %s152 = sphi 0, %s150
      %s153 = sphi 0, %s152
      %s167 = sphi 0, %s153
      %s171 = sphi 0, %s171
      %s173 = sphi 0, %s171
      %s174 = sphi 0, %s173
      %s188 = sphi 0, %s174
      %s192 = sphi 0, %s192
      %s194 = sphi 0, %s192
      %s195 = sphi 0, %s194
      %s209 = sphi 0, %s195
      %s213 = sphi 0, %s213
      %s215 = sphi 0, %s213
      %s216 = sphi 0, %s215
      %s230 = sphi 0, %s216
      %s234 = sphi 0, %s234
      %s236 = sphi 0, %s234
      %s237 = sphi 0, %s236
      %s251 = sphi 0, %s237
      %s255 = sphi 0, %s255
      %s257 = sphi 0, %s255
      %s258 = sphi 0, %s257
      %s272 = sphi 0, %s258
      %s276 = sphi 0, %s276
      %s278 = sphi 0, %s276
      %s279 = sphi 0, %s278
      %s293 = sphi 0, %s279
      %s297 = sphi 0, %s297
      %s299 = sphi 0, %s297
      %s300 = sphi 0, %s299
      %s314 = sphi 0, %s300
      %s318 = sphi 0, %s318
      %s320 = sphi 0, %s318
      %s321 = sphi 0, %s320
      %s335 = sphi 0, %s321
      %s339 = sphi 0, %s339
      %s341 = sphi 0, %s339
      %s342 = sphi 0, %s341
      %s356 = sphi 0, %s342
      %s360 = sphi 0, %s360
      %s362 = sphi 0, %s360
      %s363 = sphi 0, %s362
      %s377 = sphi 0, %s363
      %s383 = sphi 0, %s385
      %s386 = sphi 0, %s383
      %s387 = sphi 0, %s386
      %s403 = sphi 0, %s387
      %s409 = sphi 0, %s411
      %s412 = sphi 0, %s409
      %s413 = sphi 0, %s412
      %s429 = sphi 0, %s413
    $region4: #{_lambda_.2} parent=1 // loop_header_branch
      %30 = sbr.rel (%p28) target = $region8
    $region5: #{_lambda_.2} parent=1 // loop_body
      %s32 = ssub.s32 %s27, 1
      %s33 = ssub.s32 %s27, 2
      %s34 = sadd.s32 %s27, 1
      %s35 = ssub.s32 %s27, %s34
      %p36 = scmp.eq.s32.totalorder %s35, 0
      %s38 = sadd.s32 %s37, 1
      %s39 = scalar_select %p36, %s37, %s38
      %p42 = pneg %p36
      %p43 = scmp.eq.s32.totalorder %s27, 1
      %p44 = por %p42, %p43
      %p45 = scmp.ne.s32.totalorder %s37, %s40
      %p46 = scmp.eq.s32.totalorder %s27, 0
      %p47 = por %p45, %p46
      %p48 = scmp.ne.s32.totalorder %s37, %s40
      %p49 = scmp.eq.s32.totalorder %s32, 1
      %p50 = por %p48, %p49
      %p51 = scmp.ne.s32.totalorder %s40, %s41
      %p52 = scmp.eq.s32.totalorder %s32, 0
      %p53 = por %p51, %p52
      %p54 = scmp.ne.s32.totalorder %s40, %s41
      %p55 = scmp.eq.s32.totalorder %s33, 1
      %p56 = por %p54, %p55
      %p58 = scmp.ne.s32.totalorder %s41, %s57
      %p59 = scmp.eq.s32.totalorder %s33, 0
      %p60 = por %p58, %p59
      %s61 = ssub.s32 %s27, %s34
      %p62 = scmp.eq.s32.totalorder %s61, 0
      %s64 = sadd.s32 %s63, 1
      %s65 = scalar_select %p62, %s63, %s64
      %p68 = pneg %p62
      %p69 = scmp.eq.s32.totalorder %s27, 1
      %p70 = por %p68, %p69
      %p71 = scmp.ne.s32.totalorder %s63, %s66
      %p72 = scmp.eq.s32.totalorder %s27, 0
      %p73 = por %p71, %p72
      %p74 = scmp.ne.s32.totalorder %s63, %s66
      %p75 = scmp.eq.s32.totalorder %s32, 1
      %p76 = por %p74, %p75
      %p77 = scmp.ne.s32.totalorder %s66, %s67
      %p78 = scmp.eq.s32.totalorder %s32, 0
      %p79 = por %p77, %p78
      %p80 = scmp.ne.s32.totalorder %s66, %s67
      %p81 = scmp.eq.s32.totalorder %s33, 1
      %p82 = por %p80, %p81
      %p84 = scmp.ne.s32.totalorder %s67, %s83
      %p85 = scmp.eq.s32.totalorder %s33, 0
      %p86 = por %p84, %p85
      %s88 = sadd.s32 %s87, 1
      %p91 = scmp.eq.s32.totalorder %s27, 1
      %p92 = scmp.ne.s32.totalorder %s87, %s89
      %p93 = scmp.eq.s32.totalorder %s27, 0
      %p94 = por %p92, %p93
      %p95 = scmp.ne.s32.totalorder %s87, %s89
      %p96 = scmp.eq.s32.totalorder %s32, 1
      %p97 = por %p95, %p96
      %p98 = scmp.ne.s32.totalorder %s89, %s90
      %p99 = scmp.eq.s32.totalorder %s32, 0
      %p100 = por %p98, %p99
      %p101 = scmp.ne.s32.totalorder %s89, %s90
      %p102 = scmp.eq.s32.totalorder %s33, 1
      %p103 = por %p101, %p102
      %p105 = scmp.ne.s32.totalorder %s90, %s104
      %p106 = scmp.eq.s32.totalorder %s33, 0
      %p107 = por %p105, %p106
      %s109 = sadd.s32 %s108, 1
      %p112 = scmp.eq.s32.totalorder %s27, 1
      %p113 = scmp.ne.s32.totalorder %s108, %s110
      %p114 = scmp.eq.s32.totalorder %s27, 0
      %p115 = por %p113, %p114
      %p116 = scmp.ne.s32.totalorder %s108, %s110
      %p117 = scmp.eq.s32.totalorder %s32, 1
      %p118 = por %p116, %p117
      %p119 = scmp.ne.s32.totalorder %s110, %s111
      %p120 = scmp.eq.s32.totalorder %s32, 0
      %p121 = por %p119, %p120
      %p122 = scmp.ne.s32.totalorder %s110, %s111
      %p123 = scmp.eq.s32.totalorder %s33, 1
      %p124 = por %p122, %p123
      %p126 = scmp.ne.s32.totalorder %s111, %s125
      %p127 = scmp.eq.s32.totalorder %s33, 0
      %p128 = por %p126, %p127
      %s130 = sadd.s32 %s129, 1
      %p133 = scmp.eq.s32.totalorder %s27, 1
      %p134 = scmp.ne.s32.totalorder %s129, %s131
      %p135 = scmp.eq.s32.totalorder %s27, 0
      %p136 = por %p134, %p135
      %p137 = scmp.ne.s32.totalorder %s129, %s131
      %p138 = scmp.eq.s32.totalorder %s32, 1
      %p139 = por %p137, %p138
      %p140 = scmp.ne.s32.totalorder %s131, %s132
      %p141 = scmp.eq.s32.totalorder %s32, 0
      %p142 = por %p140, %p141
      %p143 = scmp.ne.s32.totalorder %s131, %s132
      %p144 = scmp.eq.s32.totalorder %s33, 1
      %p145 = por %p143, %p144
      %p147 = scmp.ne.s32.totalorder %s132, %s146
      %p148 = scmp.eq.s32.totalorder %s33, 0
      %p149 = por %p147, %p148
      %s151 = sadd.s32 %s150, 1
      %p154 = scmp.eq.s32.totalorder %s27, 1
      %p155 = scmp.ne.s32.totalorder %s150, %s152
      %p156 = scmp.eq.s32.totalorder %s27, 0
      %p157 = por %p155, %p156
      %p158 = scmp.ne.s32.totalorder %s150, %s152
      %p159 = scmp.eq.s32.totalorder %s32, 1
      %p160 = por %p158, %p159
      %p161 = scmp.ne.s32.totalorder %s152, %s153
      %p162 = scmp.eq.s32.totalorder %s32, 0
      %p163 = por %p161, %p162
      %p164 = scmp.ne.s32.totalorder %s152, %s153
      %p165 = scmp.eq.s32.totalorder %s33, 1
      %p166 = por %p164, %p165
      %p168 = scmp.ne.s32.totalorder %s153, %s167
      %p169 = scmp.eq.s32.totalorder %s33, 0
      %p170 = por %p168, %p169
      %s172 = sadd.s32 %s171, 1
      %p175 = scmp.eq.s32.totalorder %s27, 1
      %p176 = scmp.ne.s32.totalorder %s171, %s173
      %p177 = scmp.eq.s32.totalorder %s27, 0
      %p178 = por %p176, %p177
      %p179 = scmp.ne.s32.totalorder %s171, %s173
      %p180 = scmp.eq.s32.totalorder %s32, 1
      %p181 = por %p179, %p180
      %p182 = scmp.ne.s32.totalorder %s173, %s174
      %p183 = scmp.eq.s32.totalorder %s32, 0
      %p184 = por %p182, %p183
      %p185 = scmp.ne.s32.totalorder %s173, %s174
      %p186 = scmp.eq.s32.totalorder %s33, 1
      %p187 = por %p185, %p186
      %p189 = scmp.ne.s32.totalorder %s174, %s188
      %p190 = scmp.eq.s32.totalorder %s33, 0
      %p191 = por %p189, %p190
      %s193 = sadd.s32 %s192, 1
      %p196 = scmp.eq.s32.totalorder %s27, 1
      %p197 = scmp.ne.s32.totalorder %s192, %s194
      %p198 = scmp.eq.s32.totalorder %s27, 0
      %p199 = por %p197, %p198
      %p200 = scmp.ne.s32.totalorder %s192, %s194
      %p201 = scmp.eq.s32.totalorder %s32, 1
      %p202 = por %p200, %p201
      %p203 = scmp.ne.s32.totalorder %s194, %s195
      %p204 = scmp.eq.s32.totalorder %s32, 0
      %p205 = por %p203, %p204
      %p206 = scmp.ne.s32.totalorder %s194, %s195
      %p207 = scmp.eq.s32.totalorder %s33, 1
      %p208 = por %p206, %p207
      %p210 = scmp.ne.s32.totalorder %s195, %s209
      %p211 = scmp.eq.s32.totalorder %s33, 0
      %p212 = por %p210, %p211
      %s214 = sadd.s32 %s213, 1
      %p217 = scmp.eq.s32.totalorder %s27, 1
      %p218 = scmp.ne.s32.totalorder %s213, %s215
      %p219 = scmp.eq.s32.totalorder %s27, 0
      %p220 = por %p218, %p219
      %p221 = scmp.ne.s32.totalorder %s213, %s215
      %p222 = scmp.eq.s32.totalorder %s32, 1
      %p223 = por %p221, %p222
      %p224 = scmp.ne.s32.totalorder %s215, %s216
      %p225 = scmp.eq.s32.totalorder %s32, 0
      %p226 = por %p224, %p225
      %p227 = scmp.ne.s32.totalorder %s215, %s216
      %p228 = scmp.eq.s32.totalorder %s33, 1
      %p229 = por %p227, %p228
      %p231 = scmp.ne.s32.totalorder %s216, %s230
      %p232 = scmp.eq.s32.totalorder %s33, 0
      %p233 = por %p231, %p232
      %s235 = sadd.s32 %s234, 1
      %p238 = scmp.eq.s32.totalorder %s27, 1
      %p239 = scmp.ne.s32.totalorder %s234, %s236
      %p240 = scmp.eq.s32.totalorder %s27, 0
      %p241 = por %p239, %p240
      %p242 = scmp.ne.s32.totalorder %s234, %s236
      %p243 = scmp.eq.s32.totalorder %s32, 1
      %p244 = por %p242, %p243
      %p245 = scmp.ne.s32.totalorder %s236, %s237
      %p246 = scmp.eq.s32.totalorder %s32, 0
      %p247 = por %p245, %p246
      %p248 = scmp.ne.s32.totalorder %s236, %s237
      %p249 = scmp.eq.s32.totalorder %s33, 1
      %p250 = por %p248, %p249
      %p252 = scmp.ne.s32.totalorder %s237, %s251
      %p253 = scmp.eq.s32.totalorder %s33, 0
      %p254 = por %p252, %p253
      %s256 = sadd.s32 %s255, 1
      %p259 = scmp.eq.s32.totalorder %s27, 1
      %p260 = scmp.ne.s32.totalorder %s255, %s257
      %p261 = scmp.eq.s32.totalorder %s27, 0
      %p262 = por %p260, %p261
      %p263 = scmp.ne.s32.totalorder %s255, %s257
      %p264 = scmp.eq.s32.totalorder %s32, 1
      %p265 = por %p263, %p264
      %p266 = scmp.ne.s32.totalorder %s257, %s258
      %p267 = scmp.eq.s32.totalorder %s32, 0
      %p268 = por %p266, %p267
      %p269 = scmp.ne.s32.totalorder %s257, %s258
      %p270 = scmp.eq.s32.totalorder %s33, 1
      %p271 = por %p269, %p270
      %p273 = scmp.ne.s32.totalorder %s258, %s272
      %p274 = scmp.eq.s32.totalorder %s33, 0
      %p275 = por %p273, %p274
      %s277 = sadd.s32 %s276, 1
      %p280 = scmp.eq.s32.totalorder %s27, 1
      %p281 = scmp.ne.s32.totalorder %s276, %s278
      %p282 = scmp.eq.s32.totalorder %s27, 0
      %p283 = por %p281, %p282
      %p284 = scmp.ne.s32.totalorder %s276, %s278
      %p285 = scmp.eq.s32.totalorder %s32, 1
      %p286 = por %p284, %p285
      %p287 = scmp.ne.s32.totalorder %s278, %s279
      %p288 = scmp.eq.s32.totalorder %s32, 0
      %p289 = por %p287, %p288
      %p290 = scmp.ne.s32.totalorder %s278, %s279
      %p291 = scmp.eq.s32.totalorder %s33, 1
      %p292 = por %p290, %p291
      %p294 = scmp.ne.s32.totalorder %s279, %s293
      %p295 = scmp.eq.s32.totalorder %s33, 0
      %p296 = por %p294, %p295
      %s298 = sadd.s32 %s297, 1
      %p301 = scmp.eq.s32.totalorder %s27, 1
      %p302 = scmp.ne.s32.totalorder %s297, %s299
      %p303 = scmp.eq.s32.totalorder %s27, 0
      %p304 = por %p302, %p303
      %p305 = scmp.ne.s32.totalorder %s297, %s299
      %p306 = scmp.eq.s32.totalorder %s32, 1
      %p307 = por %p305, %p306
      %p308 = scmp.ne.s32.totalorder %s299, %s300
      %p309 = scmp.eq.s32.totalorder %s32, 0
      %p310 = por %p308, %p309
      %p311 = scmp.ne.s32.totalorder %s299, %s300
      %p312 = scmp.eq.s32.totalorder %s33, 1
      %p313 = por %p311, %p312
      %p315 = scmp.ne.s32.totalorder %s300, %s314
      %p316 = scmp.eq.s32.totalorder %s33, 0
      %p317 = por %p315, %p316
      %s319 = sadd.s32 %s318, 1
      %p322 = scmp.eq.s32.totalorder %s27, 1
      %p323 = scmp.ne.s32.totalorder %s318, %s320
      %p324 = scmp.eq.s32.totalorder %s27, 0
      %p325 = por %p323, %p324
      %p326 = scmp.ne.s32.totalorder %s318, %s320
      %p327 = scmp.eq.s32.totalorder %s32, 1
      %p328 = por %p326, %p327
      %p329 = scmp.ne.s32.totalorder %s320, %s321
      %p330 = scmp.eq.s32.totalorder %s32, 0
      %p331 = por %p329, %p330
      %p332 = scmp.ne.s32.totalorder %s320, %s321
      %p333 = scmp.eq.s32.totalorder %s33, 1
      %p334 = por %p332, %p333
      %p336 = scmp.ne.s32.totalorder %s321, %s335
      %p337 = scmp.eq.s32.totalorder %s33, 0
      %p338 = por %p336, %p337
      %s340 = sadd.s32 %s339, 1
      %p343 = scmp.eq.s32.totalorder %s27, 1
      %p344 = scmp.ne.s32.totalorder %s339, %s341
      %p345 = scmp.eq.s32.totalorder %s27, 0
      %p346 = por %p344, %p345
      %p347 = scmp.ne.s32.totalorder %s339, %s341
      %p348 = scmp.eq.s32.totalorder %s32, 1
      %p349 = por %p347, %p348
      %p350 = scmp.ne.s32.totalorder %s341, %s342
      %p351 = scmp.eq.s32.totalorder %s32, 0
      %p352 = por %p350, %p351
      %p353 = scmp.ne.s32.totalorder %s341, %s342
      %p354 = scmp.eq.s32.totalorder %s33, 1
      %p355 = por %p353, %p354
      %p357 = scmp.ne.s32.totalorder %s342, %s356
      %p358 = scmp.eq.s32.totalorder %s33, 0
      %p359 = por %p357, %p358
      %s361 = sadd.s32 %s360, 1
      %p364 = scmp.eq.s32.totalorder %s27, 1
      %p365 = scmp.ne.s32.totalorder %s360, %s362
      %p366 = scmp.eq.s32.totalorder %s27, 0
      %p367 = por %p365, %p366
      %p368 = scmp.ne.s32.totalorder %s360, %s362
      %p369 = scmp.eq.s32.totalorder %s32, 1
      %p370 = por %p368, %p369
      %p371 = scmp.ne.s32.totalorder %s362, %s363
      %p372 = scmp.eq.s32.totalorder %s32, 0
      %p373 = por %p371, %p372
      %p374 = scmp.ne.s32.totalorder %s362, %s363
      %p375 = scmp.eq.s32.totalorder %s33, 1
      %p376 = por %p374, %p375
      %p378 = scmp.ne.s32.totalorder %s363, %s377
      %p379 = scmp.eq.s32.totalorder %s33, 0
      %p380 = por %p378, %p379
      %s381 = ssub.s32 %s27, %s34
      %p382 = scmp.eq.s32.totalorder %s381, 0
      %s384 = sadd.s32 %s383, 1
      %s385 = scalar_select %p382, %s383, %s384
      %p388 = pneg %p382
      %p389 = scmp.eq.s32.totalorder %s27, 1
      %p390 = por %p388, %p389
      %p391 = scmp.ne.s32.totalorder %s383, %s386
      %p392 = scmp.eq.s32.totalorder %s27, 0
      %p393 = por %p391, %p392
      %p394 = scmp.ne.s32.totalorder %s383, %s386
      %p395 = scmp.eq.s32.totalorder %s32, 1
      %p396 = por %p394, %p395
      %p397 = scmp.ne.s32.totalorder %s386, %s387
      %p398 = scmp.eq.s32.totalorder %s32, 0
      %p399 = por %p397, %p398
      %p400 = scmp.ne.s32.totalorder %s386, %s387
      %p401 = scmp.eq.s32.totalorder %s33, 1
      %p402 = por %p400, %p401
      %p404 = scmp.ne.s32.totalorder %s387, %s403
      %p405 = scmp.eq.s32.totalorder %s33, 0
      %p406 = por %p404, %p405
      %s407 = ssub.s32 %s27, %s34
      %p408 = scmp.eq.s32.totalorder %s407, 0
      %s410 = sadd.s32 %s409, 1
      %s411 = scalar_select %p408, %s409, %s410
      %p414 = pneg %p408
      %p415 = scmp.eq.s32.totalorder %s27, 1
      %p416 = por %p414, %p415
      %p417 = scmp.ne.s32.totalorder %s409, %s412
      %p418 = scmp.eq.s32.totalorder %s27, 0
      %p419 = por %p417, %p418
      %p420 = scmp.ne.s32.totalorder %s409, %s412
      %p421 = scmp.eq.s32.totalorder %s32, 1
      %p422 = por %p420, %p421
      %p423 = scmp.ne.s32.totalorder %s412, %s413
      %p424 = scmp.eq.s32.totalorder %s32, 0
      %p425 = por %p423, %p424
      %p426 = scmp.ne.s32.totalorder %s412, %s413
      %p427 = scmp.eq.s32.totalorder %s33, 1
      %p428 = por %p426, %p427
      %p430 = scmp.ne.s32.totalorder %s413, %s429
      %p431 = scmp.eq.s32.totalorder %s33, 0
      %p432 = por %p430, %p431
      %p433 = scmp.le.s32.totalorder 1, %s27
      %p434 = scmp.lt.s32.totalorder %s27, 3
      %p435 = pnand %p433, %p434
      %p436 = pneg %p435
      // Predicated region
      $region9: #{_lambda_.2} parent=5 // pred_check
        _
      $region10: #{_lambda_.2} parent=5 // pred_check_branch
        %438 = sbr.rel (%p435) target = $region12
      $region11: #{_lambda_.2} parent=5 // pred_region
        %s439 = ssub.s32 %s27, 1
        // Predicated region
        $region13: #{_lambda_.2} parent=11 // pred_check
          %p440 = pneg %p100
        $region14: #{_lambda_.2} parent=11 // pred_check_branch
          %442 = sbr.rel (%p440) target = $region16
        $region15: #{_lambda_.2} parent=11 // pred_region
          _
        $region16: #{_lambda_.2} parent=11 // pred_fallthru
          _
        // Predicated region
        $region17: #{_lambda_.2} parent=11 // pred_check
          %p443 = pneg %p121
        $region18: #{_lambda_.2} parent=11 // pred_check_branch
          %445 = sbr.rel (%p443) target = $region20
        $region19: #{_lambda_.2} parent=11 // pred_region
          _
        $region20: #{_lambda_.2} parent=11 // pred_fallthru
          _
        // Predicated region
        $region21: #{_lambda_.2} parent=11 // pred_check
          %p446 = pneg %p142
        $region22: #{_lambda_.2} parent=11 // pred_check_branch
          %448 = sbr.rel (%p446) target = $region24
        $region23: #{_lambda_.2} parent=11 // pred_region
          _
        $region24: #{_lambda_.2} parent=11 // pred_fallthru
          _
        // Predicated region
        $region25: #{_lambda_.2} parent=11 // pred_check
          %p449 = pneg %p163
        $region26: #{_lambda_.2} parent=11 // pred_check_branch
          %451 = sbr.rel (%p449) target = $region28
        $region27: #{_lambda_.2} parent=11 // pred_region
          _
        $region28: #{_lambda_.2} parent=11 // pred_fallthru
          _
        // Predicated region
        $region29: #{_lambda_.2} parent=11 // pred_check
          %p452 = pneg %p184
        $region30: #{_lambda_.2} parent=11 // pred_check_branch
          %454 = sbr.rel (%p452) target = $region32
        $region31: #{_lambda_.2} parent=11 // pred_region
          _
        $region32: #{_lambda_.2} parent=11 // pred_fallthru
          _
        // Predicated region
        $region33: #{_lambda_.2} parent=11 // pred_check
          %p455 = pneg %p205
        $region34: #{_lambda_.2} parent=11 // pred_check_branch
          %457 = sbr.rel (%p455) target = $region36
        $region35: #{_lambda_.2} parent=11 // pred_region
          _
        $region36: #{_lambda_.2} parent=11 // pred_fallthru
          _
        // Predicated region
        $region37: #{_lambda_.2} parent=11 // pred_check
          %p458 = pneg %p226
        $region38: #{_lambda_.2} parent=11 // pred_check_branch
          %460 = sbr.rel (%p458) target = $region40
        $region39: #{_lambda_.2} parent=11 // pred_region
          _
        $region40: #{_lambda_.2} parent=11 // pred_fallthru
          _
        // Predicated region
        $region41: #{_lambda_.2} parent=11 // pred_check
          %p461 = pneg %p247
        $region42: #{_lambda_.2} parent=11 // pred_check_branch
          %463 = sbr.rel (%p461) target = $region44
        $region43: #{_lambda_.2} parent=11 // pred_region
          _
        $region44: #{_lambda_.2} parent=11 // pred_fallthru
          _
        // Predicated region
        $region45: #{_lambda_.2} parent=11 // pred_check
          %p464 = pneg %p268
        $region46: #{_lambda_.2} parent=11 // pred_check_branch
          %466 = sbr.rel (%p464) target = $region48
        $region47: #{_lambda_.2} parent=11 // pred_region
          _
        $region48: #{_lambda_.2} parent=11 // pred_fallthru
          _
        // Predicated region
        $region49: #{_lambda_.2} parent=11 // pred_check
          %p467 = pneg %p289
        $region50: #{_lambda_.2} parent=11 // pred_check_branch
          %469 = sbr.rel (%p467) target = $region52
        $region51: #{_lambda_.2} parent=11 // pred_region
          _
        $region52: #{_lambda_.2} parent=11 // pred_fallthru
          _
        // Predicated region
        $region53: #{_lambda_.2} parent=11 // pred_check
          %p470 = pneg %p310
        $region54: #{_lambda_.2} parent=11 // pred_check_branch
          %472 = sbr.rel (%p470) target = $region56
        $region55: #{_lambda_.2} parent=11 // pred_region
          _
        $region56: #{_lambda_.2} parent=11 // pred_fallthru
          _
        // Predicated region
        $region57: #{_lambda_.2} parent=11 // pred_check
          %p473 = pneg %p331
        $region58: #{_lambda_.2} parent=11 // pred_check_branch
          %475 = sbr.rel (%p473) target = $region60
        $region59: #{_lambda_.2} parent=11 // pred_region
          _
        $region60: #{_lambda_.2} parent=11 // pred_fallthru
          _
        // Predicated region
        $region61: #{_lambda_.2} parent=11 // pred_check
          %p476 = pneg %p352
        $region62: #{_lambda_.2} parent=11 // pred_check_branch
          %478 = sbr.rel (%p476) target = $region64
        $region63: #{_lambda_.2} parent=11 // pred_region
          _
        $region64: #{_lambda_.2} parent=11 // pred_fallthru
          _
        // Predicated region
        $region65: #{_lambda_.2} parent=11 // pred_check
          %p479 = pneg %p373
        $region66: #{_lambda_.2} parent=11 // pred_check_branch
          %481 = sbr.rel (%p479) target = $region68
        $region67: #{_lambda_.2} parent=11 // pred_region
          _
        $region68: #{_lambda_.2} parent=11 // pred_fallthru
          _
      $region12: #{_lambda_.2} parent=5 // pred_fallthru
        _
      %p482 = scmp.lt.s32.totalorder %s27, 2
      // Predicated region
      $region69: #{_lambda_.2} parent=5 // pred_check
        %p483 = pneg %p482
      $region70: #{_lambda_.2} parent=5 // pred_check_branch
        %485 = sbr.rel (%p483) target = $region72
      $region71: #{_lambda_.2} parent=5 // pred_region
        // Predicated region
        $region73: #{_lambda_.2} parent=71 // pred_check
          %p486 = pneg %p47
        $region74: #{_lambda_.2} parent=71 // pred_check_branch
          %488 = sbr.rel (%p486) target = $region76
        $region75: #{_lambda_.2} parent=71 // pred_region
          %p489 = scmp.lt.s32.totalorder %s27, 1
          %s490 = scalar_select %p489, %s27, 1
          %s491 = smul.addr %s490, 8
          %s492 = scalar_lea.vmem %s0, %s491
        $region76: #{_lambda_.2} parent=71 // pred_fallthru
          _
        // Predicated region
        $region77: #{_lambda_.2} parent=71 // pred_check
          %p493 = pneg %p73
        $region78: #{_lambda_.2} parent=71 // pred_check_branch
          %495 = sbr.rel (%p493) target = $region80
        $region79: #{_lambda_.2} parent=71 // pred_region
          %p496 = scmp.lt.s32.totalorder %s27, 1
          %s497 = scalar_select %p496, %s27, 1
          %s498 = scalar_lea.vmem %s1, %s497
        $region80: #{_lambda_.2} parent=71 // pred_fallthru
          _
      $region72: #{_lambda_.2} parent=5 // pred_fallthru
        _
      %p499 = scmp.le.s32.totalorder 1, %s27
      %p500 = scmp.lt.s32.totalorder %s27, 3
      %p501 = pnand %p499, %p500
      %p502 = pneg %p501
      // Predicated region
      $region81: #{_lambda_.2} parent=5 // pred_check
        _
      $region82: #{_lambda_.2} parent=5 // pred_check_branch
        %504 = sbr.rel (%p501) target = $region84
      $region83: #{_lambda_.2} parent=5 // pred_region
        %s505 = ssub.s32 %s27, 1
        %p506 = scmp.lt.s32.totalorder %s32, 1
        %s507 = scalar_select %p506, %s32, 1
        %s508 = smul.addr %s507, 8
        %s509 = scalar_lea.vmem %s0, %s508
        %p510 = pneg %p53
        %p511 = pneg %p50
        %p512 = scmp.lt.s32.totalorder %s32, 1
        %s513 = scalar_select %p512, %s32, 1
        %s514 = scalar_lea.vmem %s1, %s513
        %p515 = pneg %p79
        %p516 = pneg %p76
        %p517 = pneg %p100
        %p518 = pneg %p97
        %p519 = pneg %p121
        %p520 = pneg %p118
        %p521 = pneg %p142
        %p522 = pneg %p139
        %p523 = pneg %p163
        %p524 = pneg %p160
        %p525 = pneg %p184
        %p526 = pneg %p181
        %p527 = pneg %p205
        %p528 = pneg %p202
        %p529 = pneg %p226
        %p530 = pneg %p223
        %p531 = pneg %p247
        %p532 = pneg %p244
        %p533 = pneg %p268
        %p534 = pneg %p265
        %p535 = pneg %p289
        %p536 = pneg %p286
        %p537 = pneg %p310
        %p538 = pneg %p307
        %p539 = pneg %p331
        %p540 = pneg %p328
        %p541 = pneg %p352
        %p542 = pneg %p349
        %p543 = pneg %p373
        %p544 = pneg %p370
        %p545 = pneg %p399
        %p546 = pneg %p396
        %s547 = sand.u32 %s386, 1
        %s548 = scalar_lea.sflag [#allocation3], %s547
        %s549 = sand.u32 %s386, 1
        %s550 = smul.addr %s549, 8
        %s551 = scalar_lea.vmem [#allocation2], %s550
        %p552 = pneg %p425
        %p553 = pneg %p422
        %p554 = scmp.lt.s32.totalorder %s32, 1
        %s555 = scalar_select %p554, %s32, 1
        %s556 = smul.addr %s555, 8
        %s557 = scalar_lea.vmem %s17, %s556
        %p558 = scmp.lt.s32.totalorder %s32, 1
        %s559 = scalar_select %p558, %s32, 1
        %s560 = smul.addr %s559, 8
        %s561 = scalar_lea.vmem %s0, %s560
        %p562 = scmp.lt.s32.totalorder %s32, 1
        %s563 = scalar_select %p562, %s32, 1
        %s564 = scalar_lea.vmem %s1, %s563
        %p565 = scmp.lt.s32.totalorder %s32, 1
        %s566 = scalar_select %p565, %s32, 1
        %s567 = smul.addr %s566, 8
        %s568 = scalar_lea.vmem %s17, %s567
        %v570 = vld [vmem:[%s561] sm:$0xff]
        %v571 = vld [vmem:[%s2] sm:$0x1]
        %v572 = vld [vmem:[%s3] sm:$0x1]
        %vm573 = vcmask 261120
        %v574 = vsel %vm573, %v570, 0.0
        %575 = vadd.xlane.f32.xlu0 %v574
        %v576 = vpop.xlane.xlu0 %575
        %v577 = vrcp.pop 32.0
        %v578 = vmul.f32 %v576, %v577
        %v579 = vsub.f32 %v570, %v578
        %v580 = vmul.f32 %v579, %v579
        %v581 = vsel %vm573, %v580, 0.0
        %582 = vadd.xlane.f32.xlu0 %v581
        %v583 = vpop.xlane.xlu0 %582
        %v584 = vmul.f32 %v583, %v577
        %v585 = vadd.f32 %v584, 1e-12
        %v586 = vrsqrt.pop %v585
        %v587 = vmul.f32 %v579, %v586
        %v589 = vlaneseq
        %v590 = vshrl.u32 %v589, 7
        %v591 = vsub.s32 0, %v590
        %v592 = vrot.slane %v571, %v591
        %v594 = vmul.f32 %v587, %v592
        %v596 = vlaneseq
        %v597 = vshrl.u32 %v596, 7
        %v598 = vsub.s32 0, %v597
        %v599 = vrot.slane %v572, %v598
        %v601 = vadd.f32 %v594, %v599
        %602 = vst.msk [vmem:[%s551] sm:$0xff] %vm573, %v601
        %v603 = vld [vmem:[%s4] sm:$0xf]
        %v604 = vld [vmem:[%s4 + $0x4] sm:$0xf]
        %v605 = vld [vmem:[%s4 + $0x8] sm:$0xf]
        %v606 = vld [vmem:[%s4 + $0xc] sm:$0xf]
        %v607 = vpack.c.bf16 %v601, %v601
        %v608 = vld [vmem:[%s5] sm:$0x1]
        %v610 = vlaneseq
        %v611 = vshrl.u32 %v610, 7
        %v612 = vsub.s32 0, %v611
        %v613 = vrot.slane %v608, %v612
        %v619 = vunpack.c.l.b16 %v603
        %v620 = vunpack.c.l.b16 %v604
        %v621 = vunpack.c.l.b16 %v605
        %v622 = vunpack.c.l.b16 %v606
        %v623 = vpack.c.b16 %v620, %v619
        %v624 = vpack.c.b16 %v622, %v621
        %v628 = vsel %vm573, %v607, 0
        %630 = vmatprep.subr.bf16.mxu0 0
        %631 = vmatpush1.bf16.msra.mxu0 0
        %632 = vmatprep.subr.bf16.mxu0 0
        %633 = vmatpush1.bf16.msra.mxu0 0
        %634 = vmatprep.subr.bf16.mxu0 0
        %635 = vmatpush1.bf16.msra.mxu0 0
        %636 = vmatprep.subr.bf16.mxu0 0
        %637 = vmatpush1.bf16.msra.mxu0 0
        %638 = vmatprep.subr.bf16.mxu0 0
        %639 = vmatpush1.bf16.msra.mxu0 0
        %640 = vmatprep.subr.bf16.mxu0 0
        %641 = vmatpush1.bf16.msra.mxu0 0
        %642 = vmatprep.subr.bf16.mxu0 0
        %643 = vmatpush1.bf16.msra.mxu0 %v624
        %644 = vmatprep.subr.bf16.mxu0 0
        %645 = vmatpush1.bf16.msra.mxu0 %v623
        %646 = vmatprep.subr.bf16.mxu0 0
        %647 = vmatpush2.bf16.msra.mxu0 0
        %648 = vmatprep.subr.bf16.mxu0 0
        %649 = vmatpush2.bf16.msra.mxu0 0
        %650 = vmatprep.subr.bf16.mxu0 0
        %651 = vmatpush2.bf16.msra.mxu0 0
        %652 = vmatprep.subr.bf16.mxu0 0
        %653 = vmatpush2.bf16.msra.mxu0 0
        %654 = vmatprep.subr.bf16.mxu0 0
        %655 = vmatpush2.bf16.msra.mxu0 0
        %656 = vmatprep.subr.bf16.mxu0 0
        %657 = vmatpush2.bf16.msra.mxu0 0
        %658 = vmatprep.subr.bf16.mxu0 0
        %659 = vmatpush2.bf16.msra.mxu0 0
        %660 = vmatprep.subr.bf16.mxu0 0
        %661 = vmatpush2.bf16.msra.mxu0 0
        %662 = vmatprep.mubr.bf16.mxu0 0
        %663 = vmatmul.mubr.bf16.gmra.mxu0 %v628
        %v664 = vpop.f32.mrf.mxu0
        %v665 = vadd.f32 %v613, %v664
        %v666 = vpop.f32.mrf.mxu0
        %v667 = vpop.f32.mrf.mxu0
        %v668 = vpop.f32.mrf.mxu0
        %669 = vdwg.mxu0
        %v670 = vld [vmem:[%s564] sm:$0x1]
        %v671 = vsub.f32 1.0, %v670
        %v672 = vmul.f32 %v671, -1e+09
        %v673 = vpack.c.bf16 %v665, %v665
        %675 = vrot.lane.b32.xlu0 %v673, 96
        %v676 = vpop.permute.xlu0 %675
        %vm677 = vcmask 64512
        %v679 = vsel %vm677, %v673, 0
        %v682 = vsel %vm677, %v676, 0
        %684 = vmatprep.subr.bf16.mxu0 0
        %685 = vmatpush1.bf16.xpose.msra.mxu0 0
        %686 = vmatprep.subr.bf16.mxu0 0
        %687 = vmatpush1.bf16.xpose.msra.mxu0 0
        %688 = vmatprep.subr.bf16.mxu0 0
        %689 = vmatpush1.bf16.xpose.msra.mxu0 0
        %690 = vmatprep.subr.bf16.mxu0 0
        %691 = vmatpush1.bf16.xpose.msra.mxu0 0
        %692 = vmatprep.subr.bf16.mxu0 0
        %693 = vmatpush1.bf16.xpose.msra.mxu0 0
        %694 = vmatprep.subr.bf16.mxu0 0
        %695 = vmatpush1.bf16.xpose.msra.mxu0 0
        %696 = vmatprep.subr.bf16.mxu0 0
        %697 = vmatpush1.bf16.xpose.msra.mxu0 0
        %698 = vmatprep.subr.bf16.mxu0 0
        %699 = vmatpush1.bf16.xpose.msra.mxu0 %v682
        %700 = vmatprep.subr.bf16.mxu0 0
        %701 = vmatpush2.bf16.xpose.msra.mxu0 0
        %702 = vmatprep.subr.bf16.mxu0 0
        %703 = vmatpush2.bf16.xpose.msra.mxu0 0
        %704 = vmatprep.subr.bf16.mxu0 0
        %705 = vmatpush2.bf16.xpose.msra.mxu0 0
        %706 = vmatprep.subr.bf16.mxu0 0
        %707 = vmatpush2.bf16.xpose.msra.mxu0 0
        %708 = vmatprep.subr.bf16.mxu0 0
        %709 = vmatpush2.bf16.xpose.msra.mxu0 0
        %710 = vmatprep.subr.bf16.mxu0 0
        %711 = vmatpush2.bf16.xpose.msra.mxu0 0
        %712 = vmatprep.subr.bf16.mxu0 0
        %713 = vmatpush2.bf16.xpose.msra.mxu0 0
        %714 = vmatprep.subr.bf16.mxu0 0
        %715 = vmatpush2.bf16.xpose.msra.mxu0 0
        %716 = vmatprep.mubr.bf16.mxu0 0
        %717 = vmatmul.mubr.bf16.gmra.mxu0 %v679
        %v718 = vpop.f32.mrf.mxu0
        %v719 = vadd.f32 0.0, %v718
        %v720 = vpop.f32.mrf.mxu0
        %v721 = vpop.f32.mrf.mxu0
        %v722 = vpop.f32.mrf.mxu0
        %723 = vdwg.mxu0
        %v724 = vmul.f32 %v719, 0.35355338
        %v726 = vlaneseq
        %v727 = vshrl.u32 %v726, 7
        %v728 = vsub.s32 0, %v727
        %v729 = vrot.slane %v672, %v728
        %v731 = vadd.f32 %v724, %v729
        %v732 = vsel %vm677, %v731, -inf
        %733 = vmax.xlane.f32.xlu0 %v732
        %v734 = vpop.xlane.xlu0 %733
        %v735 = vsub.f32 %v731, %v734
        %v736 = vmul.f32 %v735, 1.442695
        %v737 = vpow.pop %v736
        %v738 = vsel %vm677, %v737, 0.0
        %739 = vadd.xlane.f32.xlu0 %v738
        %v740 = vpop.xlane.xlu0 %739
        %v741 = vrcp.pop %v740
        %v742 = vmul.f32 %v737, %v741
        %v743 = vpack.c.bf16 %v742, %v742
        %744 = vrot.lane.b32.xlu0 %v673, 64
        %v745 = vpop.permute.xlu0 %744
        %v747 = vsel %vm677, %v743, 0
        %vm749 = vcmask 1043456
        %v751 = vsel %vm749, %v745, 0
        %753 = vmatprep.subr.bf16.mxu0 0
        %754 = vmatpush1.bf16.msra.mxu0 0
        %755 = vmatprep.subr.bf16.mxu0 0
        %756 = vmatpush1.bf16.msra.mxu0 0
        %757 = vmatprep.subr.bf16.mxu0 0
        %758 = vmatpush1.bf16.msra.mxu0 0
        %759 = vmatprep.subr.bf16.mxu0 0
        %760 = vmatpush1.bf16.msra.mxu0 0
        %761 = vmatprep.subr.bf16.mxu0 0
        %762 = vmatpush1.bf16.msra.mxu0 0
        %763 = vmatprep.subr.bf16.mxu0 0
        %764 = vmatpush1.bf16.msra.mxu0 0
        %765 = vmatprep.subr.bf16.mxu0 0
        %766 = vmatpush1.bf16.msra.mxu0 0
        %767 = vmatprep.subr.bf16.mxu0 0
        %768 = vmatpush1.bf16.msra.mxu0 %v751
        %769 = vmatprep.subr.bf16.mxu0 0
        %770 = vmatpush2.bf16.msra.mxu0 0
        %771 = vmatprep.subr.bf16.mxu0 0
        %772 = vmatpush2.bf16.msra.mxu0 0
        %773 = vmatprep.subr.bf16.mxu0 0
        %774 = vmatpush2.bf16.msra.mxu0 0
        %775 = vmatprep.subr.bf16.mxu0 0
        %776 = vmatpush2.bf16.msra.mxu0 0
        %777 = vmatprep.subr.bf16.mxu0 0
        %778 = vmatpush2.bf16.msra.mxu0 0
        %779 = vmatprep.subr.bf16.mxu0 0
        %780 = vmatpush2.bf16.msra.mxu0 0
        %781 = vmatprep.subr.bf16.mxu0 0
        %782 = vmatpush2.bf16.msra.mxu0 0
        %783 = vmatprep.subr.bf16.mxu0 0
        %784 = vmatpush2.bf16.msra.mxu0 0
        %785 = vmatprep.mubr.bf16.mxu0 0
        %786 = vmatmul.mubr.bf16.gmra.mxu0 %v747
        %v787 = vpop.f32.mrf.mxu0
        %v788 = vadd.f32 0.0, %v787
        %v789 = vpop.f32.mrf.mxu0
        %v790 = vpop.f32.mrf.mxu0
        %v791 = vpop.f32.mrf.mxu0
        %792 = vdwg.mxu0
        %v793 = vpack.c.bf16 %v788, %v788
        %v794 = vld [vmem:[%s6] sm:$0xf]
        %795 = vrot.lane.b32.xlu0 %v673, 120
        %v796 = vpop.permute.xlu0 %795
        %797 = vrot.lane.b32.xlu0 %v673, 88
        %v798 = vpop.permute.xlu0 %797
        %v800 = vsel %vm677, %v796, 0
        %v803 = vsel %vm677, %v798, 0
        %805 = vmatprep.subr.bf16.mxu0 0
        %806 = vmatpush1.bf16.xpose.msra.mxu0 0
        %807 = vmatprep.subr.bf16.mxu0 0
        %808 = vmatpush1.bf16.xpose.msra.mxu0 0
        %809 = vmatprep.subr.bf16.mxu0 0
        %810 = vmatpush1.bf16.xpose.msra.mxu0 0
        %811 = vmatprep.subr.bf16.mxu0 0
        %812 = vmatpush1.bf16.xpose.msra.mxu0 0
        %813 = vmatprep.subr.bf16.mxu0 0
        %814 = vmatpush1.bf16.xpose.msra.mxu0 0
        %815 = vmatprep.subr.bf16.mxu0 0
        %816 = vmatpush1.bf16.xpose.msra.mxu0 0
        %817 = vmatprep.subr.bf16.mxu0 0
        %818 = vmatpush1.bf16.xpose.msra.mxu0 0
        %819 = vmatprep.subr.bf16.mxu0 0
        %820 = vmatpush1.bf16.xpose.msra.mxu0 %v803
        %821 = vmatprep.subr.bf16.mxu0 0
        %822 = vmatpush2.bf16.xpose.msra.mxu0 0
        %823 = vmatprep.subr.bf16.mxu0 0
        %824 = vmatpush2.bf16.xpose.msra.mxu0 0
        %825 = vmatprep.subr.bf16.mxu0 0
        %826 = vmatpush2.bf16.xpose.msra.mxu0 0
        %827 = vmatprep.subr.bf16.mxu0 0
        %828 = vmatpush2.bf16.xpose.msra.mxu0 0
        %829 = vmatprep.subr.bf16.mxu0 0
        %830 = vmatpush2.bf16.xpose.msra.mxu0 0
        %831 = vmatprep.subr.bf16.mxu0 0
        %832 = vmatpush2.bf16.xpose.msra.mxu0 0
        %833 = vmatprep.subr.bf16.mxu0 0
        %834 = vmatpush2.bf16.xpose.msra.mxu0 0
        %835 = vmatprep.subr.bf16.mxu0 0
        %836 = vmatpush2.bf16.xpose.msra.mxu0 0
        %837 = vmatprep.mubr.bf16.mxu0 0
        %838 = vmatmul.mubr.bf16.gmra.mxu0 %v800
        %v839 = vpop.f32.mrf.mxu0
        %v840 = vadd.f32 0.0, %v839
        %v841 = vpop.f32.mrf.mxu0
        %v842 = vpop.f32.mrf.mxu0
        %v843 = vpop.f32.mrf.mxu0
        %844 = vdwg.mxu0
        %v845 = vmul.f32 %v840, 0.35355338
        %v846 = vadd.f32 %v845, %v729
        %v847 = vsel %vm677, %v846, -inf
        %848 = vmax.xlane.f32.xlu0 %v847
        %v849 = vpop.xlane.xlu0 %848
        %v850 = vsub.f32 %v846, %v849
        %v851 = vmul.f32 %v850, 1.442695
        %v852 = vpow.pop %v851
        %v853 = vsel %vm677, %v852, 0.0
        %854 = vadd.xlane.f32.xlu0 %v853
        %v855 = vpop.xlane.xlu0 %854
        %v856 = vrcp.pop %v855
        %v857 = vmul.f32 %v852, %v856
        %v858 = vpack.c.bf16 %v857, %v857
        %859 = vrot.lane.b32.xlu0 %v673, 56
        %v860 = vpop.permute.xlu0 %859
        %v862 = vsel %vm677, %v858, 0
        %v865 = vsel %vm749, %v860, 0
        %867 = vmatprep.subr.bf16.mxu0 0
        %868 = vmatpush1.bf16.msra.mxu0 0
        %869 = vmatprep.subr.bf16.mxu0 0
        %870 = vmatpush1.bf16.msra.mxu0 0
        %871 = vmatprep.subr.bf16.mxu0 0
        %872 = vmatpush1.bf16.msra.mxu0 0
        %873 = vmatprep.subr.bf16.mxu0 0
        %874 = vmatpush1.bf16.msra.mxu0 0
        %875 = vmatprep.subr.bf16.mxu0 0
        %876 = vmatpush1.bf16.msra.mxu0 0
        %877 = vmatprep.subr.bf16.mxu0 0
        %878 = vmatpush1.bf16.msra.mxu0 0
        %879 = vmatprep.subr.bf16.mxu0 0
        %880 = vmatpush1.bf16.msra.mxu0 0
        %881 = vmatprep.subr.bf16.mxu0 0
        %882 = vmatpush1.bf16.msra.mxu0 %v865
        %883 = vmatprep.subr.bf16.mxu0 0
        %884 = vmatpush2.bf16.msra.mxu0 0
        %885 = vmatprep.subr.bf16.mxu0 0
        %886 = vmatpush2.bf16.msra.mxu0 0
        %887 = vmatprep.subr.bf16.mxu0 0
        %888 = vmatpush2.bf16.msra.mxu0 0
        %889 = vmatprep.subr.bf16.mxu0 0
        %890 = vmatpush2.bf16.msra.mxu0 0
        %891 = vmatprep.subr.bf16.mxu0 0
        %892 = vmatpush2.bf16.msra.mxu0 0
        %893 = vmatprep.subr.bf16.mxu0 0
        %894 = vmatpush2.bf16.msra.mxu0 0
        %895 = vmatprep.subr.bf16.mxu0 0
        %896 = vmatpush2.bf16.msra.mxu0 0
        %897 = vmatprep.subr.bf16.mxu0 0
        %898 = vmatpush2.bf16.msra.mxu0 0
        %899 = vmatprep.mubr.bf16.mxu0 0
        %900 = vmatmul.mubr.bf16.gmra.mxu0 %v862
        %v901 = vpop.f32.mrf.mxu0
        %v902 = vadd.f32 0.0, %v901
        %v903 = vpop.f32.mrf.mxu0
        %v904 = vpop.f32.mrf.mxu0
        %v905 = vpop.f32.mrf.mxu0
        %906 = vdwg.mxu0
        %v907 = vpack.c.bf16 %v902, %v902
        %s908 = scalar_lea.vmem %s6, 4
        %v909 = vld [vmem:[%s908] sm:$0xf]
        %v911 = vsel %vm677, %v907, 0
        %v914 = vsel %vm749, %v909, 0
        %916 = vmatprep.subr.bf16.mxu0 0
        %917 = vmatpush1.bf16.msra.mxu0 0
        %918 = vmatprep.subr.bf16.mxu0 0
        %919 = vmatpush1.bf16.msra.mxu0 0
        %920 = vmatprep.subr.bf16.mxu0 0
        %921 = vmatpush1.bf16.msra.mxu0 0
        %922 = vmatprep.subr.bf16.mxu0 0
        %923 = vmatpush1.bf16.msra.mxu0 0
        %924 = vmatprep.subr.bf16.mxu0 0
        %925 = vmatpush1.bf16.msra.mxu0 0
        %926 = vmatprep.subr.bf16.mxu0 0
        %927 = vmatpush1.bf16.msra.mxu0 0
        %928 = vmatprep.subr.bf16.mxu0 0
        %929 = vmatpush1.bf16.msra.mxu0 0
        %930 = vmatprep.subr.bf16.mxu0 0
        %931 = vmatpush1.bf16.msra.mxu0 %v914
        %932 = vmatprep.subr.bf16.mxu0 0
        %933 = vmatpush2.bf16.msra.mxu0 0
        %934 = vmatprep.subr.bf16.mxu0 0
        %935 = vmatpush2.bf16.msra.mxu0 0
        %936 = vmatprep.subr.bf16.mxu0 0
        %937 = vmatpush2.bf16.msra.mxu0 0
        %938 = vmatprep.subr.bf16.mxu0 0
        %939 = vmatpush2.bf16.msra.mxu0 0
        %940 = vmatprep.subr.bf16.mxu0 0
        %941 = vmatpush2.bf16.msra.mxu0 0
        %942 = vmatprep.subr.bf16.mxu0 0
        %943 = vmatpush2.bf16.msra.mxu0 0
        %944 = vmatprep.subr.bf16.mxu0 0
        %945 = vmatpush2.bf16.msra.mxu0 0
        %946 = vmatprep.subr.bf16.mxu0 0
        %947 = vmatpush2.bf16.msra.mxu0 0
        %948 = vmatprep.mubr.bf16.mxu0 0
        %949 = vmatmul.mubr.bf16.gmra.mxu0 %v911
        %v950 = vpop.f32.mrf.mxu0
        %v951 = vadd.f32 0.0, %v950
        %v952 = vpop.f32.mrf.mxu0
        %v953 = vpop.f32.mrf.mxu0
        %v954 = vpop.f32.mrf.mxu0
        %955 = vdwg.mxu0
        %v957 = vsel %vm677, %v793, 0
        %v960 = vsel %vm749, %v794, 0
        %962 = vmatprep.subr.bf16.mxu0 0
        %963 = vmatpush1.bf16.msra.mxu0 0
        %964 = vmatprep.subr.bf16.mxu0 0
        %965 = vmatpush1.bf16.msra.mxu0 0
        %966 = vmatprep.subr.bf16.mxu0 0
        %967 = vmatpush1.bf16.msra.mxu0 0
        %968 = vmatprep.subr.bf16.mxu0 0
        %969 = vmatpush1.bf16.msra.mxu0 0
        %970 = vmatprep.subr.bf16.mxu0 0
        %971 = vmatpush1.bf16.msra.mxu0 0
        %972 = vmatprep.subr.bf16.mxu0 0
        %973 = vmatpush1.bf16.msra.mxu0 0
        %974 = vmatprep.subr.bf16.mxu0 0
        %975 = vmatpush1.bf16.msra.mxu0 0
        %976 = vmatprep.subr.bf16.mxu0 0
        %977 = vmatpush1.bf16.msra.mxu0 %v960
        %978 = vmatprep.subr.bf16.mxu0 0
        %979 = vmatpush2.bf16.msra.mxu0 0
        %980 = vmatprep.subr.bf16.mxu0 0
        %981 = vmatpush2.bf16.msra.mxu0 0
        %982 = vmatprep.subr.bf16.mxu0 0
        %983 = vmatpush2.bf16.msra.mxu0 0
        %984 = vmatprep.subr.bf16.mxu0 0
        %985 = vmatpush2.bf16.msra.mxu0 0
        %986 = vmatprep.subr.bf16.mxu0 0
        %987 = vmatpush2.bf16.msra.mxu0 0
        %988 = vmatprep.subr.bf16.mxu0 0
        %989 = vmatpush2.bf16.msra.mxu0 0
        %990 = vmatprep.subr.bf16.mxu0 0
        %991 = vmatpush2.bf16.msra.mxu0 0
        %992 = vmatprep.subr.bf16.mxu0 0
        %993 = vmatpush2.bf16.msra.mxu0 0
        %994 = vmatprep.mubr.bf16.mxu0 0
        %995 = vmatmul.mubr.bf16.gmra.mxu0 %v957
        %v996 = vpop.f32.mrf.mxu0
        %v997 = vadd.f32 %v951, %v996
        %v998 = vpop.f32.mrf.mxu0
        %v999 = vpop.f32.mrf.mxu0
        %v1000 = vpop.f32.mrf.mxu0
        %1001 = vdwg.mxu0
        %1002 = vrot.lane.b32.xlu0 %v673, 112
        %v1003 = vpop.permute.xlu0 %1002
        %1004 = vrot.lane.b32.xlu0 %v673, 80
        %v1005 = vpop.permute.xlu0 %1004
        %v1007 = vsel %vm677, %v1003, 0
        %v1010 = vsel %vm677, %v1005, 0
        %1012 = vmatprep.subr.bf16.mxu0 0
        %1013 = vmatpush1.bf16.xpose.msra.mxu0 0
        %1014 = vmatprep.subr.bf16.mxu0 0
        %1015 = vmatpush1.bf16.xpose.msra.mxu0 0
        %1016 = vmatprep.subr.bf16.mxu0 0
        %1017 = vmatpush1.bf16.xpose.msra.mxu0 0
        %1018 = vmatprep.subr.bf16.mxu0 0
        %1019 = vmatpush1.bf16.xpose.msra.mxu0 0
        %1020 = vmatprep.subr.bf16.mxu0 0
        %1021 = vmatpush1.bf16.xpose.msra.mxu0 0
        %1022 = vmatprep.subr.bf16.mxu0 0
        %1023 = vmatpush1.bf16.xpose.msra.mxu0 0
        %1024 = vmatprep.subr.bf16.mxu0 0
        %1025 = vmatpush1.bf16.xpose.msra.mxu0 0
        %1026 = vmatprep.subr.bf16.mxu0 0
        %1027 = vmatpush1.bf16.xpose.msra.mxu0 %v1010
        %1028 = vmatprep.subr.bf16.mxu0 0
        %1029 = vmatpush2.bf16.xpose.msra.mxu0 0
        %1030 = vmatprep.subr.bf16.mxu0 0
        %1031 = vmatpush2.bf16.xpose.msra.mxu0 0
        %1032 = vmatprep.subr.bf16.mxu0 0
        %1033 = vmatpush2.bf16.xpose.msra.mxu0 0
        %1034 = vmatprep.subr.bf16.mxu0 0
        %1035 = vmatpush2.bf16.xpose.msra.mxu0 0
        %1036 = vmatprep.subr.bf16.mxu0 0
        %1037 = vmatpush2.bf16.xpose.msra.mxu0 0
        %1038 = vmatprep.subr.bf16.mxu0 0
        %1039 = vmatpush2.bf16.xpose.msra.mxu0 0
        %1040 = vmatprep.subr.bf16.mxu0 0
        %1041 = vmatpush2.bf16.xpose.msra.mxu0 0
        %1042 = vmatprep.subr.bf16.mxu0 0
        %1043 = vmatpush2.bf16.xpose.msra.mxu0 0
        %1044 = vmatprep.mubr.bf16.mxu0 0
        %1045 = vmatmul.mubr.bf16.gmra.mxu0 %v1007
        %v1046 = vpop.f32.mrf.mxu0
        %v1047 = vadd.f32 0.0, %v1046
        %v1048 = vpop.f32.mrf.mxu0
        %v1049 = vpop.f32.mrf.mxu0
        %v1050 = vpop.f32.mrf.mxu0
        %1051 = vdwg.mxu0
        %v1052 = vmul.f32 %v1047, 0.35355338
        %v1053 = vadd.f32 %v1052, %v729
        %v1054 = vsel %vm677, %v1053, -inf
        %1055 = vmax.xlane.f32.xlu0 %v1054
        %v1056 = vpop.xlane.xlu0 %1055
        %v1057 = vsub.f32 %v1053, %v1056
        %v1058 = vmul.f32 %v1057, 1.442695
        %v1059 = vpow.pop %v1058
        %v1060 = vsel %vm677, %v1059, 0.0
        %1061 = vadd.xlane.f32.xlu0 %v1060
        %v1062 = vpop.xlane.xlu0 %1061
        %v1063 = vrcp.pop %v1062
        %v1064 = vmul.f32 %v1059, %v1063
        %v1065 = vpack.c.bf16 %v1064, %v1064
        %1066 = vrot.lane.b32.xlu0 %v673, 48
        %v1067 = vpop.permute.xlu0 %1066
        %v1069 = vsel %vm677, %v1065, 0
        %v1072 = vsel %vm749, %v1067, 0
        %1074 = vmatprep.subr.bf16.mxu0 0
        %1075 = vmatpush1.bf16.msra.mxu0 0
        %1076 = vmatprep.subr.bf16.mxu0 0
        %1077 = vmatpush1.bf16.msra.mxu0 0
        %1078 = vmatprep.subr.bf16.mxu0 0
        %1079 = vmatpush1.bf16.msra.mxu0 0
        %1080 = vmatprep.subr.bf16.mxu0 0
        %1081 = vmatpush1.bf16.msra.mxu0 0
        %1082 = vmatprep.subr.bf16.mxu0 0
        %1083 = vmatpush1.bf16.msra.mxu0 0
        %1084 = vmatprep.subr.bf16.mxu0 0
        %1085 = vmatpush1.bf16.msra.mxu0 0
        %1086 = vmatprep.subr.bf16.mxu0 0
        %1087 = vmatpush1.bf16.msra.mxu0 0
        %1088 = vmatprep.subr.bf16.mxu0 0
        %1089 = vmatpush1.bf16.msra.mxu0 %v1072
        %1090 = vmatprep.subr.bf16.mxu0 0
        %1091 = vmatpush2.bf16.msra.mxu0 0
        %1092 = vmatprep.subr.bf16.mxu0 0
        %1093 = vmatpush2.bf16.msra.mxu0 0
        %1094 = vmatprep.subr.bf16.mxu0 0
        %1095 = vmatpush2.bf16.msra.mxu0 0
        %1096 = vmatprep.subr.bf16.mxu0 0
        %1097 = vmatpush2.bf16.msra.mxu0 0
        %1098 = vmatprep.subr.bf16.mxu0 0
        %1099 = vmatpush2.bf16.msra.mxu0 0
        %1100 = vmatprep.subr.bf16.mxu0 0
        %1101 = vmatpush2.bf16.msra.mxu0 0
        %1102 = vmatprep.subr.bf16.mxu0 0
        %1103 = vmatpush2.bf16.msra.mxu0 0
        %1104 = vmatprep.subr.bf16.mxu0 0
        %1105 = vmatpush2.bf16.msra.mxu0 0
        %1106 = vmatprep.mubr.bf16.mxu0 0
        %1107 = vmatmul.mubr.bf16.gmra.mxu0 %v1069
        %v1108 = vpop.f32.mrf.mxu0
        %v1109 = vadd.f32 0.0, %v1108
        %v1110 = vpop.f32.mrf.mxu0
        %v1111 = vpop.f32.mrf.mxu0
        %v1112 = vpop.f32.mrf.mxu0
        %1113 = vdwg.mxu0
        %v1114 = vpack.c.bf16 %v1109, %v1109
        %s1115 = scalar_lea.vmem %s6, 8
        %v1116 = vld [vmem:[%s1115] sm:$0xf]
        %v1118 = vsel %vm677, %v1114, 0
        %v1121 = vsel %vm749, %v1116, 0
        %1123 = vmatprep.subr.bf16.mxu0 0
        %1124 = vmatpush1.bf16.msra.mxu0 0
        %1125 = vmatprep.subr.bf16.mxu0 0
        %1126 = vmatpush1.bf16.msra.mxu0 0
        %1127 = vmatprep.subr.bf16.mxu0 0
        %1128 = vmatpush1.bf16.msra.mxu0 0
        %1129 = vmatprep.subr.bf16.mxu0 0
        %1130 = vmatpush1.bf16.msra.mxu0 0
        %1131 = vmatprep.subr.bf16.mxu0 0
        %1132 = vmatpush1.bf16.msra.mxu0 0
        %1133 = vmatprep.subr.bf16.mxu0 0
        %1134 = vmatpush1.bf16.msra.mxu0 0
        %1135 = vmatprep.subr.bf16.mxu0 0
        %1136 = vmatpush1.bf16.msra.mxu0 0
        %1137 = vmatprep.subr.bf16.mxu0 0
        %1138 = vmatpush1.bf16.msra.mxu0 %v1121
        %1139 = vmatprep.subr.bf16.mxu0 0
        %1140 = vmatpush2.bf16.msra.mxu0 0
        %1141 = vmatprep.subr.bf16.mxu0 0
        %1142 = vmatpush2.bf16.msra.mxu0 0
        %1143 = vmatprep.subr.bf16.mxu0 0
        %1144 = vmatpush2.bf16.msra.mxu0 0
        %1145 = vmatprep.subr.bf16.mxu0 0
        %1146 = vmatpush2.bf16.msra.mxu0 0
        %1147 = vmatprep.subr.bf16.mxu0 0
        %1148 = vmatpush2.bf16.msra.mxu0 0
        %1149 = vmatprep.subr.bf16.mxu0 0
        %1150 = vmatpush2.bf16.msra.mxu0 0
        %1151 = vmatprep.subr.bf16.mxu0 0
        %1152 = vmatpush2.bf16.msra.mxu0 0
        %1153 = vmatprep.subr.bf16.mxu0 0
        %1154 = vmatpush2.bf16.msra.mxu0 0
        %1155 = vmatprep.mubr.bf16.mxu0 0
        %1156 = vmatmul.mubr.bf16.gmra.mxu0 %v1118
        %v1157 = vpop.f32.mrf.mxu0
        %v1158 = vadd.f32 0.0, %v1157
        %v1159 = vpop.f32.mrf.mxu0
        %v1160 = vpop.f32.mrf.mxu0
        %v1161 = vpop.f32.mrf.mxu0
        %1162 = vdwg.mxu0
        %v1163 = vadd.f32 %v997, %v1158
        %1164 = vrot.lane.b32.xlu0 %v673, 104
        %v1165 = vpop.permute.xlu0 %1164
        %1166 = vrot.lane.b32.xlu0 %v673, 72
        %v1167 = vpop.permute.xlu0 %1166
        %v1169 = vsel %vm677, %v1165, 0
        %v1172 = vsel %vm677, %v1167, 0
        %1174 = vmatprep.subr.bf16.mxu0 0
        %1175 = vmatpush1.bf16.xpose.msra.mxu0 0
        %1176 = vmatprep.subr.bf16.mxu0 0
        %1177 = vmatpush1.bf16.xpose.msra.mxu0 0
        %1178 = vmatprep.subr.bf16.mxu0 0
        %1179 = vmatpush1.bf16.xpose.msra.mxu0 0
        %1180 = vmatprep.subr.bf16.mxu0 0
        %1181 = vmatpush1.bf16.xpose.msra.mxu0 0
        %1182 = vmatprep.subr.bf16.mxu0 0
        %1183 = vmatpush1.bf16.xpose.msra.mxu0 0
        %1184 = vmatprep.subr.bf16.mxu0 0
        %1185 = vmatpush1.bf16.xpose.msra.mxu0 0
        %1186 = vmatprep.subr.bf16.mxu0 0
        %1187 = vmatpush1.bf16.xpose.msra.mxu0 0
        %1188 = vmatprep.subr.bf16.mxu0 0
        %1189 = vmatpush1.bf16.xpose.msra.mxu0 %v1172
        %1190 = vmatprep.subr.bf16.mxu0 0
        %1191 = vmatpush2.bf16.xpose.msra.mxu0 0
        %1192 = vmatprep.subr.bf16.mxu0 0
        %1193 = vmatpush2.bf16.xpose.msra.mxu0 0
        %1194 = vmatprep.subr.bf16.mxu0 0
        %1195 = vmatpush2.bf16.xpose.msra.mxu0 0
        %1196 = vmatprep.subr.bf16.mxu0 0
        %1197 = vmatpush2.bf16.xpose.msra.mxu0 0
        %1198 = vmatprep.subr.bf16.mxu0 0
        %1199 = vmatpush2.bf16.xpose.msra.mxu0 0
        %1200 = vmatprep.subr.bf16.mxu0 0
        %1201 = vmatpush2.bf16.xpose.msra.mxu0 0
        %1202 = vmatprep.subr.bf16.mxu0 0
        %1203 = vmatpush2.bf16.xpose.msra.mxu0 0
        %1204 = vmatprep.subr.bf16.mxu0 0
        %1205 = vmatpush2.bf16.xpose.msra.mxu0 0
        %1206 = vmatprep.mubr.bf16.mxu0 0
        %1207 = vmatmul.mubr.bf16.gmra.mxu0 %v1169
        %v1208 = vpop.f32.mrf.mxu0
        %v1209 = vadd.f32 0.0, %v1208
        %v1210 = vpop.f32.mrf.mxu0
        %v1211 = vpop.f32.mrf.mxu0
        %v1212 = vpop.f32.mrf.mxu0
        %1213 = vdwg.mxu0
        %v1214 = vmul.f32 %v1209, 0.35355338
        %v1215 = vadd.f32 %v1214, %v729
        %v1216 = vsel %vm677, %v1215, -inf
        %1217 = vmax.xlane.f32.xlu0 %v1216
        %v1218 = vpop.xlane.xlu0 %1217
        %v1219 = vsub.f32 %v1215, %v1218
        %v1220 = vmul.f32 %v1219, 1.442695
        %v1221 = vpow.pop %v1220
        %v1222 = vsel %vm677, %v1221, 0.0
        %1223 = vadd.xlane.f32.xlu0 %v1222
        %v1224 = vpop.xlane.xlu0 %1223
        %v1225 = vrcp.pop %v1224
        %v1226 = vmul.f32 %v1221, %v1225
        %v1227 = vpack.c.bf16 %v1226, %v1226
        %1228 = vrot.lane.b32.xlu0 %v673, 40
        %v1229 = vpop.permute.xlu0 %1228
        %v1231 = vsel %vm677, %v1227, 0
        %v1234 = vsel %vm749, %v1229, 0
        %1236 = vmatprep.subr.bf16.mxu0 0
        %1237 = vmatpush1.bf16.msra.mxu0 0
        %1238 = vmatprep.subr.bf16.mxu0 0
        %1239 = vmatpush1.bf16.msra.mxu0 0
        %1240 = vmatprep.subr.bf16.mxu0 0
        %1241 = vmatpush1.bf16.msra.mxu0 0
        %1242 = vmatprep.subr.bf16.mxu0 0
        %1243 = vmatpush1.bf16.msra.mxu0 0
        %1244 = vmatprep.subr.bf16.mxu0 0
        %1245 = vmatpush1.bf16.msra.mxu0 0
        %1246 = vmatprep.subr.bf16.mxu0 0
        %1247 = vmatpush1.bf16.msra.mxu0 0
        %1248 = vmatprep.subr.bf16.mxu0 0
        %1249 = vmatpush1.bf16.msra.mxu0 0
        %1250 = vmatprep.subr.bf16.mxu0 0
        %1251 = vmatpush1.bf16.msra.mxu0 %v1234
        %1252 = vmatprep.subr.bf16.mxu0 0
        %1253 = vmatpush2.bf16.msra.mxu0 0
        %1254 = vmatprep.subr.bf16.mxu0 0
        %1255 = vmatpush2.bf16.msra.mxu0 0
        %1256 = vmatprep.subr.bf16.mxu0 0
        %1257 = vmatpush2.bf16.msra.mxu0 0
        %1258 = vmatprep.subr.bf16.mxu0 0
        %1259 = vmatpush2.bf16.msra.mxu0 0
        %1260 = vmatprep.subr.bf16.mxu0 0
        %1261 = vmatpush2.bf16.msra.mxu0 0
        %1262 = vmatprep.subr.bf16.mxu0 0
        %1263 = vmatpush2.bf16.msra.mxu0 0
        %1264 = vmatprep.subr.bf16.mxu0 0
        %1265 = vmatpush2.bf16.msra.mxu0 0
        %1266 = vmatprep.subr.bf16.mxu0 0
        %1267 = vmatpush2.bf16.msra.mxu0 0
        %1268 = vmatprep.mubr.bf16.mxu0 0
        %1269 = vmatmul.mubr.bf16.gmra.mxu0 %v1231
        %v1270 = vpop.f32.mrf.mxu0
        %v1271 = vadd.f32 0.0, %v1270
        %v1272 = vpop.f32.mrf.mxu0
        %v1273 = vpop.f32.mrf.mxu0
        %v1274 = vpop.f32.mrf.mxu0
        %1275 = vdwg.mxu0
        %v1276 = vpack.c.bf16 %v1271, %v1271
        %s1277 = scalar_lea.vmem %s6, 12
        %v1278 = vld [vmem:[%s1277] sm:$0xf]
        %v1280 = vsel %vm677, %v1276, 0
        %v1283 = vsel %vm749, %v1278, 0
        %1285 = vmatprep.subr.bf16.mxu0 0
        %1286 = vmatpush1.bf16.msra.mxu0 0
        %1287 = vmatprep.subr.bf16.mxu0 0
        %1288 = vmatpush1.bf16.msra.mxu0 0
        %1289 = vmatprep.subr.bf16.mxu0 0
        %1290 = vmatpush1.bf16.msra.mxu0 0
        %1291 = vmatprep.subr.bf16.mxu0 0
        %1292 = vmatpush1.bf16.msra.mxu0 0
        %1293 = vmatprep.subr.bf16.mxu0 0
        %1294 = vmatpush1.bf16.msra.mxu0 0
        %1295 = vmatprep.subr.bf16.mxu0 0
        %1296 = vmatpush1.bf16.msra.mxu0 0
        %1297 = vmatprep.subr.bf16.mxu0 0
        %1298 = vmatpush1.bf16.msra.mxu0 0
        %1299 = vmatprep.subr.bf16.mxu0 0
        %1300 = vmatpush1.bf16.msra.mxu0 %v1283
        %1301 = vmatprep.subr.bf16.mxu0 0
        %1302 = vmatpush2.bf16.msra.mxu0 0
        %1303 = vmatprep.subr.bf16.mxu0 0
        %1304 = vmatpush2.bf16.msra.mxu0 0
        %1305 = vmatprep.subr.bf16.mxu0 0
        %1306 = vmatpush2.bf16.msra.mxu0 0
        %1307 = vmatprep.subr.bf16.mxu0 0
        %1308 = vmatpush2.bf16.msra.mxu0 0
        %1309 = vmatprep.subr.bf16.mxu0 0
        %1310 = vmatpush2.bf16.msra.mxu0 0
        %1311 = vmatprep.subr.bf16.mxu0 0
        %1312 = vmatpush2.bf16.msra.mxu0 0
        %1313 = vmatprep.subr.bf16.mxu0 0
        %1314 = vmatpush2.bf16.msra.mxu0 0
        %1315 = vmatprep.subr.bf16.mxu0 0
        %1316 = vmatpush2.bf16.msra.mxu0 0
        %1317 = vmatprep.mubr.bf16.mxu0 0
        %1318 = vmatmul.mubr.bf16.gmra.mxu0 %v1280
        %v1319 = vpop.f32.mrf.mxu0
        %v1320 = vadd.f32 0.0, %v1319
        %v1321 = vpop.f32.mrf.mxu0
        %v1322 = vpop.f32.mrf.mxu0
        %v1323 = vpop.f32.mrf.mxu0
        %1324 = vdwg.mxu0
        %v1325 = vadd.f32 %v1163, %v1320
        %v1326 = vld [vmem:[%s7] sm:$0x1]
        %v1328 = vlaneseq
        %v1329 = vshrl.u32 %v1328, 7
        %v1330 = vsub.s32 0, %v1329
        %v1331 = vrot.slane %v1326, %v1330
        %v1333 = vadd.f32 %v1325, %v1331
        %v1334 = vadd.f32 %v1333, %v601
        %v1335 = vld [vmem:[%s8] sm:$0x1]
        %v1336 = vld [vmem:[%s9] sm:$0x1]
        %v1337 = vsel %vm573, %v1334, 0.0
        %1338 = vadd.xlane.f32.xlu0 %v1337
        %v1339 = vpop.xlane.xlu0 %1338
        %v1340 = vmul.f32 %v1339, %v577
        %v1341 = vsub.f32 %v1334, %v1340
        %v1342 = vmul.f32 %v1341, %v1341
        %v1343 = vsel %vm573, %v1342, 0.0
        %1344 = vadd.xlane.f32.xlu0 %v1343
        %v1345 = vpop.xlane.xlu0 %1344
        %v1346 = vmul.f32 %v1345, %v577
        %v1347 = vadd.f32 %v1346, 1e-12
        %v1348 = vrsqrt.pop %v1347
        %v1349 = vmul.f32 %v1341, %v1348
        %v1351 = vlaneseq
        %v1352 = vshrl.u32 %v1351, 7
        %v1353 = vsub.s32 0, %v1352
        %v1354 = vrot.slane %v1335, %v1353
        %v1356 = vmul.f32 %v1349, %v1354
        %v1358 = vlaneseq
        %v1359 = vshrl.u32 %v1358, 7
        %v1360 = vsub.s32 0, %v1359
        %v1361 = vrot.slane %v1336, %v1360
        %v1363 = vadd.f32 %v1356, %v1361
        %v1364 = vld [vmem:[%s10] sm:$0xf]
        %v1365 = vld [vmem:[%s10 + $0x4] sm:$0xf]
        %v1366 = vld [vmem:[%s10 + $0x8] sm:$0xf]
        %v1367 = vld [vmem:[%s10 + $0xc] sm:$0xf]
        %v1368 = vpack.c.bf16 %v1363, %v1363
        %v1369 = vld [vmem:[%s11] sm:$0x1]
        %v1371 = vlaneseq
        %v1372 = vshrl.u32 %v1371, 7
        %v1373 = vsub.s32 0, %v1372
        %v1374 = vrot.slane %v1369, %v1373
        %v1380 = vunpack.c.l.b16 %v1364
        %v1381 = vunpack.c.l.b16 %v1365
        %v1382 = vunpack.c.l.b16 %v1366
        %v1383 = vunpack.c.l.b16 %v1367
        %v1384 = vpack.c.b16 %v1381, %v1380
        %v1385 = vpack.c.b16 %v1383, %v1382
        %v1389 = vsel %vm573, %v1368, 0
        %1391 = vmatprep.subr.bf16.mxu0 0
        %1392 = vmatpush1.bf16.msra.mxu0 0
        %1393 = vmatprep.subr.bf16.mxu0 0
        %1394 = vmatpush1.bf16.msra.mxu0 0
        %1395 = vmatprep.subr.bf16.mxu0 0
        %1396 = vmatpush1.bf16.msra.mxu0 0
        %1397 = vmatprep.subr.bf16.mxu0 0
        %1398 = vmatpush1.bf16.msra.mxu0 0
        %1399 = vmatprep.subr.bf16.mxu0 0
        %1400 = vmatpush1.bf16.msra.mxu0 0
        %1401 = vmatprep.subr.bf16.mxu0 0
        %1402 = vmatpush1.bf16.msra.mxu0 0
        %1403 = vmatprep.subr.bf16.mxu0 0
        %1404 = vmatpush1.bf16.msra.mxu0 %v1385
        %1405 = vmatprep.subr.bf16.mxu0 0
        %1406 = vmatpush1.bf16.msra.mxu0 %v1384
        %1407 = vmatprep.subr.bf16.mxu0 0
        %1408 = vmatpush2.bf16.msra.mxu0 0
        %1409 = vmatprep.subr.bf16.mxu0 0
        %1410 = vmatpush2.bf16.msra.mxu0 0
        %1411 = vmatprep.subr.bf16.mxu0 0
        %1412 = vmatpush2.bf16.msra.mxu0 0
        %1413 = vmatprep.subr.bf16.mxu0 0
        %1414 = vmatpush2.bf16.msra.mxu0 0
        %1415 = vmatprep.subr.bf16.mxu0 0
        %1416 = vmatpush2.bf16.msra.mxu0 0
        %1417 = vmatprep.subr.bf16.mxu0 0
        %1418 = vmatpush2.bf16.msra.mxu0 0
        %1419 = vmatprep.subr.bf16.mxu0 0
        %1420 = vmatpush2.bf16.msra.mxu0 0
        %1421 = vmatprep.subr.bf16.mxu0 0
        %1422 = vmatpush2.bf16.msra.mxu0 0
        %1423 = vmatprep.mubr.bf16.mxu0 0
        %1424 = vmatmul.mubr.bf16.gmra.mxu0 %v1389
        %v1425 = vpop.f32.mrf.mxu0
        %v1426 = vadd.f32 %v1374, %v1425
        %v1427 = vpop.f32.mrf.mxu0
        %v1428 = vpop.f32.mrf.mxu0
        %v1429 = vpop.f32.mrf.mxu0
        %1430 = vdwg.mxu0
        %v1431 = vmul.f32 %v1426, 0.5
        %v1432 = vmul.f32 %v1426, 0.70710677
        %v1433 = verf.f32.pop %v1432
        %v1434 = vadd.f32 %v1433, 1.0
        %v1435 = vmul.f32 %v1431, %v1434
        %v1436 = vld [vmem:[%s12] sm:$0xf]
        %v1437 = vld [vmem:[%s12 + $0x4] sm:$0xf]
        %v1438 = vld [vmem:[%s12 + $0x8] sm:$0xf]
        %v1439 = vld [vmem:[%s12 + $0xc] sm:$0xf]
        %v1440 = vld [vmem:[%s12 + $0x10] sm:$0xf]
        %v1441 = vld [vmem:[%s12 + $0x14] sm:$0xf]
        %v1442 = vld [vmem:[%s12 + $0x18] sm:$0xf]
        %v1443 = vld [vmem:[%s12 + $0x1c] sm:$0xf]
        %v1444 = vpack.c.bf16 %v1435, %v1435
        %v1445 = vld [vmem:[%s13] sm:$0x1]
        %v1447 = vlaneseq
        %v1448 = vshrl.u32 %v1447, 7
        %v1449 = vsub.s32 0, %v1448
        %v1450 = vrot.slane %v1445, %v1449
        %v1460 = vunpack.c.l.b16 %v1436
        %v1461 = vunpack.c.l.b16 %v1437
        %v1462 = vunpack.c.l.b16 %v1438
        %v1463 = vunpack.c.l.b16 %v1439
        %v1464 = vunpack.c.l.b16 %v1440
        %v1465 = vunpack.c.l.b16 %v1441
        %v1466 = vunpack.c.l.b16 %v1442
        %v1467 = vunpack.c.l.b16 %v1443
        %v1468 = vpack.c.b16 %v1461, %v1460
        %v1469 = vpack.c.b16 %v1463, %v1462
        %v1470 = vpack.c.b16 %v1465, %v1464
        %v1471 = vpack.c.b16 %v1467, %v1466
        %vm1476 = vcmask 523264
        %v1478 = vsel %vm1476, %v1444, 0
        %1480 = vmatprep.subr.bf16.mxu0 0
        %1481 = vmatpush1.bf16.msra.mxu0 0
        %1482 = vmatprep.subr.bf16.mxu0 0
        %1483 = vmatpush1.bf16.msra.mxu0 0
        %1484 = vmatprep.subr.bf16.mxu0 0
        %1485 = vmatpush1.bf16.msra.mxu0 0
        %1486 = vmatprep.subr.bf16.mxu0 0
        %1487 = vmatpush1.bf16.msra.mxu0 0
        %1488 = vmatprep.subr.bf16.mxu0 0
        %1489 = vmatpush1.bf16.msra.mxu0 %v1471
        %1490 = vmatprep.subr.bf16.mxu0 0
        %1491 = vmatpush1.bf16.msra.mxu0 %v1470
        %1492 = vmatprep.subr.bf16.mxu0 0
        %1493 = vmatpush1.bf16.msra.mxu0 %v1469
        %1494 = vmatprep.subr.bf16.mxu0 0
        %1495 = vmatpush1.bf16.msra.mxu0 %v1468
        %1496 = vmatprep.subr.bf16.mxu0 0
        %1497 = vmatpush2.bf16.msra.mxu0 0
        %1498 = vmatprep.subr.bf16.mxu0 0
        %1499 = vmatpush2.bf16.msra.mxu0 0
        %1500 = vmatprep.subr.bf16.mxu0 0
        %1501 = vmatpush2.bf16.msra.mxu0 0
        %1502 = vmatprep.subr.bf16.mxu0 0
        %1503 = vmatpush2.bf16.msra.mxu0 0
        %1504 = vmatprep.subr.bf16.mxu0 0
        %1505 = vmatpush2.bf16.msra.mxu0 0
        %1506 = vmatprep.subr.bf16.mxu0 0
        %1507 = vmatpush2.bf16.msra.mxu0 0
        %1508 = vmatprep.subr.bf16.mxu0 0
        %1509 = vmatpush2.bf16.msra.mxu0 0
        %1510 = vmatprep.subr.bf16.mxu0 0
        %1511 = vmatpush2.bf16.msra.mxu0 0
        %1512 = vmatprep.mubr.bf16.mxu0 0
        %1513 = vmatmul.mubr.bf16.gmra.mxu0 %v1478
        %v1514 = vpop.f32.mrf.mxu0
        %v1515 = vadd.f32 %v1450, %v1514
        %v1516 = vpop.f32.mrf.mxu0
        %v1517 = vpop.f32.mrf.mxu0
        %v1518 = vpop.f32.mrf.mxu0
        %1519 = vdwg.mxu0
        %v1520 = vadd.f32 %v1515, %v1363
        %v1521 = vld [vmem:[%s14] sm:$0x1]
        %v1522 = vld [vmem:[%s15] sm:$0x1]
        %v1523 = vsel %vm573, %v1520, 0.0
        %1524 = vadd.xlane.f32.xlu0 %v1523
        %v1525 = vpop.xlane.xlu0 %1524
        %v1526 = vmul.f32 %v1525, %v577
        %v1527 = vsub.f32 %v1520, %v1526
        %v1528 = vmul.f32 %v1527, %v1527
        %v1529 = vsel %vm573, %v1528, 0.0
        %1530 = vadd.xlane.f32.xlu0 %v1529
        %v1531 = vpop.xlane.xlu0 %1530
        %v1532 = vmul.f32 %v1531, %v577
        %v1533 = vadd.f32 %v1532, 1e-12
        %v1534 = vrsqrt.pop %v1533
        %v1535 = vmul.f32 %v1527, %v1534
        %v1537 = vlaneseq
        %v1538 = vshrl.u32 %v1537, 7
        %v1539 = vsub.s32 0, %v1538
        %v1540 = vrot.slane %v1521, %v1539
        %v1542 = vmul.f32 %v1535, %v1540
        %v1544 = vlaneseq
        %v1545 = vshrl.u32 %v1544, 7
        %v1546 = vsub.s32 0, %v1545
        %v1547 = vrot.slane %v1522, %v1546
        %v1549 = vadd.f32 %v1542, %v1547
        %1550 = vst.msk [vmem:[%s568] sm:$0xff] %vm573, %v1549
        %s1551 = sand.u32 %s386, 1
        %s1552 = scalar_lea.sflag [#allocation3], %s1551
        %s1553 = sand.u32 %s386, 1
        %s1554 = smul.addr %s1553, 8
        %s1555 = scalar_lea.vmem [#allocation2], %s1554
        %p1556 = scmp.lt.s32.totalorder %s32, 1
        %s1557 = scalar_select %p1556, %s32, 1
        %s1558 = smul.addr %s1557, 8
        %s1559 = scalar_lea.vmem %s17, %s1558
        // Predicated region
        $region85: #{_lambda_.2} parent=83 // pred_check
          %p1560 = pneg %p396
        $region86: #{_lambda_.2} parent=83 // pred_check_branch
          %1562 = sbr.rel (%p1560) target = $region88
        $region87: #{_lambda_.2} parent=83 // pred_region
          %s1564 = ssub.s32 128, 128
          %1565 = vsyncadd %s1552, %s1564
          %s1566 = smul.addr %s32, 128
          %s1567 = scalar_lea.hbm %s16, %s1566
          %s1569 = sshll.u32 %s1555, 4
          %s1570 = int_to_ptr.vmem [resolvable:$true] %s1569
          %1572 = dma.vmem_to_hbm [thread:$0]  %s1570, 128, %s1567, %s1552
        $region88: #{_lambda_.2} parent=83 // pred_fallthru
          _
        // Predicated region
        $region89: #{_lambda_.2} parent=83 // pred_check
          %p1573 = pneg %p422
        $region90: #{_lambda_.2} parent=83 // pred_check_branch
          %1575 = sbr.rel (%p1573) target = $region92
        $region91: #{_lambda_.2} parent=83 // pred_region
          _
        $region92: #{_lambda_.2} parent=83 // pred_fallthru
          _
      $region84: #{_lambda_.2} parent=5 // pred_fallthru
        _
      %p1576 = scmp.le.s32.totalorder 2, %s27
      // Predicated region
      $region93: #{_lambda_.2} parent=5 // pred_check
        %p1577 = pneg %p1576
      $region94: #{_lambda_.2} parent=5 // pred_check_branch
        %1579 = sbr.rel (%p1577) target = $region96
      $region95: #{_lambda_.2} parent=5 // pred_region
        %s1580 = ssub.s32 %s27, 2
        // Predicated region
        $region97: #{_lambda_.2} parent=95 // pred_check
          %p1581 = pneg %p402
        $region98: #{_lambda_.2} parent=95 // pred_check_branch
          %1583 = sbr.rel (%p1581) target = $region100
        $region99: #{_lambda_.2} parent=95 // pred_region
          %s1584 = sand.u32 %s387, 1
          %s1585 = scalar_lea.sflag [#allocation3], %s1584
          %s1586 = sand.u32 %s387, 1
          %s1587 = smul.addr %s1586, 8
          %s1588 = scalar_lea.vmem [#allocation2], %s1587
          %1589 = dma.done %s1585, 128
        $region100: #{_lambda_.2} parent=95 // pred_fallthru
          _
        // Predicated region
        $region101: #{_lambda_.2} parent=95 // pred_check
          %p1590 = pneg %p428
        $region102: #{_lambda_.2} parent=95 // pred_check_branch
          %1592 = sbr.rel (%p1590) target = $region104
        $region103: #{_lambda_.2} parent=95 // pred_region
          %p1593 = scmp.lt.s32.totalorder %s33, 1
          %s1594 = scalar_select %p1593, %s33, 1
          %s1595 = smul.addr %s1594, 8
          %s1596 = scalar_lea.vmem %s17, %s1595
        $region104: #{_lambda_.2} parent=95 // pred_fallthru
          _
      $region96: #{_lambda_.2} parent=5 // pred_fallthru
        _
    $region6: #{_lambda_.2} parent=1 // loop_footer
      %s31 = sadd.s32 1, %s27
    $region7: #{_lambda_.2} parent=1 // loop_footer_branch
      %26 = sbr.rel target = $region3
    $region8: #{_lambda_.2} parent=1 // loop_exit
      _
    %1597 = vsyncpa [#allocation3], 1
    %s1598 = scalar_lea.sflag [#allocation3], 1
    %1599 = vsyncpa %s1598, 1

// kernel: _lambda_.3
$region0: #{_lambda_.3}
  #allocation0 [shape = 'u32[]', space=smem, size = 0x4, offset = 0x4, fixed_abs, tag = 'smem constant byte address 0x4 - core index']
  #allocation1 [shape = 'u32[144,128]{1,0:T(1,128)}', space=vmem, size = 0x12000, scoped, tag = 'internal scratch']
  %s0 = inlined_call_operand.vmem [shape: f32[2,8,32], index: 0, kind: input, shape index: {}]
  %s1 = inlined_call_operand.vmem [shape: f32[2,1,8], index: 1, kind: input, shape index: {}]
  %s2 = inlined_call_operand.vmem [shape: bf16[32,96], index: 2, kind: input, shape index: {}]
  %s3 = inlined_call_operand.vmem [shape: f32[1,96], index: 3, kind: input, shape index: {}]
  %s4 = inlined_call_operand.vmem [shape: bf16[4,8,32], index: 4, kind: input, shape index: {}]
  %s5 = inlined_call_operand.vmem [shape: f32[1,32], index: 5, kind: input, shape index: {}]
  %s6 = inlined_call_operand.vmem [shape: f32[1,32], index: 6, kind: input, shape index: {}]
  %s7 = inlined_call_operand.vmem [shape: f32[1,32], index: 7, kind: input, shape index: {}]
  %s8 = inlined_call_operand.vmem [shape: bf16[32,64], index: 8, kind: input, shape index: {}]
  %s9 = inlined_call_operand.vmem [shape: f32[1,64], index: 9, kind: input, shape index: {}]
  %s10 = inlined_call_operand.vmem [shape: bf16[64,32], index: 10, kind: input, shape index: {}]
  %s11 = inlined_call_operand.vmem [shape: f32[1,32], index: 11, kind: input, shape index: {}]
  %s12 = inlined_call_operand.vmem [shape: f32[1,32], index: 12, kind: input, shape index: {}]
  %s13 = inlined_call_operand.vmem [shape: f32[1,32], index: 13, kind: input, shape index: {}]
  %s14 = inlined_call_operand.vmem [shape: bf16[32,32], index: 14, kind: input, shape index: {}]
  %s15 = inlined_call_operand.vmem [shape: f32[1,32], index: 15, kind: input, shape index: {}]
  %s16 = inlined_call_operand.vmem [shape: bf16[32,128], index: 16, kind: input, shape index: {}]
  %s17 = inlined_call_operand.vmem [shape: f32[1,128], index: 17, kind: input, shape index: {}]
  %s18 = inlined_call_operand.vmem [shape: f32[2,8,32], index: 18, kind: output, shape index: {0}]
  %s19 = inlined_call_operand.hbm [shape: f32[2,1,32], index: 19, kind: output, shape index: {1}]
  %s20 = inlined_call_operand.hbm [shape: f32[2,1,128], index: 20, kind: output, shape index: {2}]
  %21 = xla_tuple %s18, %s19, %s20
  %s22 = sld [smem:[#allocation0]]
  $region121: #{_lambda_.3} parent=0
    _
  %s24 = ssub.s32 1, %s22
  %s25 = scalar_select 0, %s24, %s22
  $region1: #{_lambda_.3} parent=0
    #allocation2 [shape = 'u8[1024]{0}', space=vmem, size = 0x400, scoped, tag = 'output window, operand 1']
    #allocation3 [shape = 's32[2]{0}', space=sflag, size = 0x8, scoped, tag = 'scoped memory for _lambda_.3']
    #allocation4 [shape = 'u8[1024]{0}', space=vmem, size = 0x400, scoped, tag = 'output window, operand 2']
    #allocation5 [shape = 's32[2]{0}', space=sflag, size = 0x8, scoped, tag = 'scoped memory for _lambda_.3']
    %26 = vsyncpa [#allocation3], 0
    %s27 = scalar_lea.sflag [#allocation3], 1
    %28 = vsyncpa %s27, 0
    %29 = vsyncpa [#allocation5], 0
    %s30 = scalar_lea.sflag [#allocation5], 1
    %31 = vsyncpa %s30, 0
    loop: start=0, step=1, limit=4
    $region2: #{_lambda_.3} parent=1 // loop_pre_header
      _
    $region3: #{_lambda_.3} parent=1 // loop_header
      %s33 = sphi 0, %s37
      %p34 = scmp.ge.s32.totalorder %s33, 4
      %s43 = sphi 0, %s45
      %s46 = sphi 0, %s43
      %s47 = sphi 0, %s46
      %s63 = sphi 0, %s47
      %s69 = sphi 0, %s71
      %s72 = sphi 0, %s69
      %s73 = sphi 0, %s72
      %s89 = sphi 0, %s73
      %s93 = sphi 0, %s93
      %s95 = sphi 0, %s93
      %s96 = sphi 0, %s95
      %s110 = sphi 0, %s96
      %s114 = sphi 0, %s114
      %s116 = sphi 0, %s114
      %s117 = sphi 0, %s116
      %s131 = sphi 0, %s117
      %s135 = sphi 0, %s135
      %s137 = sphi 0, %s135
      %s138 = sphi 0, %s137
      %s152 = sphi 0, %s138
      %s156 = sphi 0, %s156
      %s158 = sphi 0, %s156
      %s159 = sphi 0, %s158
      %s173 = sphi 0, %s159
      %s177 = sphi 0, %s177
      %s179 = sphi 0, %s177
      %s180 = sphi 0, %s179
      %s194 = sphi 0, %s180
      %s198 = sphi 0, %s198
      %s200 = sphi 0, %s198
      %s201 = sphi 0, %s200
      %s215 = sphi 0, %s201
      %s219 = sphi 0, %s219
      %s221 = sphi 0, %s219
      %s222 = sphi 0, %s221
      %s236 = sphi 0, %s222
      %s240 = sphi 0, %s240
      %s242 = sphi 0, %s240
      %s243 = sphi 0, %s242
      %s257 = sphi 0, %s243
      %s261 = sphi 0, %s261
      %s263 = sphi 0, %s261
      %s264 = sphi 0, %s263
      %s278 = sphi 0, %s264
      %s282 = sphi 0, %s282
      %s284 = sphi 0, %s282
      %s285 = sphi 0, %s284
      %s299 = sphi 0, %s285
      %s303 = sphi 0, %s303
      %s305 = sphi 0, %s303
      %s306 = sphi 0, %s305
      %s320 = sphi 0, %s306
      %s324 = sphi 0, %s324
      %s326 = sphi 0, %s324
      %s327 = sphi 0, %s326
      %s341 = sphi 0, %s327
      %s345 = sphi 0, %s345
      %s347 = sphi 0, %s345
      %s348 = sphi 0, %s347
      %s362 = sphi 0, %s348
      %s366 = sphi 0, %s366
      %s368 = sphi 0, %s366
      %s369 = sphi 0, %s368
      %s383 = sphi 0, %s369
      %s387 = sphi 0, %s387
      %s389 = sphi 0, %s387
      %s390 = sphi 0, %s389
      %s404 = sphi 0, %s390
      %s408 = sphi 0, %s408
      %s410 = sphi 0, %s408
      %s411 = sphi 0, %s410
      %s425 = sphi 0, %s411
      %s431 = sphi 0, %s433
      %s434 = sphi 0, %s431
      %s435 = sphi 0, %s434
      %s451 = sphi 0, %s435
      %s457 = sphi 0, %s459
      %s460 = sphi 0, %s457
      %s461 = sphi 0, %s460
      %s477 = sphi 0, %s461
      %s483 = sphi 0, %s485
      %s486 = sphi 0, %s483
      %s487 = sphi 0, %s486
      %s503 = sphi 0, %s487
    $region4: #{_lambda_.3} parent=1 // loop_header_branch
      %36 = sbr.rel (%p34) target = $region8
    $region5: #{_lambda_.3} parent=1 // loop_body
      %s38 = ssub.s32 %s33, 1
      %s39 = ssub.s32 %s33, 2
      %s40 = sadd.s32 %s33, 1
      %s41 = ssub.s32 %s33, %s40
      %p42 = scmp.eq.s32.totalorder %s41, 0
      %s44 = sadd.s32 %s43, 1
      %s45 = scalar_select %p42, %s43, %s44
      %p48 = pneg %p42
      %p49 = scmp.eq.s32.totalorder %s33, 1
      %p50 = por %p48, %p49
      %p51 = scmp.ne.s32.totalorder %s43, %s46
      %p52 = scmp.eq.s32.totalorder %s33, 0
      %p53 = por %p51, %p52
      %p54 = scmp.ne.s32.totalorder %s43, %s46
      %p55 = scmp.eq.s32.totalorder %s38, 1
      %p56 = por %p54, %p55
      %p57 = scmp.ne.s32.totalorder %s46, %s47
      %p58 = scmp.eq.s32.totalorder %s38, 0
      %p59 = por %p57, %p58
      %p60 = scmp.ne.s32.totalorder %s46, %s47
      %p61 = scmp.eq.s32.totalorder %s39, 1
      %p62 = por %p60, %p61
      %p64 = scmp.ne.s32.totalorder %s47, %s63
      %p65 = scmp.eq.s32.totalorder %s39, 0
      %p66 = por %p64, %p65
      %s67 = ssub.s32 %s33, %s40
      %p68 = scmp.eq.s32.totalorder %s67, 0
      %s70 = sadd.s32 %s69, 1
      %s71 = scalar_select %p68, %s69, %s70
      %p74 = pneg %p68
      %p75 = scmp.eq.s32.totalorder %s33, 1
      %p76 = por %p74, %p75
      %p77 = scmp.ne.s32.totalorder %s69, %s72
      %p78 = scmp.eq.s32.totalorder %s33, 0
      %p79 = por %p77, %p78
      %p80 = scmp.ne.s32.totalorder %s69, %s72
      %p81 = scmp.eq.s32.totalorder %s38, 1
      %p82 = por %p80, %p81
      %p83 = scmp.ne.s32.totalorder %s72, %s73
      %p84 = scmp.eq.s32.totalorder %s38, 0
      %p85 = por %p83, %p84
      %p86 = scmp.ne.s32.totalorder %s72, %s73
      %p87 = scmp.eq.s32.totalorder %s39, 1
      %p88 = por %p86, %p87
      %p90 = scmp.ne.s32.totalorder %s73, %s89
      %p91 = scmp.eq.s32.totalorder %s39, 0
      %p92 = por %p90, %p91
      %s94 = sadd.s32 %s93, 1
      %p97 = scmp.eq.s32.totalorder %s33, 1
      %p98 = scmp.ne.s32.totalorder %s93, %s95
      %p99 = scmp.eq.s32.totalorder %s33, 0
      %p100 = por %p98, %p99
      %p101 = scmp.ne.s32.totalorder %s93, %s95
      %p102 = scmp.eq.s32.totalorder %s38, 1
      %p103 = por %p101, %p102
      %p104 = scmp.ne.s32.totalorder %s95, %s96
      %p105 = scmp.eq.s32.totalorder %s38, 0
      %p106 = por %p104, %p105
      %p107 = scmp.ne.s32.totalorder %s95, %s96
      %p108 = scmp.eq.s32.totalorder %s39, 1
      %p109 = por %p107, %p108
      %p111 = scmp.ne.s32.totalorder %s96, %s110
      %p112 = scmp.eq.s32.totalorder %s39, 0
      %p113 = por %p111, %p112
      %s115 = sadd.s32 %s114, 1
      %p118 = scmp.eq.s32.totalorder %s33, 1
      %p119 = scmp.ne.s32.totalorder %s114, %s116
      %p120 = scmp.eq.s32.totalorder %s33, 0
      %p121 = por %p119, %p120
      %p122 = scmp.ne.s32.totalorder %s114, %s116
      %p123 = scmp.eq.s32.totalorder %s38, 1
      %p124 = por %p122, %p123
      %p125 = scmp.ne.s32.totalorder %s116, %s117
      %p126 = scmp.eq.s32.totalorder %s38, 0
      %p127 = por %p125, %p126
      %p128 = scmp.ne.s32.totalorder %s116, %s117
      %p129 = scmp.eq.s32.totalorder %s39, 1
      %p130 = por %p128, %p129
      %p132 = scmp.ne.s32.totalorder %s117, %s131
      %p133 = scmp.eq.s32.totalorder %s39, 0
      %p134 = por %p132, %p133
      %s136 = sadd.s32 %s135, 1
      %p139 = scmp.eq.s32.totalorder %s33, 1
      %p140 = scmp.ne.s32.totalorder %s135, %s137
      %p141 = scmp.eq.s32.totalorder %s33, 0
      %p142 = por %p140, %p141
      %p143 = scmp.ne.s32.totalorder %s135, %s137
      %p144 = scmp.eq.s32.totalorder %s38, 1
      %p145 = por %p143, %p144
      %p146 = scmp.ne.s32.totalorder %s137, %s138
      %p147 = scmp.eq.s32.totalorder %s38, 0
      %p148 = por %p146, %p147
      %p149 = scmp.ne.s32.totalorder %s137, %s138
      %p150 = scmp.eq.s32.totalorder %s39, 1
      %p151 = por %p149, %p150
      %p153 = scmp.ne.s32.totalorder %s138, %s152
      %p154 = scmp.eq.s32.totalorder %s39, 0
      %p155 = por %p153, %p154
      %s157 = sadd.s32 %s156, 1
      %p160 = scmp.eq.s32.totalorder %s33, 1
      %p161 = scmp.ne.s32.totalorder %s156, %s158
      %p162 = scmp.eq.s32.totalorder %s33, 0
      %p163 = por %p161, %p162
      %p164 = scmp.ne.s32.totalorder %s156, %s158
      %p165 = scmp.eq.s32.totalorder %s38, 1
      %p166 = por %p164, %p165
      %p167 = scmp.ne.s32.totalorder %s158, %s159
      %p168 = scmp.eq.s32.totalorder %s38, 0
      %p169 = por %p167, %p168
      %p170 = scmp.ne.s32.totalorder %s158, %s159
      %p171 = scmp.eq.s32.totalorder %s39, 1
      %p172 = por %p170, %p171
      %p174 = scmp.ne.s32.totalorder %s159, %s173
      %p175 = scmp.eq.s32.totalorder %s39, 0
      %p176 = por %p174, %p175
      %s178 = sadd.s32 %s177, 1
      %p181 = scmp.eq.s32.totalorder %s33, 1
      %p182 = scmp.ne.s32.totalorder %s177, %s179
      %p183 = scmp.eq.s32.totalorder %s33, 0
      %p184 = por %p182, %p183
      %p185 = scmp.ne.s32.totalorder %s177, %s179
      %p186 = scmp.eq.s32.totalorder %s38, 1
      %p187 = por %p185, %p186
      %p188 = scmp.ne.s32.totalorder %s179, %s180
      %p189 = scmp.eq.s32.totalorder %s38, 0
      %p190 = por %p188, %p189
      %p191 = scmp.ne.s32.totalorder %s179, %s180
      %p192 = scmp.eq.s32.totalorder %s39, 1
      %p193 = por %p191, %p192
      %p195 = scmp.ne.s32.totalorder %s180, %s194
      %p196 = scmp.eq.s32.totalorder %s39, 0
      %p197 = por %p195, %p196
      %s199 = sadd.s32 %s198, 1
      %p202 = scmp.eq.s32.totalorder %s33, 1
      %p203 = scmp.ne.s32.totalorder %s198, %s200
      %p204 = scmp.eq.s32.totalorder %s33, 0
      %p205 = por %p203, %p204
      %p206 = scmp.ne.s32.totalorder %s198, %s200
      %p207 = scmp.eq.s32.totalorder %s38, 1
      %p208 = por %p206, %p207
      %p209 = scmp.ne.s32.totalorder %s200, %s201
      %p210 = scmp.eq.s32.totalorder %s38, 0
      %p211 = por %p209, %p210
      %p212 = scmp.ne.s32.totalorder %s200, %s201
      %p213 = scmp.eq.s32.totalorder %s39, 1
      %p214 = por %p212, %p213
      %p216 = scmp.ne.s32.totalorder %s201, %s215
      %p217 = scmp.eq.s32.totalorder %s39, 0
      %p218 = por %p216, %p217
      %s220 = sadd.s32 %s219, 1
      %p223 = scmp.eq.s32.totalorder %s33, 1
      %p224 = scmp.ne.s32.totalorder %s219, %s221
      %p225 = scmp.eq.s32.totalorder %s33, 0
      %p226 = por %p224, %p225
      %p227 = scmp.ne.s32.totalorder %s219, %s221
      %p228 = scmp.eq.s32.totalorder %s38, 1
      %p229 = por %p227, %p228
      %p230 = scmp.ne.s32.totalorder %s221, %s222
      %p231 = scmp.eq.s32.totalorder %s38, 0
      %p232 = por %p230, %p231
      %p233 = scmp.ne.s32.totalorder %s221, %s222
      %p234 = scmp.eq.s32.totalorder %s39, 1
      %p235 = por %p233, %p234
      %p237 = scmp.ne.s32.totalorder %s222, %s236
      %p238 = scmp.eq.s32.totalorder %s39, 0
      %p239 = por %p237, %p238
      %s241 = sadd.s32 %s240, 1
      %p244 = scmp.eq.s32.totalorder %s33, 1
      %p245 = scmp.ne.s32.totalorder %s240, %s242
      %p246 = scmp.eq.s32.totalorder %s33, 0
      %p247 = por %p245, %p246
      %p248 = scmp.ne.s32.totalorder %s240, %s242
      %p249 = scmp.eq.s32.totalorder %s38, 1
      %p250 = por %p248, %p249
      %p251 = scmp.ne.s32.totalorder %s242, %s243
      %p252 = scmp.eq.s32.totalorder %s38, 0
      %p253 = por %p251, %p252
      %p254 = scmp.ne.s32.totalorder %s242, %s243
      %p255 = scmp.eq.s32.totalorder %s39, 1
      %p256 = por %p254, %p255
      %p258 = scmp.ne.s32.totalorder %s243, %s257
      %p259 = scmp.eq.s32.totalorder %s39, 0
      %p260 = por %p258, %p259
      %s262 = sadd.s32 %s261, 1
      %p265 = scmp.eq.s32.totalorder %s33, 1
      %p266 = scmp.ne.s32.totalorder %s261, %s263
      %p267 = scmp.eq.s32.totalorder %s33, 0
      %p268 = por %p266, %p267
      %p269 = scmp.ne.s32.totalorder %s261, %s263
      %p270 = scmp.eq.s32.totalorder %s38, 1
      %p271 = por %p269, %p270
      %p272 = scmp.ne.s32.totalorder %s263, %s264
      %p273 = scmp.eq.s32.totalorder %s38, 0
      %p274 = por %p272, %p273
      %p275 = scmp.ne.s32.totalorder %s263, %s264
      %p276 = scmp.eq.s32.totalorder %s39, 1
      %p277 = por %p275, %p276
      %p279 = scmp.ne.s32.totalorder %s264, %s278
      %p280 = scmp.eq.s32.totalorder %s39, 0
      %p281 = por %p279, %p280
      %s283 = sadd.s32 %s282, 1
      %p286 = scmp.eq.s32.totalorder %s33, 1
      %p287 = scmp.ne.s32.totalorder %s282, %s284
      %p288 = scmp.eq.s32.totalorder %s33, 0
      %p289 = por %p287, %p288
      %p290 = scmp.ne.s32.totalorder %s282, %s284
      %p291 = scmp.eq.s32.totalorder %s38, 1
      %p292 = por %p290, %p291
      %p293 = scmp.ne.s32.totalorder %s284, %s285
      %p294 = scmp.eq.s32.totalorder %s38, 0
      %p295 = por %p293, %p294
      %p296 = scmp.ne.s32.totalorder %s284, %s285
      %p297 = scmp.eq.s32.totalorder %s39, 1
      %p298 = por %p296, %p297
      %p300 = scmp.ne.s32.totalorder %s285, %s299
      %p301 = scmp.eq.s32.totalorder %s39, 0
      %p302 = por %p300, %p301
      %s304 = sadd.s32 %s303, 1
      %p307 = scmp.eq.s32.totalorder %s33, 1
      %p308 = scmp.ne.s32.totalorder %s303, %s305
      %p309 = scmp.eq.s32.totalorder %s33, 0
      %p310 = por %p308, %p309
      %p311 = scmp.ne.s32.totalorder %s303, %s305
      %p312 = scmp.eq.s32.totalorder %s38, 1
      %p313 = por %p311, %p312
      %p314 = scmp.ne.s32.totalorder %s305, %s306
      %p315 = scmp.eq.s32.totalorder %s38, 0
      %p316 = por %p314, %p315
      %p317 = scmp.ne.s32.totalorder %s305, %s306
      %p318 = scmp.eq.s32.totalorder %s39, 1
      %p319 = por %p317, %p318
      %p321 = scmp.ne.s32.totalorder %s306, %s320
      %p322 = scmp.eq.s32.totalorder %s39, 0
      %p323 = por %p321, %p322
      %s325 = sadd.s32 %s324, 1
      %p328 = scmp.eq.s32.totalorder %s33, 1
      %p329 = scmp.ne.s32.totalorder %s324, %s326
      %p330 = scmp.eq.s32.totalorder %s33, 0
      %p331 = por %p329, %p330
      %p332 = scmp.ne.s32.totalorder %s324, %s326
      %p333 = scmp.eq.s32.totalorder %s38, 1
      %p334 = por %p332, %p333
      %p335 = scmp.ne.s32.totalorder %s326, %s327
      %p336 = scmp.eq.s32.totalorder %s38, 0
      %p337 = por %p335, %p336
      %p338 = scmp.ne.s32.totalorder %s326, %s327
      %p339 = scmp.eq.s32.totalorder %s39, 1
      %p340 = por %p338, %p339
      %p342 = scmp.ne.s32.totalorder %s327, %s341
      %p343 = scmp.eq.s32.totalorder %s39, 0
      %p344 = por %p342, %p343
      %s346 = sadd.s32 %s345, 1
      %p349 = scmp.eq.s32.totalorder %s33, 1
      %p350 = scmp.ne.s32.totalorder %s345, %s347
      %p351 = scmp.eq.s32.totalorder %s33, 0
      %p352 = por %p350, %p351
      %p353 = scmp.ne.s32.totalorder %s345, %s347
      %p354 = scmp.eq.s32.totalorder %s38, 1
      %p355 = por %p353, %p354
      %p356 = scmp.ne.s32.totalorder %s347, %s348
      %p357 = scmp.eq.s32.totalorder %s38, 0
      %p358 = por %p356, %p357
      %p359 = scmp.ne.s32.totalorder %s347, %s348
      %p360 = scmp.eq.s32.totalorder %s39, 1
      %p361 = por %p359, %p360
      %p363 = scmp.ne.s32.totalorder %s348, %s362
      %p364 = scmp.eq.s32.totalorder %s39, 0
      %p365 = por %p363, %p364
      %s367 = sadd.s32 %s366, 1
      %p370 = scmp.eq.s32.totalorder %s33, 1
      %p371 = scmp.ne.s32.totalorder %s366, %s368
      %p372 = scmp.eq.s32.totalorder %s33, 0
      %p373 = por %p371, %p372
      %p374 = scmp.ne.s32.totalorder %s366, %s368
      %p375 = scmp.eq.s32.totalorder %s38, 1
      %p376 = por %p374, %p375
      %p377 = scmp.ne.s32.totalorder %s368, %s369
      %p378 = scmp.eq.s32.totalorder %s38, 0
      %p379 = por %p377, %p378
      %p380 = scmp.ne.s32.totalorder %s368, %s369
      %p381 = scmp.eq.s32.totalorder %s39, 1
      %p382 = por %p380, %p381
      %p384 = scmp.ne.s32.totalorder %s369, %s383
      %p385 = scmp.eq.s32.totalorder %s39, 0
      %p386 = por %p384, %p385
      %s388 = sadd.s32 %s387, 1
      %p391 = scmp.eq.s32.totalorder %s33, 1
      %p392 = scmp.ne.s32.totalorder %s387, %s389
      %p393 = scmp.eq.s32.totalorder %s33, 0
      %p394 = por %p392, %p393
      %p395 = scmp.ne.s32.totalorder %s387, %s389
      %p396 = scmp.eq.s32.totalorder %s38, 1
      %p397 = por %p395, %p396
      %p398 = scmp.ne.s32.totalorder %s389, %s390
      %p399 = scmp.eq.s32.totalorder %s38, 0
      %p400 = por %p398, %p399
      %p401 = scmp.ne.s32.totalorder %s389, %s390
      %p402 = scmp.eq.s32.totalorder %s39, 1
      %p403 = por %p401, %p402
      %p405 = scmp.ne.s32.totalorder %s390, %s404
      %p406 = scmp.eq.s32.totalorder %s39, 0
      %p407 = por %p405, %p406
      %s409 = sadd.s32 %s408, 1
      %p412 = scmp.eq.s32.totalorder %s33, 1
      %p413 = scmp.ne.s32.totalorder %s408, %s410
      %p414 = scmp.eq.s32.totalorder %s33, 0
      %p415 = por %p413, %p414
      %p416 = scmp.ne.s32.totalorder %s408, %s410
      %p417 = scmp.eq.s32.totalorder %s38, 1
      %p418 = por %p416, %p417
      %p419 = scmp.ne.s32.totalorder %s410, %s411
      %p420 = scmp.eq.s32.totalorder %s38, 0
      %p421 = por %p419, %p420
      %p422 = scmp.ne.s32.totalorder %s410, %s411
      %p423 = scmp.eq.s32.totalorder %s39, 1
      %p424 = por %p422, %p423
      %p426 = scmp.ne.s32.totalorder %s411, %s425
      %p427 = scmp.eq.s32.totalorder %s39, 0
      %p428 = por %p426, %p427
      %s429 = ssub.s32 %s33, %s40
      %p430 = scmp.eq.s32.totalorder %s429, 0
      %s432 = sadd.s32 %s431, 1
      %s433 = scalar_select %p430, %s431, %s432
      %p436 = pneg %p430
      %p437 = scmp.eq.s32.totalorder %s33, 1
      %p438 = por %p436, %p437
      %p439 = scmp.ne.s32.totalorder %s431, %s434
      %p440 = scmp.eq.s32.totalorder %s33, 0
      %p441 = por %p439, %p440
      %p442 = scmp.ne.s32.totalorder %s431, %s434
      %p443 = scmp.eq.s32.totalorder %s38, 1
      %p444 = por %p442, %p443
      %p445 = scmp.ne.s32.totalorder %s434, %s435
      %p446 = scmp.eq.s32.totalorder %s38, 0
      %p447 = por %p445, %p446
      %p448 = scmp.ne.s32.totalorder %s434, %s435
      %p449 = scmp.eq.s32.totalorder %s39, 1
      %p450 = por %p448, %p449
      %p452 = scmp.ne.s32.totalorder %s435, %s451
      %p453 = scmp.eq.s32.totalorder %s39, 0
      %p454 = por %p452, %p453
      %s455 = ssub.s32 %s33, %s40
      %p456 = scmp.eq.s32.totalorder %s455, 0
      %s458 = sadd.s32 %s457, 1
      %s459 = scalar_select %p456, %s457, %s458
      %p462 = pneg %p456
      %p463 = scmp.eq.s32.totalorder %s33, 1
      %p464 = por %p462, %p463
      %p465 = scmp.ne.s32.totalorder %s457, %s460
      %p466 = scmp.eq.s32.totalorder %s33, 0
      %p467 = por %p465, %p466
      %p468 = scmp.ne.s32.totalorder %s457, %s460
      %p469 = scmp.eq.s32.totalorder %s38, 1
      %p470 = por %p468, %p469
      %p471 = scmp.ne.s32.totalorder %s460, %s461
      %p472 = scmp.eq.s32.totalorder %s38, 0
      %p473 = por %p471, %p472
      %p474 = scmp.ne.s32.totalorder %s460, %s461
      %p475 = scmp.eq.s32.totalorder %s39, 1
      %p476 = por %p474, %p475
      %p478 = scmp.ne.s32.totalorder %s461, %s477
      %p479 = scmp.eq.s32.totalorder %s39, 0
      %p480 = por %p478, %p479
      %s481 = ssub.s32 %s33, %s40
      %p482 = scmp.eq.s32.totalorder %s481, 0
      %s484 = sadd.s32 %s483, 1
      %s485 = scalar_select %p482, %s483, %s484
      %p488 = pneg %p482
      %p489 = scmp.eq.s32.totalorder %s33, 1
      %p490 = por %p488, %p489
      %p491 = scmp.ne.s32.totalorder %s483, %s486
      %p492 = scmp.eq.s32.totalorder %s33, 0
      %p493 = por %p491, %p492
      %p494 = scmp.ne.s32.totalorder %s483, %s486
      %p495 = scmp.eq.s32.totalorder %s38, 1
      %p496 = por %p494, %p495
      %p497 = scmp.ne.s32.totalorder %s486, %s487
      %p498 = scmp.eq.s32.totalorder %s38, 0
      %p499 = por %p497, %p498
      %p500 = scmp.ne.s32.totalorder %s486, %s487
      %p501 = scmp.eq.s32.totalorder %s39, 1
      %p502 = por %p500, %p501
      %p504 = scmp.ne.s32.totalorder %s487, %s503
      %p505 = scmp.eq.s32.totalorder %s39, 0
      %p506 = por %p504, %p505
      %p507 = scmp.le.s32.totalorder 1, %s33
      %p508 = scmp.lt.s32.totalorder %s33, 3
      %p509 = pnand %p507, %p508
      %p510 = pneg %p509
      // Predicated region
      $region9: #{_lambda_.3} parent=5 // pred_check
        _
      $region10: #{_lambda_.3} parent=5 // pred_check_branch
        %512 = sbr.rel (%p509) target = $region12
      $region11: #{_lambda_.3} parent=5 // pred_region
        %s513 = ssub.s32 %s33, 1
        // Predicated region
        $region13: #{_lambda_.3} parent=11 // pred_check
          %p514 = pneg %p106
        $region14: #{_lambda_.3} parent=11 // pred_check_branch
          %516 = sbr.rel (%p514) target = $region16
        $region15: #{_lambda_.3} parent=11 // pred_region
          _
        $region16: #{_lambda_.3} parent=11 // pred_fallthru
          _
        // Predicated region
        $region17: #{_lambda_.3} parent=11 // pred_check
          %p517 = pneg %p127
        $region18: #{_lambda_.3} parent=11 // pred_check_branch
          %519 = sbr.rel (%p517) target = $region20
        $region19: #{_lambda_.3} parent=11 // pred_region
          _
        $region20: #{_lambda_.3} parent=11 // pred_fallthru
          _
        // Predicated region
        $region21: #{_lambda_.3} parent=11 // pred_check
          %p520 = pneg %p148
        $region22: #{_lambda_.3} parent=11 // pred_check_branch
          %522 = sbr.rel (%p520) target = $region24
        $region23: #{_lambda_.3} parent=11 // pred_region
          _
        $region24: #{_lambda_.3} parent=11 // pred_fallthru
          _
        // Predicated region
        $region25: #{_lambda_.3} parent=11 // pred_check
          %p523 = pneg %p169
        $region26: #{_lambda_.3} parent=11 // pred_check_branch
          %525 = sbr.rel (%p523) target = $region28
        $region27: #{_lambda_.3} parent=11 // pred_region
          _
        $region28: #{_lambda_.3} parent=11 // pred_fallthru
          _
        // Predicated region
        $region29: #{_lambda_.3} parent=11 // pred_check
          %p526 = pneg %p190
        $region30: #{_lambda_.3} parent=11 // pred_check_branch
          %528 = sbr.rel (%p526) target = $region32
        $region31: #{_lambda_.3} parent=11 // pred_region
          _
        $region32: #{_lambda_.3} parent=11 // pred_fallthru
          _
        // Predicated region
        $region33: #{_lambda_.3} parent=11 // pred_check
          %p529 = pneg %p211
        $region34: #{_lambda_.3} parent=11 // pred_check_branch
          %531 = sbr.rel (%p529) target = $region36
        $region35: #{_lambda_.3} parent=11 // pred_region
          _
        $region36: #{_lambda_.3} parent=11 // pred_fallthru
          _
        // Predicated region
        $region37: #{_lambda_.3} parent=11 // pred_check
          %p532 = pneg %p232
        $region38: #{_lambda_.3} parent=11 // pred_check_branch
          %534 = sbr.rel (%p532) target = $region40
        $region39: #{_lambda_.3} parent=11 // pred_region
          _
        $region40: #{_lambda_.3} parent=11 // pred_fallthru
          _
        // Predicated region
        $region41: #{_lambda_.3} parent=11 // pred_check
          %p535 = pneg %p253
        $region42: #{_lambda_.3} parent=11 // pred_check_branch
          %537 = sbr.rel (%p535) target = $region44
        $region43: #{_lambda_.3} parent=11 // pred_region
          _
        $region44: #{_lambda_.3} parent=11 // pred_fallthru
          _
        // Predicated region
        $region45: #{_lambda_.3} parent=11 // pred_check
          %p538 = pneg %p274
        $region46: #{_lambda_.3} parent=11 // pred_check_branch
          %540 = sbr.rel (%p538) target = $region48
        $region47: #{_lambda_.3} parent=11 // pred_region
          _
        $region48: #{_lambda_.3} parent=11 // pred_fallthru
          _
        // Predicated region
        $region49: #{_lambda_.3} parent=11 // pred_check
          %p541 = pneg %p295
        $region50: #{_lambda_.3} parent=11 // pred_check_branch
          %543 = sbr.rel (%p541) target = $region52
        $region51: #{_lambda_.3} parent=11 // pred_region
          _
        $region52: #{_lambda_.3} parent=11 // pred_fallthru
          _
        // Predicated region
        $region53: #{_lambda_.3} parent=11 // pred_check
          %p544 = pneg %p316
        $region54: #{_lambda_.3} parent=11 // pred_check_branch
          %546 = sbr.rel (%p544) target = $region56
        $region55: #{_lambda_.3} parent=11 // pred_region
          _
        $region56: #{_lambda_.3} parent=11 // pred_fallthru
          _
        // Predicated region
        $region57: #{_lambda_.3} parent=11 // pred_check
          %p547 = pneg %p337
        $region58: #{_lambda_.3} parent=11 // pred_check_branch
          %549 = sbr.rel (%p547) target = $region60
        $region59: #{_lambda_.3} parent=11 // pred_region
          _
        $region60: #{_lambda_.3} parent=11 // pred_fallthru
          _
        // Predicated region
        $region61: #{_lambda_.3} parent=11 // pred_check
          %p550 = pneg %p358
        $region62: #{_lambda_.3} parent=11 // pred_check_branch
          %552 = sbr.rel (%p550) target = $region64
        $region63: #{_lambda_.3} parent=11 // pred_region
          _
        $region64: #{_lambda_.3} parent=11 // pred_fallthru
          _
        // Predicated region
        $region65: #{_lambda_.3} parent=11 // pred_check
          %p553 = pneg %p379
        $region66: #{_lambda_.3} parent=11 // pred_check_branch
          %555 = sbr.rel (%p553) target = $region68
        $region67: #{_lambda_.3} parent=11 // pred_region
          _
        $region68: #{_lambda_.3} parent=11 // pred_fallthru
          _
        // Predicated region
        $region69: #{_lambda_.3} parent=11 // pred_check
          %p556 = pneg %p400
        $region70: #{_lambda_.3} parent=11 // pred_check_branch
          %558 = sbr.rel (%p556) target = $region72
        $region71: #{_lambda_.3} parent=11 // pred_region
          _
        $region72: #{_lambda_.3} parent=11 // pred_fallthru
          _
        // Predicated region
        $region73: #{_lambda_.3} parent=11 // pred_check
          %p559 = pneg %p421
        $region74: #{_lambda_.3} parent=11 // pred_check_branch
          %561 = sbr.rel (%p559) target = $region76
        $region75: #{_lambda_.3} parent=11 // pred_region
          _
        $region76: #{_lambda_.3} parent=11 // pred_fallthru
          _
      $region12: #{_lambda_.3} parent=5 // pred_fallthru
        _
      %p562 = scmp.lt.s32.totalorder %s33, 2
      // Predicated region
      $region77: #{_lambda_.3} parent=5 // pred_check
        %p563 = pneg %p562
      $region78: #{_lambda_.3} parent=5 // pred_check_branch
        %565 = sbr.rel (%p563) target = $region80
      $region79: #{_lambda_.3} parent=5 // pred_region
        // Predicated region
        $region81: #{_lambda_.3} parent=79 // pred_check
          %p566 = pneg %p53
        $region82: #{_lambda_.3} parent=79 // pred_check_branch
          %568 = sbr.rel (%p566) target = $region84
        $region83: #{_lambda_.3} parent=79 // pred_region
          %p569 = scmp.lt.s32.totalorder %s33, 1
          %s570 = scalar_select %p569, %s33, 1
          %s571 = smul.addr %s570, 8
          %s572 = scalar_lea.vmem %s0, %s571
        $region84: #{_lambda_.3} parent=79 // pred_fallthru
          _
        // Predicated region
        $region85: #{_lambda_.3} parent=79 // pred_check
          %p573 = pneg %p79
        $region86: #{_lambda_.3} parent=79 // pred_check_branch
          %575 = sbr.rel (%p573) target = $region88
        $region87: #{_lambda_.3} parent=79 // pred_region
          %p576 = scmp.lt.s32.totalorder %s33, 1
          %s577 = scalar_select %p576, %s33, 1
          %s578 = scalar_lea.vmem %s1, %s577
        $region88: #{_lambda_.3} parent=79 // pred_fallthru
          _
      $region80: #{_lambda_.3} parent=5 // pred_fallthru
        _
      %p579 = scmp.le.s32.totalorder 1, %s33
      %p580 = scmp.lt.s32.totalorder %s33, 3
      %p581 = pnand %p579, %p580
      %p582 = pneg %p581
      // Predicated region
      $region89: #{_lambda_.3} parent=5 // pred_check
        _
      $region90: #{_lambda_.3} parent=5 // pred_check_branch
        %584 = sbr.rel (%p581) target = $region92
      $region91: #{_lambda_.3} parent=5 // pred_region
        %s585 = ssub.s32 %s33, 1
        %p586 = scmp.lt.s32.totalorder %s38, 1
        %s587 = scalar_select %p586, %s38, 1
        %s588 = smul.addr %s587, 8
        %s589 = scalar_lea.vmem %s0, %s588
        %p590 = pneg %p59
        %p591 = pneg %p56
        %p592 = scmp.lt.s32.totalorder %s38, 1
        %s593 = scalar_select %p592, %s38, 1
        %s594 = scalar_lea.vmem %s1, %s593
        %p595 = pneg %p85
        %p596 = pneg %p82
        %p597 = pneg %p106
        %p598 = pneg %p103
        %p599 = pneg %p127
        %p600 = pneg %p124
        %p601 = pneg %p148
        %p602 = pneg %p145
        %p603 = pneg %p169
        %p604 = pneg %p166
        %p605 = pneg %p190
        %p606 = pneg %p187
        %p607 = pneg %p211
        %p608 = pneg %p208
        %p609 = pneg %p232
        %p610 = pneg %p229
        %p611 = pneg %p253
        %p612 = pneg %p250
        %p613 = pneg %p274
        %p614 = pneg %p271
        %p615 = pneg %p295
        %p616 = pneg %p292
        %p617 = pneg %p316
        %p618 = pneg %p313
        %p619 = pneg %p337
        %p620 = pneg %p334
        %p621 = pneg %p358
        %p622 = pneg %p355
        %p623 = pneg %p379
        %p624 = pneg %p376
        %p625 = pneg %p400
        %p626 = pneg %p397
        %p627 = pneg %p421
        %p628 = pneg %p418
        %p629 = pneg %p447
        %p630 = pneg %p444
        %p631 = scmp.lt.s32.totalorder %s38, 1
        %s632 = scalar_select %p631, %s38, 1
        %s633 = smul.addr %s632, 8
        %s634 = scalar_lea.vmem %s18, %s633
        %p635 = pneg %p473
        %p636 = pneg %p470
        %s637 = sand.u32 %s460, 1
        %s638 = scalar_lea.sflag [#allocation3], %s637
        %s639 = sand.u32 %s460, 1
        %s640 = scalar_lea.vmem [#allocation2], %s639
        %p641 = pneg %p499
        %p642 = pneg %p496
        %s643 = sand.u32 %s486, 1
        %s644 = scalar_lea.sflag [#allocation5], %s643
        %s645 = sand.u32 %s486, 1
        %s646 = scalar_lea.vmem [#allocation4], %s645
        %p647 = scmp.lt.s32.totalorder %s38, 1
        %s648 = scalar_select %p647, %s38, 1
        %s649 = smul.addr %s648, 8
        %s650 = scalar_lea.vmem %s0, %s649
        %p651 = scmp.lt.s32.totalorder %s38, 1
        %s652 = scalar_select %p651, %s38, 1
        %s653 = scalar_lea.vmem %s1, %s652
        %p654 = scmp.lt.s32.totalorder %s38, 1
        %s655 = scalar_select %p654, %s38, 1
        %s656 = smul.addr %s655, 8
        %s657 = scalar_lea.vmem %s18, %s656
        %v659 = vld [vmem:[%s650] sm:$0xff]
        %v660 = vld [vmem:[%s2] sm:$0xf]
        %v661 = vld [vmem:[%s2 + $0x4] sm:$0xf]
        %v662 = vld [vmem:[%s2 + $0x8] sm:$0xf]
        %v663 = vld [vmem:[%s2 + $0xc] sm:$0xf]
        %v664 = vpack.c.bf16 %v659, %v659
        %v665 = vld [vmem:[%s3] sm:$0x1]
        %v667 = vlaneseq
        %v668 = vshrl.u32 %v667, 7
        %v669 = vsub.s32 0, %v668
        %v670 = vrot.slane %v665, %v669
        %v676 = vunpack.c.l.b16 %v660
        %v677 = vunpack.c.l.b16 %v661
        %v678 = vunpack.c.l.b16 %v662
        %v679 = vunpack.c.l.b16 %v663
        %v680 = vpack.c.b16 %v677, %v676
        %v681 = vpack.c.b16 %v679, %v678
        %vm684 = vcmask 261120
        %v686 = vsel %vm684, %v664, 0
        %688 = vmatprep.subr.bf16.mxu0 0
        %689 = vmatpush1.bf16.msra.mxu0 0
        %690 = vmatprep.subr.bf16.mxu0 0
        %691 = vmatpush1.bf16.msra.mxu0 0
        %692 = vmatprep.subr.bf16.mxu0 0
        %693 = vmatpush1.bf16.msra.mxu0 0
        %694 = vmatprep.subr.bf16.mxu0 0
        %695 = vmatpush1.bf16.msra.mxu0 0
        %696 = vmatprep.subr.bf16.mxu0 0
        %697 = vmatpush1.bf16.msra.mxu0 0
        %698 = vmatprep.subr.bf16.mxu0 0
        %699 = vmatpush1.bf16.msra.mxu0 0
        %700 = vmatprep.subr.bf16.mxu0 0
        %701 = vmatpush1.bf16.msra.mxu0 %v681
        %702 = vmatprep.subr.bf16.mxu0 0
        %703 = vmatpush1.bf16.msra.mxu0 %v680
        %704 = vmatprep.subr.bf16.mxu0 0
        %705 = vmatpush2.bf16.msra.mxu0 0
        %706 = vmatprep.subr.bf16.mxu0 0
        %707 = vmatpush2.bf16.msra.mxu0 0
        %708 = vmatprep.subr.bf16.mxu0 0
        %709 = vmatpush2.bf16.msra.mxu0 0
        %710 = vmatprep.subr.bf16.mxu0 0
        %711 = vmatpush2.bf16.msra.mxu0 0
        %712 = vmatprep.subr.bf16.mxu0 0
        %713 = vmatpush2.bf16.msra.mxu0 0
        %714 = vmatprep.subr.bf16.mxu0 0
        %715 = vmatpush2.bf16.msra.mxu0 0
        %716 = vmatprep.subr.bf16.mxu0 0
        %717 = vmatpush2.bf16.msra.mxu0 0
        %718 = vmatprep.subr.bf16.mxu0 0
        %719 = vmatpush2.bf16.msra.mxu0 0
        %720 = vmatprep.mubr.bf16.mxu0 0
        %721 = vmatmul.mubr.bf16.gmra.mxu0 %v686
        %v722 = vpop.f32.mrf.mxu0
        %v723 = vadd.f32 %v670, %v722
        %v724 = vpop.f32.mrf.mxu0
        %v725 = vpop.f32.mrf.mxu0
        %v726 = vpop.f32.mrf.mxu0
        %727 = vdwg.mxu0
        %v728 = vld [vmem:[%s653] sm:$0x1]
        %v729 = vsub.f32 1.0, %v728
        %v730 = vmul.f32 %v729, -1e+09
        %v731 = vpack.c.bf16 %v723, %v723
        %733 = vrot.lane.b32.xlu0 %v731, 96
        %v734 = vpop.permute.xlu0 %733
        %vm735 = vcmask 64512
        %v737 = vsel %vm735, %v731, 0
        %v740 = vsel %vm735, %v734, 0
        %742 = vmatprep.subr.bf16.mxu0 0
        %743 = vmatpush1.bf16.xpose.msra.mxu0 0
        %744 = vmatprep.subr.bf16.mxu0 0
        %745 = vmatpush1.bf16.xpose.msra.mxu0 0
        %746 = vmatprep.subr.bf16.mxu0 0
        %747 = vmatpush1.bf16.xpose.msra.mxu0 0
        %748 = vmatprep.subr.bf16.mxu0 0
        %749 = vmatpush1.bf16.xpose.msra.mxu0 0
        %750 = vmatprep.subr.bf16.mxu0 0
        %751 = vmatpush1.bf16.xpose.msra.mxu0 0
        %752 = vmatprep.subr.bf16.mxu0 0
        %753 = vmatpush1.bf16.xpose.msra.mxu0 0
        %754 = vmatprep.subr.bf16.mxu0 0
        %755 = vmatpush1.bf16.xpose.msra.mxu0 0
        %756 = vmatprep.subr.bf16.mxu0 0
        %757 = vmatpush1.bf16.xpose.msra.mxu0 %v740
        %758 = vmatprep.subr.bf16.mxu0 0
        %759 = vmatpush2.bf16.xpose.msra.mxu0 0
        %760 = vmatprep.subr.bf16.mxu0 0
        %761 = vmatpush2.bf16.xpose.msra.mxu0 0
        %762 = vmatprep.subr.bf16.mxu0 0
        %763 = vmatpush2.bf16.xpose.msra.mxu0 0
        %764 = vmatprep.subr.bf16.mxu0 0
        %765 = vmatpush2.bf16.xpose.msra.mxu0 0
        %766 = vmatprep.subr.bf16.mxu0 0
        %767 = vmatpush2.bf16.xpose.msra.mxu0 0
        %768 = vmatprep.subr.bf16.mxu0 0
        %769 = vmatpush2.bf16.xpose.msra.mxu0 0
        %770 = vmatprep.subr.bf16.mxu0 0
        %771 = vmatpush2.bf16.xpose.msra.mxu0 0
        %772 = vmatprep.subr.bf16.mxu0 0
        %773 = vmatpush2.bf16.xpose.msra.mxu0 0
        %774 = vmatprep.mubr.bf16.mxu0 0
        %775 = vmatmul.mubr.bf16.gmra.mxu0 %v737
        %v776 = vpop.f32.mrf.mxu0
        %v777 = vadd.f32 0.0, %v776
        %v778 = vpop.f32.mrf.mxu0
        %v779 = vpop.f32.mrf.mxu0
        %v780 = vpop.f32.mrf.mxu0
        %781 = vdwg.mxu0
        %v782 = vmul.f32 %v777, 0.35355338
        %v784 = vlaneseq
        %v785 = vshrl.u32 %v784, 7
        %v786 = vsub.s32 0, %v785
        %v787 = vrot.slane %v730, %v786
        %v789 = vadd.f32 %v782, %v787
        %v790 = vsel %vm735, %v789, -inf
        %791 = vmax.xlane.f32.xlu0 %v790
        %v792 = vpop.xlane.xlu0 %791
        %v793 = vsub.f32 %v789, %v792
        %v794 = vmul.f32 %v793, 1.442695
        %v795 = vpow.pop %v794
        %v796 = vsel %vm735, %v795, 0.0
        %797 = vadd.xlane.f32.xlu0 %v796
        %v798 = vpop.xlane.xlu0 %797
        %v799 = vrcp.pop %v798
        %v800 = vmul.f32 %v795, %v799
        %v801 = vpack.c.bf16 %v800, %v800
        %802 = vrot.lane.b32.xlu0 %v731, 64
        %v803 = vpop.permute.xlu0 %802
        %v805 = vsel %vm735, %v801, 0
        %vm807 = vcmask 1043456
        %v809 = vsel %vm807, %v803, 0
        %811 = vmatprep.subr.bf16.mxu0 0
        %812 = vmatpush1.bf16.msra.mxu0 0
        %813 = vmatprep.subr.bf16.mxu0 0
        %814 = vmatpush1.bf16.msra.mxu0 0
        %815 = vmatprep.subr.bf16.mxu0 0
        %816 = vmatpush1.bf16.msra.mxu0 0
        %817 = vmatprep.subr.bf16.mxu0 0
        %818 = vmatpush1.bf16.msra.mxu0 0
        %819 = vmatprep.subr.bf16.mxu0 0
        %820 = vmatpush1.bf16.msra.mxu0 0
        %821 = vmatprep.subr.bf16.mxu0 0
        %822 = vmatpush1.bf16.msra.mxu0 0
        %823 = vmatprep.subr.bf16.mxu0 0
        %824 = vmatpush1.bf16.msra.mxu0 0
        %825 = vmatprep.subr.bf16.mxu0 0
        %826 = vmatpush1.bf16.msra.mxu0 %v809
        %827 = vmatprep.subr.bf16.mxu0 0
        %828 = vmatpush2.bf16.msra.mxu0 0
        %829 = vmatprep.subr.bf16.mxu0 0
        %830 = vmatpush2.bf16.msra.mxu0 0
        %831 = vmatprep.subr.bf16.mxu0 0
        %832 = vmatpush2.bf16.msra.mxu0 0
        %833 = vmatprep.subr.bf16.mxu0 0
        %834 = vmatpush2.bf16.msra.mxu0 0
        %835 = vmatprep.subr.bf16.mxu0 0
        %836 = vmatpush2.bf16.msra.mxu0 0
        %837 = vmatprep.subr.bf16.mxu0 0
        %838 = vmatpush2.bf16.msra.mxu0 0
        %839 = vmatprep.subr.bf16.mxu0 0
        %840 = vmatpush2.bf16.msra.mxu0 0
        %841 = vmatprep.subr.bf16.mxu0 0
        %842 = vmatpush2.bf16.msra.mxu0 0
        %843 = vmatprep.mubr.bf16.mxu0 0
        %844 = vmatmul.mubr.bf16.gmra.mxu0 %v805
        %v845 = vpop.f32.mrf.mxu0
        %v846 = vadd.f32 0.0, %v845
        %v847 = vpop.f32.mrf.mxu0
        %v848 = vpop.f32.mrf.mxu0
        %v849 = vpop.f32.mrf.mxu0
        %850 = vdwg.mxu0
        %v851 = vpack.c.bf16 %v846, %v846
        %v852 = vld [vmem:[%s4] sm:$0xf]
        %853 = vrot.lane.b32.xlu0 %v731, 120
        %v854 = vpop.permute.xlu0 %853
        %855 = vrot.lane.b32.xlu0 %v731, 88
        %v856 = vpop.permute.xlu0 %855
        %v858 = vsel %vm735, %v854, 0
        %v861 = vsel %vm735, %v856, 0
        %863 = vmatprep.subr.bf16.mxu0 0
        %864 = vmatpush1.bf16.xpose.msra.mxu0 0
        %865 = vmatprep.subr.bf16.mxu0 0
        %866 = vmatpush1.bf16.xpose.msra.mxu0 0
        %867 = vmatprep.subr.bf16.mxu0 0
        %868 = vmatpush1.bf16.xpose.msra.mxu0 0
        %869 = vmatprep.subr.bf16.mxu0 0
        %870 = vmatpush1.bf16.xpose.msra.mxu0 0
        %871 = vmatprep.subr.bf16.mxu0 0
        %872 = vmatpush1.bf16.xpose.msra.mxu0 0
        %873 = vmatprep.subr.bf16.mxu0 0
        %874 = vmatpush1.bf16.xpose.msra.mxu0 0
        %875 = vmatprep.subr.bf16.mxu0 0
        %876 = vmatpush1.bf16.xpose.msra.mxu0 0
        %877 = vmatprep.subr.bf16.mxu0 0
        %878 = vmatpush1.bf16.xpose.msra.mxu0 %v861
        %879 = vmatprep.subr.bf16.mxu0 0
        %880 = vmatpush2.bf16.xpose.msra.mxu0 0
        %881 = vmatprep.subr.bf16.mxu0 0
        %882 = vmatpush2.bf16.xpose.msra.mxu0 0
        %883 = vmatprep.subr.bf16.mxu0 0
        %884 = vmatpush2.bf16.xpose.msra.mxu0 0
        %885 = vmatprep.subr.bf16.mxu0 0
        %886 = vmatpush2.bf16.xpose.msra.mxu0 0
        %887 = vmatprep.subr.bf16.mxu0 0
        %888 = vmatpush2.bf16.xpose.msra.mxu0 0
        %889 = vmatprep.subr.bf16.mxu0 0
        %890 = vmatpush2.bf16.xpose.msra.mxu0 0
        %891 = vmatprep.subr.bf16.mxu0 0
        %892 = vmatpush2.bf16.xpose.msra.mxu0 0
        %893 = vmatprep.subr.bf16.mxu0 0
        %894 = vmatpush2.bf16.xpose.msra.mxu0 0
        %895 = vmatprep.mubr.bf16.mxu0 0
        %896 = vmatmul.mubr.bf16.gmra.mxu0 %v858
        %v897 = vpop.f32.mrf.mxu0
        %v898 = vadd.f32 0.0, %v897
        %v899 = vpop.f32.mrf.mxu0
        %v900 = vpop.f32.mrf.mxu0
        %v901 = vpop.f32.mrf.mxu0
        %902 = vdwg.mxu0
        %v903 = vmul.f32 %v898, 0.35355338
        %v904 = vadd.f32 %v903, %v787
        %v905 = vsel %vm735, %v904, -inf
        %906 = vmax.xlane.f32.xlu0 %v905
        %v907 = vpop.xlane.xlu0 %906
        %v908 = vsub.f32 %v904, %v907
        %v909 = vmul.f32 %v908, 1.442695
        %v910 = vpow.pop %v909
        %v911 = vsel %vm735, %v910, 0.0
        %912 = vadd.xlane.f32.xlu0 %v911
        %v913 = vpop.xlane.xlu0 %912
        %v914 = vrcp.pop %v913
        %v915 = vmul.f32 %v910, %v914
        %v916 = vpack.c.bf16 %v915, %v915
        %917 = vrot.lane.b32.xlu0 %v731, 56
        %v918 = vpop.permute.xlu0 %917
        %v920 = vsel %vm735, %v916, 0
        %v923 = vsel %vm807, %v918, 0
        %925 = vmatprep.subr.bf16.mxu0 0
        %926 = vmatpush1.bf16.msra.mxu0 0
        %927 = vmatprep.subr.bf16.mxu0 0
        %928 = vmatpush1.bf16.msra.mxu0 0
        %929 = vmatprep.subr.bf16.mxu0 0
        %930 = vmatpush1.bf16.msra.mxu0 0
        %931 = vmatprep.subr.bf16.mxu0 0
        %932 = vmatpush1.bf16.msra.mxu0 0
        %933 = vmatprep.subr.bf16.mxu0 0
        %934 = vmatpush1.bf16.msra.mxu0 0
        %935 = vmatprep.subr.bf16.mxu0 0
        %936 = vmatpush1.bf16.msra.mxu0 0
        %937 = vmatprep.subr.bf16.mxu0 0
        %938 = vmatpush1.bf16.msra.mxu0 0
        %939 = vmatprep.subr.bf16.mxu0 0
        %940 = vmatpush1.bf16.msra.mxu0 %v923
        %941 = vmatprep.subr.bf16.mxu0 0
        %942 = vmatpush2.bf16.msra.mxu0 0
        %943 = vmatprep.subr.bf16.mxu0 0
        %944 = vmatpush2.bf16.msra.mxu0 0
        %945 = vmatprep.subr.bf16.mxu0 0
        %946 = vmatpush2.bf16.msra.mxu0 0
        %947 = vmatprep.subr.bf16.mxu0 0
        %948 = vmatpush2.bf16.msra.mxu0 0
        %949 = vmatprep.subr.bf16.mxu0 0
        %950 = vmatpush2.bf16.msra.mxu0 0
        %951 = vmatprep.subr.bf16.mxu0 0
        %952 = vmatpush2.bf16.msra.mxu0 0
        %953 = vmatprep.subr.bf16.mxu0 0
        %954 = vmatpush2.bf16.msra.mxu0 0
        %955 = vmatprep.subr.bf16.mxu0 0
        %956 = vmatpush2.bf16.msra.mxu0 0
        %957 = vmatprep.mubr.bf16.mxu0 0
        %958 = vmatmul.mubr.bf16.gmra.mxu0 %v920
        %v959 = vpop.f32.mrf.mxu0
        %v960 = vadd.f32 0.0, %v959
        %v961 = vpop.f32.mrf.mxu0
        %v962 = vpop.f32.mrf.mxu0
        %v963 = vpop.f32.mrf.mxu0
        %964 = vdwg.mxu0
        %v965 = vpack.c.bf16 %v960, %v960
        %s966 = scalar_lea.vmem %s4, 4
        %v967 = vld [vmem:[%s966] sm:$0xf]
        %v969 = vsel %vm735, %v965, 0
        %v972 = vsel %vm807, %v967, 0
        %974 = vmatprep.subr.bf16.mxu0 0
        %975 = vmatpush1.bf16.msra.mxu0 0
        %976 = vmatprep.subr.bf16.mxu0 0
        %977 = vmatpush1.bf16.msra.mxu0 0
        %978 = vmatprep.subr.bf16.mxu0 0
        %979 = vmatpush1.bf16.msra.mxu0 0
        %980 = vmatprep.subr.bf16.mxu0 0
        %981 = vmatpush1.bf16.msra.mxu0 0
        %982 = vmatprep.subr.bf16.mxu0 0
        %983 = vmatpush1.bf16.msra.mxu0 0
        %984 = vmatprep.subr.bf16.mxu0 0
        %985 = vmatpush1.bf16.msra.mxu0 0
        %986 = vmatprep.subr.bf16.mxu0 0
        %987 = vmatpush1.bf16.msra.mxu0 0
        %988 = vmatprep.subr.bf16.mxu0 0
        %989 = vmatpush1.bf16.msra.mxu0 %v972
        %990 = vmatprep.subr.bf16.mxu0 0
        %991 = vmatpush2.bf16.msra.mxu0 0
        %992 = vmatprep.subr.bf16.mxu0 0
        %993 = vmatpush2.bf16.msra.mxu0 0
        %994 = vmatprep.subr.bf16.mxu0 0
        %995 = vmatpush2.bf16.msra.mxu0 0
        %996 = vmatprep.subr.bf16.mxu0 0
        %997 = vmatpush2.bf16.msra.mxu0 0
        %998 = vmatprep.subr.bf16.mxu0 0
        %999 = vmatpush2.bf16.msra.mxu0 0
        %1000 = vmatprep.subr.bf16.mxu0 0
        %1001 = vmatpush2.bf16.msra.mxu0 0
        %1002 = vmatprep.subr.bf16.mxu0 0
        %1003 = vmatpush2.bf16.msra.mxu0 0
        %1004 = vmatprep.subr.bf16.mxu0 0
        %1005 = vmatpush2.bf16.msra.mxu0 0
        %1006 = vmatprep.mubr.bf16.mxu0 0
        %1007 = vmatmul.mubr.bf16.gmra.mxu0 %v969
        %v1008 = vpop.f32.mrf.mxu0
        %v1009 = vadd.f32 0.0, %v1008
        %v1010 = vpop.f32.mrf.mxu0
        %v1011 = vpop.f32.mrf.mxu0
        %v1012 = vpop.f32.mrf.mxu0
        %1013 = vdwg.mxu0
        %v1015 = vsel %vm735, %v851, 0
        %v1018 = vsel %vm807, %v852, 0
        %1020 = vmatprep.subr.bf16.mxu0 0
        %1021 = vmatpush1.bf16.msra.mxu0 0
        %1022 = vmatprep.subr.bf16.mxu0 0
        %1023 = vmatpush1.bf16.msra.mxu0 0
        %1024 = vmatprep.subr.bf16.mxu0 0
        %1025 = vmatpush1.bf16.msra.mxu0 0
        %1026 = vmatprep.subr.bf16.mxu0 0
        %1027 = vmatpush1.bf16.msra.mxu0 0
        %1028 = vmatprep.subr.bf16.mxu0 0
        %1029 = vmatpush1.bf16.msra.mxu0 0
        %1030 = vmatprep.subr.bf16.mxu0 0
        %1031 = vmatpush1.bf16.msra.mxu0 0
        %1032 = vmatprep.subr.bf16.mxu0 0
        %1033 = vmatpush1.bf16.msra.mxu0 0
        %1034 = vmatprep.subr.bf16.mxu0 0
        %1035 = vmatpush1.bf16.msra.mxu0 %v1018
        %1036 = vmatprep.subr.bf16.mxu0 0
        %1037 = vmatpush2.bf16.msra.mxu0 0
        %1038 = vmatprep.subr.bf16.mxu0 0
        %1039 = vmatpush2.bf16.msra.mxu0 0
        %1040 = vmatprep.subr.bf16.mxu0 0
        %1041 = vmatpush2.bf16.msra.mxu0 0
        %1042 = vmatprep.subr.bf16.mxu0 0
        %1043 = vmatpush2.bf16.msra.mxu0 0
        %1044 = vmatprep.subr.bf16.mxu0 0
        %1045 = vmatpush2.bf16.msra.mxu0 0
        %1046 = vmatprep.subr.bf16.mxu0 0
        %1047 = vmatpush2.bf16.msra.mxu0 0
        %1048 = vmatprep.subr.bf16.mxu0 0
        %1049 = vmatpush2.bf16.msra.mxu0 0
        %1050 = vmatprep.subr.bf16.mxu0 0
        %1051 = vmatpush2.bf16.msra.mxu0 0
        %1052 = vmatprep.mubr.bf16.mxu0 0
        %1053 = vmatmul.mubr.bf16.gmra.mxu0 %v1015
        %v1054 = vpop.f32.mrf.mxu0
        %v1055 = vadd.f32 %v1009, %v1054
        %v1056 = vpop.f32.mrf.mxu0
        %v1057 = vpop.f32.mrf.mxu0
        %v1058 = vpop.f32.mrf.mxu0
        %1059 = vdwg.mxu0
        %1060 = vrot.lane.b32.xlu0 %v731, 112
        %v1061 = vpop.permute.xlu0 %1060
        %1062 = vrot.lane.b32.xlu0 %v731, 80
        %v1063 = vpop.permute.xlu0 %1062
        %v1065 = vsel %vm735, %v1061, 0
        %v1068 = vsel %vm735, %v1063, 0
        %1070 = vmatprep.subr.bf16.mxu0 0
        %1071 = vmatpush1.bf16.xpose.msra.mxu0 0
        %1072 = vmatprep.subr.bf16.mxu0 0
        %1073 = vmatpush1.bf16.xpose.msra.mxu0 0
        %1074 = vmatprep.subr.bf16.mxu0 0
        %1075 = vmatpush1.bf16.xpose.msra.mxu0 0
        %1076 = vmatprep.subr.bf16.mxu0 0
        %1077 = vmatpush1.bf16.xpose.msra.mxu0 0
        %1078 = vmatprep.subr.bf16.mxu0 0
        %1079 = vmatpush1.bf16.xpose.msra.mxu0 0
        %1080 = vmatprep.subr.bf16.mxu0 0
        %1081 = vmatpush1.bf16.xpose.msra.mxu0 0
        %1082 = vmatprep.subr.bf16.mxu0 0
        %1083 = vmatpush1.bf16.xpose.msra.mxu0 0
        %1084 = vmatprep.subr.bf16.mxu0 0
        %1085 = vmatpush1.bf16.xpose.msra.mxu0 %v1068
        %1086 = vmatprep.subr.bf16.mxu0 0
        %1087 = vmatpush2.bf16.xpose.msra.mxu0 0
        %1088 = vmatprep.subr.bf16.mxu0 0
        %1089 = vmatpush2.bf16.xpose.msra.mxu0 0
        %1090 = vmatprep.subr.bf16.mxu0 0
        %1091 = vmatpush2.bf16.xpose.msra.mxu0 0
        %1092 = vmatprep.subr.bf16.mxu0 0
        %1093 = vmatpush2.bf16.xpose.msra.mxu0 0
        %1094 = vmatprep.subr.bf16.mxu0 0
        %1095 = vmatpush2.bf16.xpose.msra.mxu0 0
        %1096 = vmatprep.subr.bf16.mxu0 0
        %1097 = vmatpush2.bf16.xpose.msra.mxu0 0
        %1098 = vmatprep.subr.bf16.mxu0 0
        %1099 = vmatpush2.bf16.xpose.msra.mxu0 0
        %1100 = vmatprep.subr.bf16.mxu0 0
        %1101 = vmatpush2.bf16.xpose.msra.mxu0 0
        %1102 = vmatprep.mubr.bf16.mxu0 0
        %1103 = vmatmul.mubr.bf16.gmra.mxu0 %v1065
        %v1104 = vpop.f32.mrf.mxu0
        %v1105 = vadd.f32 0.0, %v1104
        %v1106 = vpop.f32.mrf.mxu0
        %v1107 = vpop.f32.mrf.mxu0
        %v1108 = vpop.f32.mrf.mxu0
        %1109 = vdwg.mxu0
        %v1110 = vmul.f32 %v1105, 0.35355338
        %v1111 = vadd.f32 %v1110, %v787
        %v1112 = vsel %vm735, %v1111, -inf
        %1113 = vmax.xlane.f32.xlu0 %v1112
        %v1114 = vpop.xlane.xlu0 %1113
        %v1115 = vsub.f32 %v1111, %v1114
        %v1116 = vmul.f32 %v1115, 1.442695
        %v1117 = vpow.pop %v1116
        %v1118 = vsel %vm735, %v1117, 0.0
        %1119 = vadd.xlane.f32.xlu0 %v1118
        %v1120 = vpop.xlane.xlu0 %1119
        %v1121 = vrcp.pop %v1120
        %v1122 = vmul.f32 %v1117, %v1121
        %v1123 = vpack.c.bf16 %v1122, %v1122
        %1124 = vrot.lane.b32.xlu0 %v731, 48
        %v1125 = vpop.permute.xlu0 %1124
        %v1127 = vsel %vm735, %v1123, 0
        %v1130 = vsel %vm807, %v1125, 0
        %1132 = vmatprep.subr.bf16.mxu0 0
        %1133 = vmatpush1.bf16.msra.mxu0 0
        %1134 = vmatprep.subr.bf16.mxu0 0
        %1135 = vmatpush1.bf16.msra.mxu0 0
        %1136 = vmatprep.subr.bf16.mxu0 0
        %1137 = vmatpush1.bf16.msra.mxu0 0
        %1138 = vmatprep.subr.bf16.mxu0 0
        %1139 = vmatpush1.bf16.msra.mxu0 0
        %1140 = vmatprep.subr.bf16.mxu0 0
        %1141 = vmatpush1.bf16.msra.mxu0 0
        %1142 = vmatprep.subr.bf16.mxu0 0
        %1143 = vmatpush1.bf16.msra.mxu0 0
        %1144 = vmatprep.subr.bf16.mxu0 0
        %1145 = vmatpush1.bf16.msra.mxu0 0
        %1146 = vmatprep.subr.bf16.mxu0 0
        %1147 = vmatpush1.bf16.msra.mxu0 %v1130
        %1148 = vmatprep.subr.bf16.mxu0 0
        %1149 = vmatpush2.bf16.msra.mxu0 0
        %1150 = vmatprep.subr.bf16.mxu0 0
        %1151 = vmatpush2.bf16.msra.mxu0 0
        %1152 = vmatprep.subr.bf16.mxu0 0
        %1153 = vmatpush2.bf16.msra.mxu0 0
        %1154 = vmatprep.subr.bf16.mxu0 0
        %1155 = vmatpush2.bf16.msra.mxu0 0
        %1156 = vmatprep.subr.bf16.mxu0 0
        %1157 = vmatpush2.bf16.msra.mxu0 0
        %1158 = vmatprep.subr.bf16.mxu0 0
        %1159 = vmatpush2.bf16.msra.mxu0 0
        %1160 = vmatprep.subr.bf16.mxu0 0
        %1161 = vmatpush2.bf16.msra.mxu0 0
        %1162 = vmatprep.subr.bf16.mxu0 0
        %1163 = vmatpush2.bf16.msra.mxu0 0
        %1164 = vmatprep.mubr.bf16.mxu0 0
        %1165 = vmatmul.mubr.bf16.gmra.mxu0 %v1127
        %v1166 = vpop.f32.mrf.mxu0
        %v1167 = vadd.f32 0.0, %v1166
        %v1168 = vpop.f32.mrf.mxu0
        %v1169 = vpop.f32.mrf.mxu0
        %v1170 = vpop.f32.mrf.mxu0
        %1171 = vdwg.mxu0
        %v1172 = vpack.c.bf16 %v1167, %v1167
        %s1173 = scalar_lea.vmem %s4, 8
        %v1174 = vld [vmem:[%s1173] sm:$0xf]
        %v1176 = vsel %vm735, %v1172, 0
        %v1179 = vsel %vm807, %v1174, 0
        %1181 = vmatprep.subr.bf16.mxu0 0
        %1182 = vmatpush1.bf16.msra.mxu0 0
        %1183 = vmatprep.subr.bf16.mxu0 0
        %1184 = vmatpush1.bf16.msra.mxu0 0
        %1185 = vmatprep.subr.bf16.mxu0 0
        %1186 = vmatpush1.bf16.msra.mxu0 0
        %1187 = vmatprep.subr.bf16.mxu0 0
        %1188 = vmatpush1.bf16.msra.mxu0 0
        %1189 = vmatprep.subr.bf16.mxu0 0
        %1190 = vmatpush1.bf16.msra.mxu0 0
        %1191 = vmatprep.subr.bf16.mxu0 0
        %1192 = vmatpush1.bf16.msra.mxu0 0
        %1193 = vmatprep.subr.bf16.mxu0 0
        %1194 = vmatpush1.bf16.msra.mxu0 0
        %1195 = vmatprep.subr.bf16.mxu0 0
        %1196 = vmatpush1.bf16.msra.mxu0 %v1179
        %1197 = vmatprep.subr.bf16.mxu0 0
        %1198 = vmatpush2.bf16.msra.mxu0 0
        %1199 = vmatprep.subr.bf16.mxu0 0
        %1200 = vmatpush2.bf16.msra.mxu0 0
        %1201 = vmatprep.subr.bf16.mxu0 0
        %1202 = vmatpush2.bf16.msra.mxu0 0
        %1203 = vmatprep.subr.bf16.mxu0 0
        %1204 = vmatpush2.bf16.msra.mxu0 0
        %1205 = vmatprep.subr.bf16.mxu0 0
        %1206 = vmatpush2.bf16.msra.mxu0 0
        %1207 = vmatprep.subr.bf16.mxu0 0
        %1208 = vmatpush2.bf16.msra.mxu0 0
        %1209 = vmatprep.subr.bf16.mxu0 0
        %1210 = vmatpush2.bf16.msra.mxu0 0
        %1211 = vmatprep.subr.bf16.mxu0 0
        %1212 = vmatpush2.bf16.msra.mxu0 0
        %1213 = vmatprep.mubr.bf16.mxu0 0
        %1214 = vmatmul.mubr.bf16.gmra.mxu0 %v1176
        %v1215 = vpop.f32.mrf.mxu0
        %v1216 = vadd.f32 0.0, %v1215
        %v1217 = vpop.f32.mrf.mxu0
        %v1218 = vpop.f32.mrf.mxu0
        %v1219 = vpop.f32.mrf.mxu0
        %1220 = vdwg.mxu0
        %v1221 = vadd.f32 %v1055, %v1216
        %1222 = vrot.lane.b32.xlu0 %v731, 104
        %v1223 = vpop.permute.xlu0 %1222
        %1224 = vrot.lane.b32.xlu0 %v731, 72
        %v1225 = vpop.permute.xlu0 %1224
        %v1227 = vsel %vm735, %v1223, 0
        %v1230 = vsel %vm735, %v1225, 0
        %1232 = vmatprep.subr.bf16.mxu0 0
        %1233 = vmatpush1.bf16.xpose.msra.mxu0 0
        %1234 = vmatprep.subr.bf16.mxu0 0
        %1235 = vmatpush1.bf16.xpose.msra.mxu0 0
        %1236 = vmatprep.subr.bf16.mxu0 0
        %1237 = vmatpush1.bf16.xpose.msra.mxu0 0
        %1238 = vmatprep.subr.bf16.mxu0 0
        %1239 = vmatpush1.bf16.xpose.msra.mxu0 0
        %1240 = vmatprep.subr.bf16.mxu0 0
        %1241 = vmatpush1.bf16.xpose.msra.mxu0 0
        %1242 = vmatprep.subr.bf16.mxu0 0
        %1243 = vmatpush1.bf16.xpose.msra.mxu0 0
        %1244 = vmatprep.subr.bf16.mxu0 0
        %1245 = vmatpush1.bf16.xpose.msra.mxu0 0
        %1246 = vmatprep.subr.bf16.mxu0 0
        %1247 = vmatpush1.bf16.xpose.msra.mxu0 %v1230
        %1248 = vmatprep.subr.bf16.mxu0 0
        %1249 = vmatpush2.bf16.xpose.msra.mxu0 0
        %1250 = vmatprep.subr.bf16.mxu0 0
        %1251 = vmatpush2.bf16.xpose.msra.mxu0 0
        %1252 = vmatprep.subr.bf16.mxu0 0
        %1253 = vmatpush2.bf16.xpose.msra.mxu0 0
        %1254 = vmatprep.subr.bf16.mxu0 0
        %1255 = vmatpush2.bf16.xpose.msra.mxu0 0
        %1256 = vmatprep.subr.bf16.mxu0 0
        %1257 = vmatpush2.bf16.xpose.msra.mxu0 0
        %1258 = vmatprep.subr.bf16.mxu0 0
        %1259 = vmatpush2.bf16.xpose.msra.mxu0 0
        %1260 = vmatprep.subr.bf16.mxu0 0
        %1261 = vmatpush2.bf16.xpose.msra.mxu0 0
        %1262 = vmatprep.subr.bf16.mxu0 0
        %1263 = vmatpush2.bf16.xpose.msra.mxu0 0
        %1264 = vmatprep.mubr.bf16.mxu0 0
        %1265 = vmatmul.mubr.bf16.gmra.mxu0 %v1227
        %v1266 = vpop.f32.mrf.mxu0
        %v1267 = vadd.f32 0.0, %v1266
        %v1268 = vpop.f32.mrf.mxu0
        %v1269 = vpop.f32.mrf.mxu0
        %v1270 = vpop.f32.mrf.mxu0
        %1271 = vdwg.mxu0
        %v1272 = vmul.f32 %v1267, 0.35355338
        %v1273 = vadd.f32 %v1272, %v787
        %v1274 = vsel %vm735, %v1273, -inf
        %1275 = vmax.xlane.f32.xlu0 %v1274
        %v1276 = vpop.xlane.xlu0 %1275
        %v1277 = vsub.f32 %v1273, %v1276
        %v1278 = vmul.f32 %v1277, 1.442695
        %v1279 = vpow.pop %v1278
        %v1280 = vsel %vm735, %v1279, 0.0
        %1281 = vadd.xlane.f32.xlu0 %v1280
        %v1282 = vpop.xlane.xlu0 %1281
        %v1283 = vrcp.pop %v1282
        %v1284 = vmul.f32 %v1279, %v1283
        %v1285 = vpack.c.bf16 %v1284, %v1284
        %1286 = vrot.lane.b32.xlu0 %v731, 40
        %v1287 = vpop.permute.xlu0 %1286
        %v1289 = vsel %vm735, %v1285, 0
        %v1292 = vsel %vm807, %v1287, 0
        %1294 = vmatprep.subr.bf16.mxu0 0
        %1295 = vmatpush1.bf16.msra.mxu0 0
        %1296 = vmatprep.subr.bf16.mxu0 0
        %1297 = vmatpush1.bf16.msra.mxu0 0
        %1298 = vmatprep.subr.bf16.mxu0 0
        %1299 = vmatpush1.bf16.msra.mxu0 0
        %1300 = vmatprep.subr.bf16.mxu0 0
        %1301 = vmatpush1.bf16.msra.mxu0 0
        %1302 = vmatprep.subr.bf16.mxu0 0
        %1303 = vmatpush1.bf16.msra.mxu0 0
        %1304 = vmatprep.subr.bf16.mxu0 0
        %1305 = vmatpush1.bf16.msra.mxu0 0
        %1306 = vmatprep.subr.bf16.mxu0 0
        %1307 = vmatpush1.bf16.msra.mxu0 0
        %1308 = vmatprep.subr.bf16.mxu0 0
        %1309 = vmatpush1.bf16.msra.mxu0 %v1292
        %1310 = vmatprep.subr.bf16.mxu0 0
        %1311 = vmatpush2.bf16.msra.mxu0 0
        %1312 = vmatprep.subr.bf16.mxu0 0
        %1313 = vmatpush2.bf16.msra.mxu0 0
        %1314 = vmatprep.subr.bf16.mxu0 0
        %1315 = vmatpush2.bf16.msra.mxu0 0
        %1316 = vmatprep.subr.bf16.mxu0 0
        %1317 = vmatpush2.bf16.msra.mxu0 0
        %1318 = vmatprep.subr.bf16.mxu0 0
        %1319 = vmatpush2.bf16.msra.mxu0 0
        %1320 = vmatprep.subr.bf16.mxu0 0
        %1321 = vmatpush2.bf16.msra.mxu0 0
        %1322 = vmatprep.subr.bf16.mxu0 0
        %1323 = vmatpush2.bf16.msra.mxu0 0
        %1324 = vmatprep.subr.bf16.mxu0 0
        %1325 = vmatpush2.bf16.msra.mxu0 0
        %1326 = vmatprep.mubr.bf16.mxu0 0
        %1327 = vmatmul.mubr.bf16.gmra.mxu0 %v1289
        %v1328 = vpop.f32.mrf.mxu0
        %v1329 = vadd.f32 0.0, %v1328
        %v1330 = vpop.f32.mrf.mxu0
        %v1331 = vpop.f32.mrf.mxu0
        %v1332 = vpop.f32.mrf.mxu0
        %1333 = vdwg.mxu0
        %v1334 = vpack.c.bf16 %v1329, %v1329
        %s1335 = scalar_lea.vmem %s4, 12
        %v1336 = vld [vmem:[%s1335] sm:$0xf]
        %v1338 = vsel %vm735, %v1334, 0
        %v1341 = vsel %vm807, %v1336, 0
        %1343 = vmatprep.subr.bf16.mxu0 0
        %1344 = vmatpush1.bf16.msra.mxu0 0
        %1345 = vmatprep.subr.bf16.mxu0 0
        %1346 = vmatpush1.bf16.msra.mxu0 0
        %1347 = vmatprep.subr.bf16.mxu0 0
        %1348 = vmatpush1.bf16.msra.mxu0 0
        %1349 = vmatprep.subr.bf16.mxu0 0
        %1350 = vmatpush1.bf16.msra.mxu0 0
        %1351 = vmatprep.subr.bf16.mxu0 0
        %1352 = vmatpush1.bf16.msra.mxu0 0
        %1353 = vmatprep.subr.bf16.mxu0 0
        %1354 = vmatpush1.bf16.msra.mxu0 0
        %1355 = vmatprep.subr.bf16.mxu0 0
        %1356 = vmatpush1.bf16.msra.mxu0 0
        %1357 = vmatprep.subr.bf16.mxu0 0
        %1358 = vmatpush1.bf16.msra.mxu0 %v1341
        %1359 = vmatprep.subr.bf16.mxu0 0
        %1360 = vmatpush2.bf16.msra.mxu0 0
        %1361 = vmatprep.subr.bf16.mxu0 0
        %1362 = vmatpush2.bf16.msra.mxu0 0
        %1363 = vmatprep.subr.bf16.mxu0 0
        %1364 = vmatpush2.bf16.msra.mxu0 0
        %1365 = vmatprep.subr.bf16.mxu0 0
        %1366 = vmatpush2.bf16.msra.mxu0 0
        %1367 = vmatprep.subr.bf16.mxu0 0
        %1368 = vmatpush2.bf16.msra.mxu0 0
        %1369 = vmatprep.subr.bf16.mxu0 0
        %1370 = vmatpush2.bf16.msra.mxu0 0
        %1371 = vmatprep.subr.bf16.mxu0 0
        %1372 = vmatpush2.bf16.msra.mxu0 0
        %1373 = vmatprep.subr.bf16.mxu0 0
        %1374 = vmatpush2.bf16.msra.mxu0 0
        %1375 = vmatprep.mubr.bf16.mxu0 0
        %1376 = vmatmul.mubr.bf16.gmra.mxu0 %v1338
        %v1377 = vpop.f32.mrf.mxu0
        %v1378 = vadd.f32 0.0, %v1377
        %v1379 = vpop.f32.mrf.mxu0
        %v1380 = vpop.f32.mrf.mxu0
        %v1381 = vpop.f32.mrf.mxu0
        %1382 = vdwg.mxu0
        %v1383 = vadd.f32 %v1221, %v1378
        %v1384 = vld [vmem:[%s5] sm:$0x1]
        %v1386 = vlaneseq
        %v1387 = vshrl.u32 %v1386, 7
        %v1388 = vsub.s32 0, %v1387
        %v1389 = vrot.slane %v1384, %v1388
        %v1391 = vadd.f32 %v1383, %v1389
        %v1392 = vadd.f32 %v1391, %v659
        %v1393 = vld [vmem:[%s6] sm:$0x1]
        %v1394 = vld [vmem:[%s7] sm:$0x1]
        %v1395 = vsel %vm684, %v1392, 0.0
        %1396 = vadd.xlane.f32.xlu0 %v1395
        %v1397 = vpop.xlane.xlu0 %1396
        %v1398 = vrcp.pop 32.0
        %v1399 = vmul.f32 %v1397, %v1398
        %v1400 = vsub.f32 %v1392, %v1399
        %v1401 = vmul.f32 %v1400, %v1400
        %v1402 = vsel %vm684, %v1401, 0.0
        %1403 = vadd.xlane.f32.xlu0 %v1402
        %v1404 = vpop.xlane.xlu0 %1403
        %v1405 = vmul.f32 %v1404, %v1398
        %v1406 = vadd.f32 %v1405, 1e-12
        %v1407 = vrsqrt.pop %v1406
        %v1408 = vmul.f32 %v1400, %v1407
        %v1410 = vlaneseq
        %v1411 = vshrl.u32 %v1410, 7
        %v1412 = vsub.s32 0, %v1411
        %v1413 = vrot.slane %v1393, %v1412
        %v1415 = vmul.f32 %v1408, %v1413
        %v1417 = vlaneseq
        %v1418 = vshrl.u32 %v1417, 7
        %v1419 = vsub.s32 0, %v1418
        %v1420 = vrot.slane %v1394, %v1419
        %v1422 = vadd.f32 %v1415, %v1420
        %v1423 = vld [vmem:[%s8] sm:$0xf]
        %v1424 = vld [vmem:[%s8 + $0x4] sm:$0xf]
        %v1425 = vld [vmem:[%s8 + $0x8] sm:$0xf]
        %v1426 = vld [vmem:[%s8 + $0xc] sm:$0xf]
        %v1427 = vpack.c.bf16 %v1422, %v1422
        %v1428 = vld [vmem:[%s9] sm:$0x1]
        %v1430 = vlaneseq
        %v1431 = vshrl.u32 %v1430, 7
        %v1432 = vsub.s32 0, %v1431
        %v1433 = vrot.slane %v1428, %v1432
        %v1439 = vunpack.c.l.b16 %v1423
        %v1440 = vunpack.c.l.b16 %v1424
        %v1441 = vunpack.c.l.b16 %v1425
        %v1442 = vunpack.c.l.b16 %v1426
        %v1443 = vpack.c.b16 %v1440, %v1439
        %v1444 = vpack.c.b16 %v1442, %v1441
        %v1448 = vsel %vm684, %v1427, 0
        %1450 = vmatprep.subr.bf16.mxu0 0
        %1451 = vmatpush1.bf16.msra.mxu0 0
        %1452 = vmatprep.subr.bf16.mxu0 0
        %1453 = vmatpush1.bf16.msra.mxu0 0
        %1454 = vmatprep.subr.bf16.mxu0 0
        %1455 = vmatpush1.bf16.msra.mxu0 0
        %1456 = vmatprep.subr.bf16.mxu0 0
        %1457 = vmatpush1.bf16.msra.mxu0 0
        %1458 = vmatprep.subr.bf16.mxu0 0
        %1459 = vmatpush1.bf16.msra.mxu0 0
        %1460 = vmatprep.subr.bf16.mxu0 0
        %1461 = vmatpush1.bf16.msra.mxu0 0
        %1462 = vmatprep.subr.bf16.mxu0 0
        %1463 = vmatpush1.bf16.msra.mxu0 %v1444
        %1464 = vmatprep.subr.bf16.mxu0 0
        %1465 = vmatpush1.bf16.msra.mxu0 %v1443
        %1466 = vmatprep.subr.bf16.mxu0 0
        %1467 = vmatpush2.bf16.msra.mxu0 0
        %1468 = vmatprep.subr.bf16.mxu0 0
        %1469 = vmatpush2.bf16.msra.mxu0 0
        %1470 = vmatprep.subr.bf16.mxu0 0
        %1471 = vmatpush2.bf16.msra.mxu0 0
        %1472 = vmatprep.subr.bf16.mxu0 0
        %1473 = vmatpush2.bf16.msra.mxu0 0
        %1474 = vmatprep.subr.bf16.mxu0 0
        %1475 = vmatpush2.bf16.msra.mxu0 0
        %1476 = vmatprep.subr.bf16.mxu0 0
        %1477 = vmatpush2.bf16.msra.mxu0 0
        %1478 = vmatprep.subr.bf16.mxu0 0
        %1479 = vmatpush2.bf16.msra.mxu0 0
        %1480 = vmatprep.subr.bf16.mxu0 0
        %1481 = vmatpush2.bf16.msra.mxu0 0
        %1482 = vmatprep.mubr.bf16.mxu0 0
        %1483 = vmatmul.mubr.bf16.gmra.mxu0 %v1448
        %v1484 = vpop.f32.mrf.mxu0
        %v1485 = vadd.f32 %v1433, %v1484
        %v1486 = vpop.f32.mrf.mxu0
        %v1487 = vpop.f32.mrf.mxu0
        %v1488 = vpop.f32.mrf.mxu0
        %1489 = vdwg.mxu0
        %v1490 = vmul.f32 %v1485, 0.5
        %v1491 = vmul.f32 %v1485, 0.70710677
        %v1492 = verf.f32.pop %v1491
        %v1493 = vadd.f32 %v1492, 1.0
        %v1494 = vmul.f32 %v1490, %v1493
        %v1495 = vld [vmem:[%s10] sm:$0xf]
        %v1496 = vld [vmem:[%s10 + $0x4] sm:$0xf]
        %v1497 = vld [vmem:[%s10 + $0x8] sm:$0xf]
        %v1498 = vld [vmem:[%s10 + $0xc] sm:$0xf]
        %v1499 = vld [vmem:[%s10 + $0x10] sm:$0xf]
        %v1500 = vld [vmem:[%s10 + $0x14] sm:$0xf]
        %v1501 = vld [vmem:[%s10 + $0x18] sm:$0xf]
        %v1502 = vld [vmem:[%s10 + $0x1c] sm:$0xf]
        %v1503 = vpack.c.bf16 %v1494, %v1494
        %v1504 = vld [vmem:[%s11] sm:$0x1]
        %v1506 = vlaneseq
        %v1507 = vshrl.u32 %v1506, 7
        %v1508 = vsub.s32 0, %v1507
        %v1509 = vrot.slane %v1504, %v1508
        %v1519 = vunpack.c.l.b16 %v1495
        %v1520 = vunpack.c.l.b16 %v1496
        %v1521 = vunpack.c.l.b16 %v1497
        %v1522 = vunpack.c.l.b16 %v1498
        %v1523 = vunpack.c.l.b16 %v1499
        %v1524 = vunpack.c.l.b16 %v1500
        %v1525 = vunpack.c.l.b16 %v1501
        %v1526 = vunpack.c.l.b16 %v1502
        %v1527 = vpack.c.b16 %v1520, %v1519
        %v1528 = vpack.c.b16 %v1522, %v1521
        %v1529 = vpack.c.b16 %v1524, %v1523
        %v1530 = vpack.c.b16 %v1526, %v1525
        %vm1535 = vcmask 523264
        %v1537 = vsel %vm1535, %v1503, 0
        %1539 = vmatprep.subr.bf16.mxu0 0
        %1540 = vmatpush1.bf16.msra.mxu0 0
        %1541 = vmatprep.subr.bf16.mxu0 0
        %1542 = vmatpush1.bf16.msra.mxu0 0
        %1543 = vmatprep.subr.bf16.mxu0 0
        %1544 = vmatpush1.bf16.msra.mxu0 0
        %1545 = vmatprep.subr.bf16.mxu0 0
        %1546 = vmatpush1.bf16.msra.mxu0 0
        %1547 = vmatprep.subr.bf16.mxu0 0
        %1548 = vmatpush1.bf16.msra.mxu0 %v1530
        %1549 = vmatprep.subr.bf16.mxu0 0
        %1550 = vmatpush1.bf16.msra.mxu0 %v1529
        %1551 = vmatprep.subr.bf16.mxu0 0
        %1552 = vmatpush1.bf16.msra.mxu0 %v1528
        %1553 = vmatprep.subr.bf16.mxu0 0
        %1554 = vmatpush1.bf16.msra.mxu0 %v1527
        %1555 = vmatprep.subr.bf16.mxu0 0
        %1556 = vmatpush2.bf16.msra.mxu0 0
        %1557 = vmatprep.subr.bf16.mxu0 0
        %1558 = vmatpush2.bf16.msra.mxu0 0
        %1559 = vmatprep.subr.bf16.mxu0 0
        %1560 = vmatpush2.bf16.msra.mxu0 0
        %1561 = vmatprep.subr.bf16.mxu0 0
        %1562 = vmatpush2.bf16.msra.mxu0 0
        %1563 = vmatprep.subr.bf16.mxu0 0
        %1564 = vmatpush2.bf16.msra.mxu0 0
        %1565 = vmatprep.subr.bf16.mxu0 0
        %1566 = vmatpush2.bf16.msra.mxu0 0
        %1567 = vmatprep.subr.bf16.mxu0 0
        %1568 = vmatpush2.bf16.msra.mxu0 0
        %1569 = vmatprep.subr.bf16.mxu0 0
        %1570 = vmatpush2.bf16.msra.mxu0 0
        %1571 = vmatprep.mubr.bf16.mxu0 0
        %1572 = vmatmul.mubr.bf16.gmra.mxu0 %v1537
        %v1573 = vpop.f32.mrf.mxu0
        %v1574 = vadd.f32 %v1509, %v1573
        %v1575 = vpop.f32.mrf.mxu0
        %v1576 = vpop.f32.mrf.mxu0
        %v1577 = vpop.f32.mrf.mxu0
        %1578 = vdwg.mxu0
        %v1579 = vadd.f32 %v1574, %v1422
        %v1580 = vld [vmem:[%s12] sm:$0x1]
        %v1581 = vld [vmem:[%s13] sm:$0x1]
        %v1582 = vsel %vm684, %v1579, 0.0
        %1583 = vadd.xlane.f32.xlu0 %v1582
        %v1584 = vpop.xlane.xlu0 %1583
        %v1585 = vmul.f32 %v1584, %v1398
        %v1586 = vsub.f32 %v1579, %v1585
        %v1587 = vmul.f32 %v1586, %v1586
        %v1588 = vsel %vm684, %v1587, 0.0
        %1589 = vadd.xlane.f32.xlu0 %v1588
        %v1590 = vpop.xlane.xlu0 %1589
        %v1591 = vmul.f32 %v1590, %v1398
        %v1592 = vadd.f32 %v1591, 1e-12
        %v1593 = vrsqrt.pop %v1592
        %v1594 = vmul.f32 %v1586, %v1593
        %v1596 = vlaneseq
        %v1597 = vshrl.u32 %v1596, 7
        %v1598 = vsub.s32 0, %v1597
        %v1599 = vrot.slane %v1580, %v1598
        %v1601 = vmul.f32 %v1594, %v1599
        %v1603 = vlaneseq
        %v1604 = vshrl.u32 %v1603, 7
        %v1605 = vsub.s32 0, %v1604
        %v1606 = vrot.slane %v1581, %v1605
        %v1608 = vadd.f32 %v1601, %v1606
        %1609 = vst.msk [vmem:[%s657] sm:$0xff] %vm684, %v1608
        %v1610 = vld [vmem:[%s14] sm:$0xf]
        %v1611 = vld [vmem:[%s14 + $0x4] sm:$0xf]
        %v1612 = vld [vmem:[%s14 + $0x8] sm:$0xf]
        %v1613 = vld [vmem:[%s14 + $0xc] sm:$0xf]
        %v1614 = vpack.c.bf16 %v1608, %v1608
        %v1615 = vld [vmem:[%s15] sm:$0x1]
        %v1620 = vunpack.c.l.b16 %v1610
        %v1621 = vunpack.c.l.b16 %v1611
        %v1622 = vunpack.c.l.b16 %v1612
        %v1623 = vunpack.c.l.b16 %v1613
        %v1624 = vpack.c.b16 %v1621, %v1620
        %v1625 = vpack.c.b16 %v1623, %v1622
        %v1629 = vsel %vm684, %v1614, 0
        %1631 = vmatprep.subr.bf16.mxu0 0
        %1632 = vmatpush1.bf16.msra.mxu0 0
        %1633 = vmatprep.subr.bf16.mxu0 0
        %1634 = vmatpush1.bf16.msra.mxu0 0
        %1635 = vmatprep.subr.bf16.mxu0 0
        %1636 = vmatpush1.bf16.msra.mxu0 0
        %1637 = vmatprep.subr.bf16.mxu0 0
        %1638 = vmatpush1.bf16.msra.mxu0 0
        %1639 = vmatprep.subr.bf16.mxu0 0
        %1640 = vmatpush1.bf16.msra.mxu0 0
        %1641 = vmatprep.subr.bf16.mxu0 0
        %1642 = vmatpush1.bf16.msra.mxu0 0
        %1643 = vmatprep.subr.bf16.mxu0 0
        %1644 = vmatpush1.bf16.msra.mxu0 %v1625
        %1645 = vmatprep.subr.bf16.mxu0 0
        %1646 = vmatpush1.bf16.msra.mxu0 %v1624
        %1647 = vmatprep.subr.bf16.mxu0 0
        %1648 = vmatpush2.bf16.msra.mxu0 0
        %1649 = vmatprep.subr.bf16.mxu0 0
        %1650 = vmatpush2.bf16.msra.mxu0 0
        %1651 = vmatprep.subr.bf16.mxu0 0
        %1652 = vmatpush2.bf16.msra.mxu0 0
        %1653 = vmatprep.subr.bf16.mxu0 0
        %1654 = vmatpush2.bf16.msra.mxu0 0
        %1655 = vmatprep.subr.bf16.mxu0 0
        %1656 = vmatpush2.bf16.msra.mxu0 0
        %1657 = vmatprep.subr.bf16.mxu0 0
        %1658 = vmatpush2.bf16.msra.mxu0 0
        %1659 = vmatprep.subr.bf16.mxu0 0
        %1660 = vmatpush2.bf16.msra.mxu0 0
        %1661 = vmatprep.subr.bf16.mxu0 0
        %1662 = vmatpush2.bf16.msra.mxu0 0
        %1663 = vmatprep.mubr.bf16.mxu0 0
        %1664 = vmatmul.mubr.bf16.gmra.mxu0 %v1629
        %v1665 = vpop.f32.mrf.mxu0
        %v1666 = vadd.f32 %v1615, %v1665
        %v1667 = vpop.f32.mrf.mxu0
        %v1668 = vpop.f32.mrf.mxu0
        %v1669 = vpop.f32.mrf.mxu0
        %1670 = vdwg.mxu0
        %v1671 = vtanh.pop %v1666
        %vm1672 = vcmask 253952
        %1673 = vst.msk [vmem:[%s640] sm:$0x1] %vm1672, %v1671
        %v1674 = vld [vmem:[%s16] sm:$0xf]
        %v1675 = vld [vmem:[%s16 + $0x4] sm:$0xf]
        %v1676 = vld [vmem:[%s16 + $0x8] sm:$0xf]
        %v1677 = vld [vmem:[%s16 + $0xc] sm:$0xf]
        %v1678 = vpack.c.bf16 %v1671, %v1671
        %v1679 = vld [vmem:[%s17] sm:$0x1]
        %v1684 = vunpack.c.l.b16 %v1674
        %v1685 = vunpack.c.l.b16 %v1675
        %v1686 = vunpack.c.l.b16 %v1676
        %v1687 = vunpack.c.l.b16 %v1677
        %v1688 = vpack.c.b16 %v1685, %v1684
        %v1689 = vpack.c.b16 %v1687, %v1686
        %v1693 = vsel %vm684, %v1678, 0
        %1695 = vmatprep.subr.bf16.mxu0 0
        %1696 = vmatpush1.bf16.msra.mxu0 0
        %1697 = vmatprep.subr.bf16.mxu0 0
        %1698 = vmatpush1.bf16.msra.mxu0 0
        %1699 = vmatprep.subr.bf16.mxu0 0
        %1700 = vmatpush1.bf16.msra.mxu0 0
        %1701 = vmatprep.subr.bf16.mxu0 0
        %1702 = vmatpush1.bf16.msra.mxu0 0
        %1703 = vmatprep.subr.bf16.mxu0 0
        %1704 = vmatpush1.bf16.msra.mxu0 0
        %1705 = vmatprep.subr.bf16.mxu0 0
        %1706 = vmatpush1.bf16.msra.mxu0 0
        %1707 = vmatprep.subr.bf16.mxu0 0
        %1708 = vmatpush1.bf16.msra.mxu0 %v1689
        %1709 = vmatprep.subr.bf16.mxu0 0
        %1710 = vmatpush1.bf16.msra.mxu0 %v1688
        %1711 = vmatprep.subr.bf16.mxu0 0
        %1712 = vmatpush2.bf16.msra.mxu0 0
        %1713 = vmatprep.subr.bf16.mxu0 0
        %1714 = vmatpush2.bf16.msra.mxu0 0
        %1715 = vmatprep.subr.bf16.mxu0 0
        %1716 = vmatpush2.bf16.msra.mxu0 0
        %1717 = vmatprep.subr.bf16.mxu0 0
        %1718 = vmatpush2.bf16.msra.mxu0 0
        %1719 = vmatprep.subr.bf16.mxu0 0
        %1720 = vmatpush2.bf16.msra.mxu0 0
        %1721 = vmatprep.subr.bf16.mxu0 0
        %1722 = vmatpush2.bf16.msra.mxu0 0
        %1723 = vmatprep.subr.bf16.mxu0 0
        %1724 = vmatpush2.bf16.msra.mxu0 0
        %1725 = vmatprep.subr.bf16.mxu0 0
        %1726 = vmatpush2.bf16.msra.mxu0 0
        %1727 = vmatprep.mubr.bf16.mxu0 0
        %1728 = vmatmul.mubr.bf16.gmra.mxu0 %v1693
        %v1729 = vpop.f32.mrf.mxu0
        %v1730 = vadd.f32 %v1679, %v1729
        %v1731 = vpop.f32.mrf.mxu0
        %v1732 = vpop.f32.mrf.mxu0
        %v1733 = vpop.f32.mrf.mxu0
        %1734 = vdwg.mxu0
        %1735 = vst [vmem:[%s646] sm:$0x1] %v1730
        %p1736 = scmp.lt.s32.totalorder %s38, 1
        %s1737 = scalar_select %p1736, %s38, 1
        %s1738 = smul.addr %s1737, 8
        %s1739 = scalar_lea.vmem %s18, %s1738
        %s1740 = sand.u32 %s460, 1
        %s1741 = scalar_lea.sflag [#allocation3], %s1740
        %s1742 = sand.u32 %s460, 1
        %s1743 = scalar_lea.vmem [#allocation2], %s1742
        %s1744 = sand.u32 %s486, 1
        %s1745 = scalar_lea.sflag [#allocation5], %s1744
        %s1746 = sand.u32 %s486, 1
        %s1747 = scalar_lea.vmem [#allocation4], %s1746
        // Predicated region
        $region93: #{_lambda_.3} parent=91 // pred_check
          %p1748 = pneg %p444
        $region94: #{_lambda_.3} parent=91 // pred_check_branch
          %1750 = sbr.rel (%p1748) target = $region96
        $region95: #{_lambda_.3} parent=91 // pred_region
          _
        $region96: #{_lambda_.3} parent=91 // pred_fallthru
          _
        // Predicated region
        $region97: #{_lambda_.3} parent=91 // pred_check
          %p1751 = pneg %p470
        $region98: #{_lambda_.3} parent=91 // pred_check_branch
          %1753 = sbr.rel (%p1751) target = $region100
        $region99: #{_lambda_.3} parent=91 // pred_region
          %s1755 = ssub.s32 16, 16
          %1756 = vsyncadd %s1741, %s1755
          %s1757 = smul.addr %s38, 16
          %s1758 = scalar_lea.hbm %s19, %s1757
          %s1760 = sshll.u32 %s1743, 4
          %s1761 = int_to_ptr.vmem [resolvable:$true] %s1760
          %1763 = dma.vmem_to_hbm [thread:$0]  %s1761, 16, %s1758, %s1741
        $region100: #{_lambda_.3} parent=91 // pred_fallthru
          _
        // Predicated region
        $region101: #{_lambda_.3} parent=91 // pred_check
          %p1764 = pneg %p496
        $region102: #{_lambda_.3} parent=91 // pred_check_branch
          %1766 = sbr.rel (%p1764) target = $region104
        $region103: #{_lambda_.3} parent=91 // pred_region
          %s1768 = ssub.s32 16, 16
          %1769 = vsyncadd %s1745, %s1768
          %s1770 = smul.addr %s38, 16
          %s1771 = scalar_lea.hbm %s20, %s1770
          %s1773 = sshll.u32 %s1747, 4
          %s1774 = int_to_ptr.vmem [resolvable:$true] %s1773
          %1776 = dma.vmem_to_hbm [thread:$0]  %s1774, 16, %s1771, %s1745
        $region104: #{_lambda_.3} parent=91 // pred_fallthru
          _
      $region92: #{_lambda_.3} parent=5 // pred_fallthru
        _
      %p1777 = scmp.le.s32.totalorder 2, %s33
      // Predicated region
      $region105: #{_lambda_.3} parent=5 // pred_check
        %p1778 = pneg %p1777
      $region106: #{_lambda_.3} parent=5 // pred_check_branch
        %1780 = sbr.rel (%p1778) target = $region108
      $region107: #{_lambda_.3} parent=5 // pred_region
        %s1781 = ssub.s32 %s33, 2
        // Predicated region
        $region109: #{_lambda_.3} parent=107 // pred_check
          %p1782 = pneg %p450
        $region110: #{_lambda_.3} parent=107 // pred_check_branch
          %1784 = sbr.rel (%p1782) target = $region112
        $region111: #{_lambda_.3} parent=107 // pred_region
          %p1785 = scmp.lt.s32.totalorder %s39, 1
          %s1786 = scalar_select %p1785, %s39, 1
          %s1787 = smul.addr %s1786, 8
          %s1788 = scalar_lea.vmem %s18, %s1787
        $region112: #{_lambda_.3} parent=107 // pred_fallthru
          _
        // Predicated region
        $region113: #{_lambda_.3} parent=107 // pred_check
          %p1789 = pneg %p476
        $region114: #{_lambda_.3} parent=107 // pred_check_branch
          %1791 = sbr.rel (%p1789) target = $region116
        $region115: #{_lambda_.3} parent=107 // pred_region
          %s1792 = sand.u32 %s461, 1
          %s1793 = scalar_lea.sflag [#allocation3], %s1792
          %s1794 = sand.u32 %s461, 1
          %s1795 = scalar_lea.vmem [#allocation2], %s1794
          %1796 = dma.done %s1793, 16
        $region116: #{_lambda_.3} parent=107 // pred_fallthru
          _
        // Predicated region
        $region117: #{_lambda_.3} parent=107 // pred_check
          %p1797 = pneg %p502
        $region118: #{_lambda_.3} parent=107 // pred_check_branch
          %1799 = sbr.rel (%p1797) target = $region120
        $region119: #{_lambda_.3} parent=107 // pred_region
          %s1800 = sand.u32 %s487, 1
          %s1801 = scalar_lea.sflag [#allocation5], %s1800
          %s1802 = sand.u32 %s487, 1
          %s1803 = scalar_lea.vmem [#allocation4], %s1802
          %1804 = dma.done %s1801, 16
        $region120: #{_lambda_.3} parent=107 // pred_fallthru
          _
      $region108: #{_lambda_.3} parent=5 // pred_fallthru
        _
    $region6: #{_lambda_.3} parent=1 // loop_footer
      %s37 = sadd.s32 1, %s33
    $region7: #{_lambda_.3} parent=1 // loop_footer_branch
      %32 = sbr.rel target = $region3
    $region8: #{_lambda_.3} parent=1 // loop_exit
      _
    %1805 = vsyncpa [#allocation3], 1
    %s1806 = scalar_lea.sflag [#allocation3], 1
    %1807 = vsyncpa %s1806, 1
    %1808 = vsyncpa [#allocation5], 1
    %s1809 = scalar_lea.sflag [#allocation5], 1
    %1810 = vsyncpa %s1809, 1

</llo_original>
